<compile_context>
chip_gen: v7x
topology: tpu7x:2x2x1
jax: 0.10.0
libtpu: 0.0.40
codegen_flags: <defaults>
</compile_context>

<pallas_src>
import functools
import math

import jax
import jax.numpy as jnp
from jax import lax
from jax.experimental import pallas as pl
from jax.experimental.pallas import tpu as pltpu


def _fused_aspp_kernel(x_ref, w1_ref, scale_ref, shift_ref, w2_ref, o_ref, mid_ref,
                       *, K, dil, pad, H, W, TH, Wo, single_block):
    """Fused _ASPPModule forward for one (batch, output-row-block) grid step.

    x_ref:     (H, W, Cin)             bf16 full image (batch dim squeezed)
    w1_ref:    (Cin, Cmid)             bf16 1x1 conv weight
    scale_ref: (1, Cmid)               f32  BN scale (gamma / sqrt(var+eps))
    shift_ref: (1, Cmid)               f32  BN shift with conv1 bias folded in
    w2_ref:    (K, K, Cmid, Cout)      bf16 dilated conv weight
    o_ref:     (TH*Wo, Cout)           f32  output row-block (flattened spatial)
    mid_ref:   (RH, W+2*pad, Cmid)     bf16 VMEM scratch, RH = TH + dil*(K-1)
    """
    RH = TH + dil * (K - 1)
    Cin = x_ref.shape[-1]
    Cmid = mid_ref.shape[-1]

    # -- zero the left/right pad columns of mid once per batch (never overwritten) ----
    if pad > 0:
        @pl.when(pl.program_id(1) == 0)
        def _():
            mid_ref[:, :pad, :] = jnp.zeros((RH, pad, Cmid), mid_ref.dtype)
            mid_ref[:, pad + W:, :] = jnp.zeros((RH, pad, Cmid), mid_ref.dtype)

    w1 = w1_ref[...]
    scale = scale_ref[...]
    shift = shift_ref[...]

    def mid_rows(x2d):
        """relu -> 1x1 conv -> folded bias/BN affine -> relu, bf16 result."""
        y = jnp.dot(jnp.maximum(x2d, 0), w1, preferred_element_type=jnp.float32)
        y = y * scale + shift
        return jnp.maximum(y, 0.0).astype(mid_ref.dtype)

    # ---- Stage 1 (fused): one batched matmul over the rows this block needs ----------
    if single_block:
        # TH == Ho  =>  RH == H + 2*pad, every offset is static.
        y = mid_rows(x_ref[...].reshape(H * W, Cin)).reshape(H, W, Cmid)
        if pad > 0:
            mid_ref[:pad, pad:pad + W, :] = jnp.zeros((pad, W, Cmid), mid_ref.dtype)
            mid_ref[pad + H:, pad:pad + W, :] = jnp.zeros((RH - pad - H, W, Cmid),
                                                          mid_ref.dtype)
        mid_ref[pad:pad + H, pad:pad + W, :] = y
    else:
        i = pl.program_id(1)
        row0 = i * TH - pad                      # first input row needed by this block
        interior = jnp.logical_and(row0 >= 0, row0 + RH <= H)

        @pl.when(interior)
        def _():
            xs = x_ref[pl.ds(row0, RH)]          # (RH, W, Cin)
            mid_ref[:, pad:pad + W, :] = (
                mid_rows(xs.reshape(RH * W, Cin)).reshape(RH, W, Cmid))

        @pl.when(jnp.logical_not(interior))
        def _():
            # Boundary blocks only (at most first/last per batch): per-row masked fill.
            for j in range(RH):                  # static, unrolled
                r = row0 + j
                valid = jnp.logical_and(r >= 0, r < H)

                @pl.when(valid)
                def _():
                    xr = x_ref[pl.ds(r, 1)].reshape(W, Cin)
                    mid_ref[j, pad:pad + W, :] = mid_rows(xr)

                @pl.when(jnp.logical_not(valid))
                def _():
                    mid_ref[j, pad:pad + W, :] = jnp.zeros((W, Cmid), mid_ref.dtype)

    # ---- Stage 2: dilated KxK conv (bias-free), accumulate directly into o_ref -------
    for kw in range(K):
        # Width-strided slice hoisted out of the kh loop: K copies instead of K*K.
        xw = mid_ref[:, kw * dil:kw * dil + Wo, :]            # (RH, Wo, Cmid) bf16
        part = None
        for kh in range(K):
            xs = xw[kh * dil:kh * dil + TH].reshape(TH * Wo, Cmid)
            d = jnp.dot(xs, w2_ref[kh, kw], preferred_element_type=jnp.float32)
            part = d if part is None else part + d
        if kw == 0:
            o_ref[...] = part.astype(o_ref.dtype)
        else:
            o_ref[...] += part.astype(o_ref.dtype)


def _vmem_limit_bytes():
    try:
        cap = int(pltpu.get_tpu_info().vmem_capacity_bytes)
    except Exception:
        cap = 64 * 1024 * 1024
    return int(cap * 0.85)


def init_params(key, inplanes, planes, kernel_size):
    Cmid = 2 * planes
    k1, k2, k3 = jax.random.split(key, 3)
    # Kaiming-normal (fan_in, gain=sqrt(2)) like torch.nn.init.kaiming_normal_.
    fan_in1 = inplanes  # 1x1 kernel
    w1 = jax.random.normal(k1, (inplanes, Cmid), jnp.float32) * math.sqrt(2.0 / fan_in1)
    bound = 1.0 / math.sqrt(fan_in1)
    b1 = jax.random.uniform(k2, (Cmid,), jnp.float32, -bound, bound)
    fan_in2 = Cmid * kernel_size * kernel_size
    w2 = jax.random.normal(
        k3, (kernel_size, kernel_size, Cmid, planes), jnp.float32
    ) * math.sqrt(2.0 / fan_in2)
    # BatchNorm2d params as in _init_weight: gamma=1, beta=0; running stats = (0, 1).
    # TODO(synk): training-mode BatchNorm (batch statistics / running-stat updates) is
    # not implemented; BN is applied eval-mode, folded into an affine.
    gamma = jnp.ones((Cmid,), jnp.float32)
    beta = jnp.zeros((Cmid,), jnp.float32)
    rmean = jnp.zeros((Cmid,), jnp.float32)
    rvar = jnp.ones((Cmid,), jnp.float32)
    eps = 1e-5
    bn_scale = gamma / jnp.sqrt(rvar + eps)
    bn_shift = beta - rmean * bn_scale
    return dict(w1=w1, b1=b1, bn_scale=bn_scale, bn_shift=bn_shift, w2=w2)


def aspp_module_forward_nhwc(x_nhwc, params, *, kernel_size, padding, dilation,
                             row_block=None):
    """Channels-last forward: x (N, H, W, Cin) -> (N, Ho, Wo, Cout)."""
    K, pad, dil = kernel_size, padding, dilation
    N, H, W, Cin = x_nhwc.shape
    Cmid = params["w1"].shape[1]
    Cout = params["w2"].shape[-1]

    Ho = H + 2 * pad - dil * (K - 1)
    Wo = W + 2 * pad - dil * (K - 1)
    assert Ho > 0 and Wo > 0, "output spatial size must be positive"
    Wp = W + 2 * pad

    # bf16 MXU operands, f32 accumulation in-kernel.
    x_bf = x_nhwc.astype(jnp.bfloat16)
    w1 = params["w1"].astype(jnp.bfloat16)
    w2 = params["w2"].astype(jnp.bfloat16)
    scale = params["bn_scale"].astype(jnp.float32).reshape(1, Cmid)
    # Fold the 1x1 conv bias into the BN shift: scale*(y + b1) + shift == scale*y + shift'
    shift = (params["b1"] * params["bn_scale"]
             + params["bn_shift"]).astype(jnp.float32).reshape(1, Cmid)

    vmem_limit = _vmem_limit_bytes()

    # ---- choose TH (output rows per grid step) ----------------------------------------
    if row_block is None:
        full_mid = (Ho + dil * (K - 1)) * Wp * Cmid * 2          # bf16 mid, TH = Ho
        xblk = H * W * Cin * 2
        wbytes = (Cin * Cmid + K * K * Cmid * Cout) * 2
        out_full = Ho * Wo * Cout * 4
        need_single = 2 * xblk + 2 * wbytes + 2 * full_mid + 2 * out_full
        if need_single <= int(0.8 * vmem_limit):
            TH = Ho                               # single block: no halo recompute
        else:
            TH = min(Ho, max(4 * dil * (K - 1), 8))  # amortize halo recompute
    else:
        TH = max(1, min(row_block, Ho))
    RH = TH + dil * (K - 1)
    if TH < Ho and RH > H:
        # The row-blocked path assumes the RH-row halo slab fits inside the image.
        TH = Ho
        RH = TH + dil * (K - 1)

    n_blocks = pl.cdiv(Ho, TH)
    single_block = (n_blocks == 1)
    grid = (N, n_blocks)

    kern = functools.partial(_fused_aspp_kernel, K=K, dil=dil, pad=pad, H=H, W=W,
                             TH=TH, Wo=Wo, single_block=single_block)

    out = pl.pallas_call(
        kern,
        # TODO(synk): emit bf16 here if the downstream ASPP concat accepts it (halves the
        # only HBM writeback of this kernel); kept f32 to match the module's output dtype.
        out_shape=jax.ShapeDtypeStruct((N, Ho * Wo, Cout), jnp.float32),
        grid=grid,
        in_specs=[
            # Full image per batch; block index constant along the row-block axis so it
            # is only re-DMA'd when the batch index changes.
            # TODO(synk): at production Cin (e.g. 2048) on v7x (64 MiB VMEM) switch x to
            # memory_space=pl.ANY with a manual halo-slab make_async_copy.
            pl.BlockSpec((None, H, W, Cin), lambda n, i: (n, 0, 0, 0)),
            pl.BlockSpec((Cin, Cmid), lambda n, i: (0, 0)),
            pl.BlockSpec((1, Cmid), lambda n, i: (0, 0)),
            pl.BlockSpec((1, Cmid), lambda n, i: (0, 0)),
            pl.BlockSpec((K, K, Cmid, Cout), lambda n, i: (0, 0, 0, 0)),
        ],
        out_specs=pl.BlockSpec((None, TH * Wo, Cout), lambda n, i: (n, i, 0)),
        scratch_shapes=[
            pltpu.VMEM((RH, Wp, Cmid), jnp.bfloat16),   # zero-padded mid tile (bf16)
        ],
        compiler_params=pltpu.CompilerParams(
            # Batch axis parallel (megacore split axis); row-block axis arbitrary so the
            # persistent pad-column zeroing at i==0 remains valid on multi-core parts.
            dimension_semantics=("parallel", "arbitrary"),
            vmem_limit_bytes=vmem_limit),
    )(x_bf, w1, scale, shift, w2)

    return out.reshape(N, Ho, Wo, Cout)


def aspp_module_forward(x_nchw, params, *, kernel_size, padding, dilation,
                        row_block=None):
    """NCHW interface matching the PyTorch module.

    NOTE: prefer aspp_module_forward_nhwc end-to-end in a channels-last network; each
    boundary transpose below is an extra HBM read+write of the full tensor.
    """
    x = jnp.transpose(x_nchw, (0, 2, 3, 1))
    out = aspp_module_forward_nhwc(x, params, kernel_size=kernel_size, padding=padding,
                                   dilation=dilation, row_block=row_block)
    return jnp.transpose(out, (0, 3, 1, 2))


def reference_forward(x_nchw, params, *, kernel_size, padding, dilation):
    """Pure-JAX reference mirroring the PyTorch forward (eval-mode BN) with the same
    bf16-operand / f32-accumulate numerics as the Pallas kernel."""
    w1 = params["w1"].astype(jnp.bfloat16)
    w2 = params["w2"].astype(jnp.bfloat16)
    b1, scale, shift = params["b1"], params["bn_scale"], params["bn_shift"]

    y = jax.nn.relu(x_nchw).astype(jnp.bfloat16)
    w1_oihw = jnp.transpose(w1, (1, 0))[:, :, None, None]
    y = lax.conv_general_dilated(y, w1_oihw, (1, 1), "VALID",
                                 dimension_numbers=("NCHW", "OIHW", "NCHW"),
                                 preferred_element_type=jnp.float32)
    y = y + b1[None, :, None, None]
    y = y * scale[None, :, None, None] + shift[None, :, None, None]
    y = jax.nn.relu(y).astype(jnp.bfloat16)
    w2_oihw = jnp.transpose(w2, (3, 2, 0, 1))
    y = lax.conv_general_dilated(
        y, w2_oihw, (1, 1),
        [(padding, padding), (padding, padding)],
        rhs_dilation=(dilation, dilation),
        dimension_numbers=("NCHW", "OIHW", "NCHW"),
        preferred_element_type=jnp.float32)
    return y


if __name__ == "__main__":
    inplanes, planes, kernel_size, padding, dilation = 4, 4, 3, 2, 2
    key = jax.random.PRNGKey(0)
    kx, kp = jax.random.split(key)
    x = jax.random.normal(kx, (2, inplanes, 16, 16), jnp.float32)
    params = init_params(kp, inplanes, planes, kernel_size)

    ref = reference_forward(x, params, kernel_size=kernel_size,
                            padding=padding, dilation=dilation)

    # Regime A (auto): TH = Ho, grid over batch only, no halo recompute.
    out = aspp_module_forward(x, params, kernel_size=kernel_size,
                              padding=padding, dilation=dilation)
    out = jax.block_until_ready(out)
    assert out.shape == ref.shape == (2, planes, 16, 16), (out.shape, ref.shape)
    err_a = float(jnp.max(jnp.abs(out - ref)))
    assert jnp.allclose(out, ref, atol=1e-2, rtol=1e-2), \
        f"regime A mismatch vs JAX reference (max abs err {err_a})"

    # Regime B: row-blocked path (exercises both the interior slab-matmul fast path and
    # the boundary per-row fallback).
    out_b = aspp_module_forward(x, params, kernel_size=kernel_size,
                                padding=padding, dilation=dilation, row_block=4)
    out_b = jax.block_until_ready(out_b)
    err_b = float(jnp.max(jnp.abs(out_b - ref)))
    assert jnp.allclose(out_b, ref, atol=1e-2, rtol=1e-2), \
        f"regime B mismatch vs JAX reference (max abs err {err_b})"

    print("KERNEL_OK")
</pallas_src>

<mosaic_0001>
module attributes {stable_mosaic.version = 11 : i64} {
  func.func @_fused_aspp_kernel(%arg0: i32, %arg1: i32, %arg2: memref<1x16x16x4xbf16, #tpu.memory_space<vmem>>, %arg3: memref<4x8xbf16, #tpu.memory_space<vmem>>, %arg4: memref<1x8xf32, #tpu.memory_space<vmem>>, %arg5: memref<1x8xf32, #tpu.memory_space<vmem>>, %arg6: memref<3x3x8x4xbf16, #tpu.memory_space<vmem>>, %arg7: memref<1x256x4xf32, #tpu.memory_space<vmem>>, %arg8: memref<20x20x8xbf16, #tpu.memory_space<vmem>>) attributes {dimension_semantics = [#tpu.dimension_semantics<parallel>, #tpu.dimension_semantics<arbitrary>], iteration_bounds = array<i64: 2, 1>, scalar_prefetch = 0 : i64, scratch_operands = 1 : i64, tpu.core_type = #tpu.core_type<tc>, window_params = [{transform_indices = @transform_0, window_bounds = array<i64: 1, 16, 16, 4>}, {pipeline_mode = #tpu.pipeline_mode<synchronous>, transform_indices = @transform_1, window_bounds = array<i64: 4, 8>}, {pipeline_mode = #tpu.pipeline_mode<synchronous>, transform_indices = @transform_2, window_bounds = array<i64: 1, 8>}, {pipeline_mode = #tpu.pipeline_mode<synchronous>, transform_indices = @transform_3, window_bounds = array<i64: 1, 8>}, {pipeline_mode = #tpu.pipeline_mode<synchronous>, transform_indices = @transform_4, window_bounds = array<i64: 3, 3, 8, 4>}, {transform_indices = @transform_5, window_bounds = array<i64: 1, 256, 4>}]} {
    %c0_i32 = arith.constant 0 : i32
    %0 = arith.cmpi eq, %arg1, %c0_i32 : i32
    %1 = arith.extui %0 : i1 to i32
    %c0_i32_0 = arith.constant 0 : i32
    %2 = arith.cmpi ne, %1, %c0_i32_0 : i32
    scf.if %2 {
      %cst_88 = arith.constant 0.000000e+00 : bf16
      %94 = vector.broadcast %cst_88 : bf16 to vector<20x2x8xbf16>
      %c0_89 = arith.constant 0 : index
      %c0_90 = arith.constant 0 : index
      %c0_91 = arith.constant 0 : index
      %95 = vector.load %arg8[%c0_89, %c0_90, %c0_91] : memref<20x20x8xbf16, #tpu.memory_space<vmem>>, vector<20x2x8xbf16>
      tpu.vector_store %arg8[%c0_89, %c0_90, %c0_91], %94 {strides = array<i32>} : memref<20x20x8xbf16, #tpu.memory_space<vmem>>, vector<20x2x8xbf16>,
      %cst_92 = arith.constant 0.000000e+00 : bf16
      %96 = vector.broadcast %cst_92 : bf16 to vector<20x2x8xbf16>
      %c0_93 = arith.constant 0 : index
      %c18_94 = arith.constant 18 : index
      %c0_95 = arith.constant 0 : index
      %97 = vector.load %arg8[%c0_93, %c18_94, %c0_95] : memref<20x20x8xbf16, #tpu.memory_space<vmem>>, vector<20x2x8xbf16>
      tpu.vector_store %arg8[%c0_93, %c18_94, %c0_95], %96 {strides = array<i32>} : memref<20x20x8xbf16, #tpu.memory_space<vmem>>, vector<20x2x8xbf16>,
    } else {
    }
    %c0 = arith.constant 0 : index
    %c0_1 = arith.constant 0 : index
    %3 = vector.load %arg3[%c0, %c0_1] : memref<4x8xbf16, #tpu.memory_space<vmem>>, vector<4x8xbf16>
    %c0_2 = arith.constant 0 : index
    %c0_3 = arith.constant 0 : index
    %4 = vector.load %arg4[%c0_2, %c0_3] : memref<1x8xf32, #tpu.memory_space<vmem>>, vector<1x8xf32>
    %c0_4 = arith.constant 0 : index
    %c0_5 = arith.constant 0 : index
    %5 = vector.load %arg5[%c0_4, %c0_5] : memref<1x8xf32, #tpu.memory_space<vmem>>, vector<1x8xf32>
    %c0_6 = arith.constant 0 : index
    %c0_7 = arith.constant 0 : index
    %c0_8 = arith.constant 0 : index
    %c0_9 = arith.constant 0 : index
    %6 = vector.load %arg2[%c0_6, %c0_7, %c0_8, %c0_9] : memref<1x16x16x4xbf16, #tpu.memory_space<vmem>>, vector<1x16x16x4xbf16>
    %7 = vector.shape_cast %6 : vector<1x16x16x4xbf16> to vector<16x16x4xbf16>
    %8 = vector.shape_cast %7 : vector<16x16x4xbf16> to vector<256x4xbf16>
    %cst = arith.constant 0.000000e+00 : bf16
    %9 = vector.broadcast %cst : bf16 to vector<256x4xbf16>
    %10 = arith.maximumf %8, %9 : vector<256x4xbf16>
    %cst_10 = arith.constant dense<0.000000e+00> : vector<256x8xf32>
    %11 = tpu.matmul %10, %3, %cst_10 {dimension_numbers = #tpu.dot_dimension_numbers<[1], [0], [0], [1], [0, 0, 1, 1], [], []>} : vector<256x4xbf16>, vector<4x8xbf16>, vector<256x8xf32> -> vector<256x8xf32>
    %12 = vector.broadcast %4 : vector<1x8xf32> to vector<256x8xf32>
    %13 = arith.mulf %11, %12 : vector<256x8xf32>
    %14 = vector.broadcast %5 : vector<1x8xf32> to vector<256x8xf32>
    %15 = arith.addf %13, %14 : vector<256x8xf32>
    %cst_11 = arith.constant 0.000000e+00 : f32
    %16 = vector.broadcast %cst_11 : f32 to vector<256x8xf32>
    %17 = arith.maximumf %15, %16 : vector<256x8xf32>
    %18 = arith.truncf %17 : vector<256x8xf32> to vector<256x8xbf16>
    %19 = vector.shape_cast %18 : vector<256x8xbf16> to vector<16x16x8xbf16>
    %cst_12 = arith.constant 0.000000e+00 : bf16
    %20 = vector.broadcast %cst_12 : bf16 to vector<2x16x8xbf16>
    %c0_13 = arith.constant 0 : index
    %c2 = arith.constant 2 : index
    %c0_14 = arith.constant 0 : index
    %21 = vector.load %arg8[%c0_13, %c2, %c0_14] : memref<20x20x8xbf16, #tpu.memory_space<vmem>>, vector<2x16x8xbf16>
    tpu.vector_store %arg8[%c0_13, %c2, %c0_14], %20 {strides = array<i32>} : memref<20x20x8xbf16, #tpu.memory_space<vmem>>, vector<2x16x8xbf16>,
    %cst_15 = arith.constant 0.000000e+00 : bf16
    %22 = vector.broadcast %cst_15 : bf16 to vector<2x16x8xbf16>
    %c18 = arith.constant 18 : index
    %c2_16 = arith.constant 2 : index
    %c0_17 = arith.constant 0 : index
    %23 = vector.load %arg8[%c18, %c2_16, %c0_17] : memref<20x20x8xbf16, #tpu.memory_space<vmem>>, vector<2x16x8xbf16>
    tpu.vector_store %arg8[%c18, %c2_16, %c0_17], %22 {strides = array<i32>} : memref<20x20x8xbf16, #tpu.memory_space<vmem>>, vector<2x16x8xbf16>,
    %c2_18 = arith.constant 2 : index
    %c2_19 = arith.constant 2 : index
    %c0_20 = arith.constant 0 : index
    %24 = vector.load %arg8[%c2_18, %c2_19, %c0_20] : memref<20x20x8xbf16, #tpu.memory_space<vmem>>, vector<16x16x8xbf16>
    tpu.vector_store %arg8[%c2_18, %c2_19, %c0_20], %19 {strides = array<i32>} : memref<20x20x8xbf16, #tpu.memory_space<vmem>>, vector<16x16x8xbf16>,
    %c0_21 = arith.constant 0 : index
    %c0_22 = arith.constant 0 : index
    %c0_23 = arith.constant 0 : index
    %25 = vector.load %arg8[%c0_21, %c0_22, %c0_23] : memref<20x20x8xbf16, #tpu.memory_space<vmem>>, vector<20x16x8xbf16>
    %26 = vector.extract_strided_slice %25 {offsets = [0, 0, 0], sizes = [16, 16, 8], strides = [1, 1, 1]} : vector<20x16x8xbf16> to vector<16x16x8xbf16>
    %27 = vector.shape_cast %26 : vector<16x16x8xbf16> to vector<256x8xbf16>
    %c0_24 = arith.constant 0 : index
    %c0_25 = arith.constant 0 : index
    %c0_26 = arith.constant 0 : index
    %c0_27 = arith.constant 0 : index
    %28 = vector.load %arg6[%c0_24, %c0_25, %c0_26, %c0_27] : memref<3x3x8x4xbf16, #tpu.memory_space<vmem>>, vector<1x1x8x4xbf16>
    %29 = vector.shape_cast %28 : vector<1x1x8x4xbf16> to vector<8x4xbf16>
    %cst_28 = arith.constant dense<0.000000e+00> : vector<256x4xf32>
    %30 = tpu.matmul %27, %29, %cst_28 {dimension_numbers = #tpu.dot_dimension_numbers<[1], [0], [0], [1], [0, 0, 1, 1], [], []>} : vector<256x8xbf16>, vector<8x4xbf16>, vector<256x4xf32> -> vector<256x4xf32>
    %31 = vector.extract_strided_slice %25 {offsets = [2, 0, 0], sizes = [16, 16, 8], strides = [1, 1, 1]} : vector<20x16x8xbf16> to vector<16x16x8xbf16>
    %32 = vector.shape_cast %31 : vector<16x16x8xbf16> to vector<256x8xbf16>
    %c1 = arith.constant 1 : index
    %c0_29 = arith.constant 0 : index
    %c0_30 = arith.constant 0 : index
    %c0_31 = arith.constant 0 : index
    %33 = vector.load %arg6[%c1, %c0_29, %c0_30, %c0_31] : memref<3x3x8x4xbf16, #tpu.memory_space<vmem>>, vector<1x1x8x4xbf16>
    %34 = vector.shape_cast %33 : vector<1x1x8x4xbf16> to vector<8x4xbf16>
    %cst_32 = arith.constant dense<0.000000e+00> : vector<256x4xf32>
    %35 = tpu.matmul %32, %34, %cst_32 {dimension_numbers = #tpu.dot_dimension_numbers<[1], [0], [0], [1], [0, 0, 1, 1], [], []>} : vector<256x8xbf16>, vector<8x4xbf16>, vector<256x4xf32> -> vector<256x4xf32>
    %36 = arith.addf %30, %35 : vector<256x4xf32>
    %37 = vector.extract_strided_slice %25 {offsets = [4, 0, 0], sizes = [16, 16, 8], strides = [1, 1, 1]} : vector<20x16x8xbf16> to vector<16x16x8xbf16>
    %38 = vector.shape_cast %37 : vector<16x16x8xbf16> to vector<256x8xbf16>
    %c2_33 = arith.constant 2 : index
    %c0_34 = arith.constant 0 : index
    %c0_35 = arith.constant 0 : index
    %c0_36 = arith.constant 0 : index
    %39 = vector.load %arg6[%c2_33, %c0_34, %c0_35, %c0_36] : memref<3x3x8x4xbf16, #tpu.memory_space<vmem>>, vector<1x1x8x4xbf16>
    %40 = vector.shape_cast %39 : vector<1x1x8x4xbf16> to vector<8x4xbf16>
    %cst_37 = arith.constant dense<0.000000e+00> : vector<256x4xf32>
    %41 = tpu.matmul %38, %40, %cst_37 {dimension_numbers = #tpu.dot_dimension_numbers<[1], [0], [0], [1], [0, 0, 1, 1], [], []>} : vector<256x8xbf16>, vector<8x4xbf16>, vector<256x4xf32> -> vector<256x4xf32>
    %42 = arith.addf %36, %41 : vector<256x4xf32>
    %c0_38 = arith.constant 0 : index
    %c0_39 = arith.constant 0 : index
    %c0_40 = arith.constant 0 : index
    %43 = vector.load %arg7[%c0_38, %c0_39, %c0_40] : memref<1x256x4xf32, #tpu.memory_space<vmem>>, vector<1x256x4xf32>
    %44 = vector.shape_cast %43 : vector<1x256x4xf32> to vector<256x4xf32>
    %45 = vector.shape_cast %42 : vector<256x4xf32> to vector<1x256x4xf32>
    tpu.vector_store %arg7[%c0_38, %c0_39, %c0_40], %45 {strides = array<i32>} : memref<1x256x4xf32, #tpu.memory_space<vmem>>, vector<1x256x4xf32>,
    %c0_41 = arith.constant 0 : index
    %c2_42 = arith.constant 2 : index
    %c0_43 = arith.constant 0 : index
    %46 = vector.load %arg8[%c0_41, %c2_42, %c0_43] : memref<20x20x8xbf16, #tpu.memory_space<vmem>>, vector<20x16x8xbf16>
    %47 = vector.extract_strided_slice %46 {offsets = [0, 0, 0], sizes = [16, 16, 8], strides = [1, 1, 1]} : vector<20x16x8xbf16> to vector<16x16x8xbf16>
    %48 = vector.shape_cast %47 : vector<16x16x8xbf16> to vector<256x8xbf16>
    %c0_44 = arith.constant 0 : index
    %c1_45 = arith.constant 1 : index
    %c0_46 = arith.constant 0 : index
    %c0_47 = arith.constant 0 : index
    %49 = vector.load %arg6[%c0_44, %c1_45, %c0_46, %c0_47] : memref<3x3x8x4xbf16, #tpu.memory_space<vmem>>, vector<1x1x8x4xbf16>
    %50 = vector.shape_cast %49 : vector<1x1x8x4xbf16> to vector<8x4xbf16>
    %cst_48 = arith.constant dense<0.000000e+00> : vector<256x4xf32>
    %51 = tpu.matmul %48, %50, %cst_48 {dimension_numbers = #tpu.dot_dimension_numbers<[1], [0], [0], [1], [0, 0, 1, 1], [], []>} : vector<256x8xbf16>, vector<8x4xbf16>, vector<256x4xf32> -> vector<256x4xf32>
    %52 = vector.extract_strided_slice %46 {offsets = [2, 0, 0], sizes = [16, 16, 8], strides = [1, 1, 1]} : vector<20x16x8xbf16> to vector<16x16x8xbf16>
    %53 = vector.shape_cast %52 : vector<16x16x8xbf16> to vector<256x8xbf16>
    %c1_49 = arith.constant 1 : index
    %c1_50 = arith.constant 1 : index
    %c0_51 = arith.constant 0 : index
    %c0_52 = arith.constant 0 : index
    %54 = vector.load %arg6[%c1_49, %c1_50, %c0_51, %c0_52] : memref<3x3x8x4xbf16, #tpu.memory_space<vmem>>, vector<1x1x8x4xbf16>
    %55 = vector.shape_cast %54 : vector<1x1x8x4xbf16> to vector<8x4xbf16>
    %cst_53 = arith.constant dense<0.000000e+00> : vector<256x4xf32>
    %56 = tpu.matmul %53, %55, %cst_53 {dimension_numbers = #tpu.dot_dimension_numbers<[1], [0], [0], [1], [0, 0, 1, 1], [], []>} : vector<256x8xbf16>, vector<8x4xbf16>, vector<256x4xf32> -> vector<256x4xf32>
    %57 = arith.addf %51, %56 : vector<256x4xf32>
    %58 = vector.extract_strided_slice %46 {offsets = [4, 0, 0], sizes = [16, 16, 8], strides = [1, 1, 1]} : vector<20x16x8xbf16> to vector<16x16x8xbf16>
    %59 = vector.shape_cast %58 : vector<16x16x8xbf16> to vector<256x8xbf16>
    %c2_54 = arith.constant 2 : index
    %c1_55 = arith.constant 1 : index
    %c0_56 = arith.constant 0 : index
    %c0_57 = arith.constant 0 : index
    %60 = vector.load %arg6[%c2_54, %c1_55, %c0_56, %c0_57] : memref<3x3x8x4xbf16, #tpu.memory_space<vmem>>, vector<1x1x8x4xbf16>
    %61 = vector.shape_cast %60 : vector<1x1x8x4xbf16> to vector<8x4xbf16>
    %cst_58 = arith.constant dense<0.000000e+00> : vector<256x4xf32>
    %62 = tpu.matmul %59, %61, %cst_58 {dimension_numbers = #tpu.dot_dimension_numbers<[1], [0], [0], [1], [0, 0, 1, 1], [], []>} : vector<256x8xbf16>, vector<8x4xbf16>, vector<256x4xf32> -> vector<256x4xf32>
    %63 = arith.addf %57, %62 : vector<256x4xf32>
    %c0_59 = arith.constant 0 : index
    %c0_60 = arith.constant 0 : index
    %c0_61 = arith.constant 0 : index
    %64 = vector.load %arg7[%c0_59, %c0_60, %c0_61] : memref<1x256x4xf32, #tpu.memory_space<vmem>>, vector<1x256x4xf32>
    %65 = vector.shape_cast %64 : vector<1x256x4xf32> to vector<256x4xf32>
    %66 = arith.addf %65, %63 : vector<256x4xf32>
    %c0_62 = arith.constant 0 : index
    %c0_63 = arith.constant 0 : index
    %c0_64 = arith.constant 0 : index
    %67 = vector.load %arg7[%c0_62, %c0_63, %c0_64] : memref<1x256x4xf32, #tpu.memory_space<vmem>>, vector<1x256x4xf32>
    %68 = vector.shape_cast %67 : vector<1x256x4xf32> to vector<256x4xf32>
    %69 = vector.shape_cast %66 : vector<256x4xf32> to vector<1x256x4xf32>
    tpu.vector_store %arg7[%c0_62, %c0_63, %c0_64], %69 {strides = array<i32>} : memref<1x256x4xf32, #tpu.memory_space<vmem>>, vector<1x256x4xf32>,
    %c0_65 = arith.constant 0 : index
    %c4 = arith.constant 4 : index
    %c0_66 = arith.constant 0 : index
    %70 = vector.load %arg8[%c0_65, %c4, %c0_66] : memref<20x20x8xbf16, #tpu.memory_space<vmem>>, vector<20x16x8xbf16>
    %71 = vector.extract_strided_slice %70 {offsets = [0, 0, 0], sizes = [16, 16, 8], strides = [1, 1, 1]} : vector<20x16x8xbf16> to vector<16x16x8xbf16>
    %72 = vector.shape_cast %71 : vector<16x16x8xbf16> to vector<256x8xbf16>
    %c0_67 = arith.constant 0 : index
    %c2_68 = arith.constant 2 : index
    %c0_69 = arith.constant 0 : index
    %c0_70 = arith.constant 0 : index
    %73 = vector.load %arg6[%c0_67, %c2_68, %c0_69, %c0_70] : memref<3x3x8x4xbf16, #tpu.memory_space<vmem>>, vector<1x1x8x4xbf16>
    %74 = vector.shape_cast %73 : vector<1x1x8x4xbf16> to vector<8x4xbf16>
    %cst_71 = arith.constant dense<0.000000e+00> : vector<256x4xf32>
    %75 = tpu.matmul %72, %74, %cst_71 {dimension_numbers = #tpu.dot_dimension_numbers<[1], [0], [0], [1], [0, 0, 1, 1], [], []>} : vector<256x8xbf16>, vector<8x4xbf16>, vector<256x4xf32> -> vector<256x4xf32>
    %76 = vector.extract_strided_slice %70 {offsets = [2, 0, 0], sizes = [16, 16, 8], strides = [1, 1, 1]} : vector<20x16x8xbf16> to vector<16x16x8xbf16>
    %77 = vector.shape_cast %76 : vector<16x16x8xbf16> to vector<256x8xbf16>
    %c1_72 = arith.constant 1 : index
    %c2_73 = arith.constant 2 : index
    %c0_74 = arith.constant 0 : index
    %c0_75 = arith.constant 0 : index
    %78 = vector.load %arg6[%c1_72, %c2_73, %c0_74, %c0_75] : memref<3x3x8x4xbf16, #tpu.memory_space<vmem>>, vector<1x1x8x4xbf16>
    %79 = vector.shape_cast %78 : vector<1x1x8x4xbf16> to vector<8x4xbf16>
    %cst_76 = arith.constant dense<0.000000e+00> : vector<256x4xf32>
    %80 = tpu.matmul %77, %79, %cst_76 {dimension_numbers = #tpu.dot_dimension_numbers<[1], [0], [0], [1], [0, 0, 1, 1], [], []>} : vector<256x8xbf16>, vector<8x4xbf16>, vector<256x4xf32> -> vector<256x4xf32>
    %81 = arith.addf %75, %80 : vector<256x4xf32>
    %82 = vector.extract_strided_slice %70 {offsets = [4, 0, 0], sizes = [16, 16, 8], strides = [1, 1, 1]} : vector<20x16x8xbf16> to vector<16x16x8xbf16>
    %83 = vector.shape_cast %82 : vector<16x16x8xbf16> to vector<256x8xbf16>
    %c2_77 = arith.constant 2 : index
    %c2_78 = arith.constant 2 : index
    %c0_79 = arith.constant 0 : index
    %c0_80 = arith.constant 0 : index
    %84 = vector.load %arg6[%c2_77, %c2_78, %c0_79, %c0_80] : memref<3x3x8x4xbf16, #tpu.memory_space<vmem>>, vector<1x1x8x4xbf16>
    %85 = vector.shape_cast %84 : vector<1x1x8x4xbf16> to vector<8x4xbf16>
    %cst_81 = arith.constant dense<0.000000e+00> : vector<256x4xf32>
    %86 = tpu.matmul %83, %85, %cst_81 {dimension_numbers = #tpu.dot_dimension_numbers<[1], [0], [0], [1], [0, 0, 1, 1], [], []>} : vector<256x8xbf16>, vector<8x4xbf16>, vector<256x4xf32> -> vector<256x4xf32>
    %87 = arith.addf %81, %86 : vector<256x4xf32>
    %c0_82 = arith.constant 0 : index
    %c0_83 = arith.constant 0 : index
    %c0_84 = arith.constant 0 : index
    %88 = vector.load %arg7[%c0_82, %c0_83, %c0_84] : memref<1x256x4xf32, #tpu.memory_space<vmem>>, vector<1x256x4xf32>
    %89 = vector.shape_cast %88 : vector<1x256x4xf32> to vector<256x4xf32>
    %90 = arith.addf %89, %87 : vector<256x4xf32>
    %c0_85 = arith.constant 0 : index
    %c0_86 = arith.constant 0 : index
    %c0_87 = arith.constant 0 : index
    %91 = vector.load %arg7[%c0_85, %c0_86, %c0_87] : memref<1x256x4xf32, #tpu.memory_space<vmem>>, vector<1x256x4xf32>
    %92 = vector.shape_cast %91 : vector<1x256x4xf32> to vector<256x4xf32>
    %93 = vector.shape_cast %90 : vector<256x4xf32> to vector<1x256x4xf32>
    tpu.vector_store %arg7[%c0_85, %c0_86, %c0_87], %93 {strides = array<i32>} : memref<1x256x4xf32, #tpu.memory_space<vmem>>, vector<1x256x4xf32>,
    return
  }
  func.func @transform_0(%arg0: i32, %arg1: i32) -> (i32, i32, i32, i32) {
    %c0_i32 = arith.constant 0 : i32
    %c0_i32_0 = arith.constant 0 : i32
    %c0_i32_1 = arith.constant 0 : i32
    %c0_i32_2 = arith.constant 0 : i32
    return %arg0, %c0_i32, %c0_i32_0, %c0_i32_1 : i32, i32, i32, i32
  }
  func.func @transform_1(%arg0: i32, %arg1: i32) -> (i32, i32) {
    %c0_i32 = arith.constant 0 : i32
    %c0_i32_0 = arith.constant 0 : i32
    %c0_i32_1 = arith.constant 0 : i32
    return %c0_i32, %c0_i32_0 : i32, i32
  }
  func.func @transform_2(%arg0: i32, %arg1: i32) -> (i32, i32) {
    %c0_i32 = arith.constant 0 : i32
    %c0_i32_0 = arith.constant 0 : i32
    %c0_i32_1 = arith.constant 0 : i32
    return %c0_i32, %c0_i32_0 : i32, i32
  }
  func.func @transform_3(%arg0: i32, %arg1: i32) -> (i32, i32) {
    %c0_i32 = arith.constant 0 : i32
    %c0_i32_0 = arith.constant 0 : i32
    %c0_i32_1 = arith.constant 0 : i32
    return %c0_i32, %c0_i32_0 : i32, i32
  }
  func.func @transform_4(%arg0: i32, %arg1: i32) -> (i32, i32, i32, i32) {
    %c0_i32 = arith.constant 0 : i32
    %c0_i32_0 = arith.constant 0 : i32
    %c0_i32_1 = arith.constant 0 : i32
    %c0_i32_2 = arith.constant 0 : i32
    %c0_i32_3 = arith.constant 0 : i32
    return %c0_i32, %c0_i32_0, %c0_i32_1, %c0_i32_2 : i32, i32, i32, i32
  }
  func.func @transform_5(%arg0: i32, %arg1: i32) -> (i32, i32, i32) {
    %c0_i32 = arith.constant 0 : i32
    %c0_i32_0 = arith.constant 0 : i32
    return %arg0, %arg1, %c0_i32 : i32, i32, i32
  }
}

</mosaic_0001>

<llo_original>
// kernel: tpu_custom_call.1
$region0: #{tpu_custom_call.1}
  #allocation0 [shape = 'u32[]', space=smem, size = 0x4, offset = 0x4, fixed_abs, tag = 'smem constant byte address 0x4 - core index']
  #allocation1 [shape = 'u32[144,128]{1,0:T(1,128)}', space=vmem, size = 0x12000, scoped, tag = 'internal scratch']
  #allocation2 [shape = 'bf16[20,20,8]{2,1,0:T(8,128)(2,1)}', space=vmem, size = 0x1e000, scoped, tag = 'scratch operand']
  %s0 = inlined_call_operand.vmem [shape: bf16[2,16,16,4], index: 0, kind: input, shape index: {}]
  %s1 = inlined_call_operand.vmem [shape: bf16[4,8], index: 1, kind: input, shape index: {}]
  %s2 = inlined_call_operand.vmem [shape: f32[1,8], index: 2, kind: input, shape index: {}]
  %s3 = inlined_call_operand.vmem [shape: f32[1,8], index: 3, kind: input, shape index: {}]
  %s4 = inlined_call_operand.vmem [shape: bf16[3,3,8,4], index: 4, kind: input, shape index: {}]
  %s5 = inlined_call_operand.vmem [shape: f32[2,256,4], index: 5, kind: output, shape index: {}]
  %s6 = sld [smem:[#allocation0]]
  $region57: #{tpu_custom_call.1} parent=0
    _
  %s8 = ssub.s32 1, %s6
  %s9 = scalar_select 0, %s8, %s6
  loop: start=0, step=1, limit=4
  $region2: #{tpu_custom_call.1} parent=0 // loop_pre_header
    _
  $region3: #{tpu_custom_call.1} parent=0 // loop_header
    %s11 = sphi 0, %s15
    %p12 = scmp.ge.s32.totalorder %s11, 4
    %s18 = sphi 0, %s30
    %s19 = sphi 0, %s26
    %s20 = sphi 0, %s18
    %s21 = sphi 0, %s19
    %s22 = sphi 0, %s20
    %s23 = sphi 0, %s21
    %s33 = sphi 0, %s35
    %s36 = sphi 0, %s33
    %s37 = sphi 0, %s36
    %s53 = sphi 0, %s37
    %s57 = sphi 0, %s57
    %s59 = sphi 0, %s57
    %s60 = sphi 0, %s59
    %s74 = sphi 0, %s60
    %s78 = sphi 0, %s78
    %s80 = sphi 0, %s78
    %s81 = sphi 0, %s80
    %s95 = sphi 0, %s81
    %s99 = sphi 0, %s99
    %s101 = sphi 0, %s99
    %s102 = sphi 0, %s101
    %s116 = sphi 0, %s102
    %s120 = sphi 0, %s120
    %s122 = sphi 0, %s120
    %s123 = sphi 0, %s122
    %s137 = sphi 0, %s123
    %s145 = sphi 0, %s147
    %s148 = sphi 0, %s145
    %s149 = sphi 0, %s148
    %s165 = sphi 0, %s149
  $region4: #{tpu_custom_call.1} parent=0 // loop_header_branch
    %14 = sbr.rel (%p12) target = $region8
  $region5: #{tpu_custom_call.1} parent=0 // loop_body
    %s16 = ssub.s32 %s11, 1
    %s17 = ssub.s32 %s11, 2
    %s24 = sadd.s32 1, %s19
    %p25 = scmp.ge.s32.totalorder %s24, 1
    %s26 = scalar_select %p25, 0, %s24
    %s27 = sadd.s32 1, %s18
    %s28 = scalar_select %p25, %s27, %s18
    %p29 = scmp.ge.s32.totalorder %s28, 2
    %s30 = scalar_select %p29, 0, %s28
    %s31 = ssub.s32 %s18, %s30
    %p32 = scmp.eq.s32.totalorder %s31, 0
    %s34 = sadd.s32 %s33, 1
    %s35 = scalar_select %p32, %s33, %s34
    %p38 = pneg %p32
    %p39 = scmp.eq.s32.totalorder %s11, 1
    %p40 = por %p38, %p39
    %p41 = scmp.ne.s32.totalorder %s33, %s36
    %p42 = scmp.eq.s32.totalorder %s11, 0
    %p43 = por %p41, %p42
    %p44 = scmp.ne.s32.totalorder %s33, %s36
    %p45 = scmp.eq.s32.totalorder %s16, 1
    %p46 = por %p44, %p45
    %p47 = scmp.ne.s32.totalorder %s36, %s37
    %p48 = scmp.eq.s32.totalorder %s16, 0
    %p49 = por %p47, %p48
    %p50 = scmp.ne.s32.totalorder %s36, %s37
    %p51 = scmp.eq.s32.totalorder %s17, 1
    %p52 = por %p50, %p51
    %p54 = scmp.ne.s32.totalorder %s37, %s53
    %p55 = scmp.eq.s32.totalorder %s17, 0
    %p56 = por %p54, %p55
    %s58 = sadd.s32 %s57, 1
    %p61 = scmp.eq.s32.totalorder %s11, 1
    %p62 = scmp.ne.s32.totalorder %s57, %s59
    %p63 = scmp.eq.s32.totalorder %s11, 0
    %p64 = por %p62, %p63
    %p65 = scmp.ne.s32.totalorder %s57, %s59
    %p66 = scmp.eq.s32.totalorder %s16, 1
    %p67 = por %p65, %p66
    %p68 = scmp.ne.s32.totalorder %s59, %s60
    %p69 = scmp.eq.s32.totalorder %s16, 0
    %p70 = por %p68, %p69
    %p71 = scmp.ne.s32.totalorder %s59, %s60
    %p72 = scmp.eq.s32.totalorder %s17, 1
    %p73 = por %p71, %p72
    %p75 = scmp.ne.s32.totalorder %s60, %s74
    %p76 = scmp.eq.s32.totalorder %s17, 0
    %p77 = por %p75, %p76
    %s79 = sadd.s32 %s78, 1
    %p82 = scmp.eq.s32.totalorder %s11, 1
    %p83 = scmp.ne.s32.totalorder %s78, %s80
    %p84 = scmp.eq.s32.totalorder %s11, 0
    %p85 = por %p83, %p84
    %p86 = scmp.ne.s32.totalorder %s78, %s80
    %p87 = scmp.eq.s32.totalorder %s16, 1
    %p88 = por %p86, %p87
    %p89 = scmp.ne.s32.totalorder %s80, %s81
    %p90 = scmp.eq.s32.totalorder %s16, 0
    %p91 = por %p89, %p90
    %p92 = scmp.ne.s32.totalorder %s80, %s81
    %p93 = scmp.eq.s32.totalorder %s17, 1
    %p94 = por %p92, %p93
    %p96 = scmp.ne.s32.totalorder %s81, %s95
    %p97 = scmp.eq.s32.totalorder %s17, 0
    %p98 = por %p96, %p97
    %s100 = sadd.s32 %s99, 1
    %p103 = scmp.eq.s32.totalorder %s11, 1
    %p104 = scmp.ne.s32.totalorder %s99, %s101
    %p105 = scmp.eq.s32.totalorder %s11, 0
    %p106 = por %p104, %p105
    %p107 = scmp.ne.s32.totalorder %s99, %s101
    %p108 = scmp.eq.s32.totalorder %s16, 1
    %p109 = por %p107, %p108
    %p110 = scmp.ne.s32.totalorder %s101, %s102
    %p111 = scmp.eq.s32.totalorder %s16, 0
    %p112 = por %p110, %p111
    %p113 = scmp.ne.s32.totalorder %s101, %s102
    %p114 = scmp.eq.s32.totalorder %s17, 1
    %p115 = por %p113, %p114
    %p117 = scmp.ne.s32.totalorder %s102, %s116
    %p118 = scmp.eq.s32.totalorder %s17, 0
    %p119 = por %p117, %p118
    %s121 = sadd.s32 %s120, 1
    %p124 = scmp.eq.s32.totalorder %s11, 1
    %p125 = scmp.ne.s32.totalorder %s120, %s122
    %p126 = scmp.eq.s32.totalorder %s11, 0
    %p127 = por %p125, %p126
    %p128 = scmp.ne.s32.totalorder %s120, %s122
    %p129 = scmp.eq.s32.totalorder %s16, 1
    %p130 = por %p128, %p129
    %p131 = scmp.ne.s32.totalorder %s122, %s123
    %p132 = scmp.eq.s32.totalorder %s16, 0
    %p133 = por %p131, %p132
    %p134 = scmp.ne.s32.totalorder %s122, %s123
    %p135 = scmp.eq.s32.totalorder %s17, 1
    %p136 = por %p134, %p135
    %p138 = scmp.ne.s32.totalorder %s123, %s137
    %p139 = scmp.eq.s32.totalorder %s17, 0
    %p140 = por %p138, %p139
    %s141 = ssub.s32 %s18, %s30
    %s142 = ssub.s32 %s19, %s26
    %s143 = sor.u32 %s141, %s142
    %p144 = scmp.eq.s32.totalorder %s143, 0
    %s146 = sadd.s32 %s145, 1
    %s147 = scalar_select %p144, %s145, %s146
    %p150 = pneg %p144
    %p151 = scmp.eq.s32.totalorder %s11, 1
    %p152 = por %p150, %p151
    %p153 = scmp.ne.s32.totalorder %s145, %s148
    %p154 = scmp.eq.s32.totalorder %s11, 0
    %p155 = por %p153, %p154
    %p156 = scmp.ne.s32.totalorder %s145, %s148
    %p157 = scmp.eq.s32.totalorder %s16, 1
    %p158 = por %p156, %p157
    %p159 = scmp.ne.s32.totalorder %s148, %s149
    %p160 = scmp.eq.s32.totalorder %s16, 0
    %p161 = por %p159, %p160
    %p162 = scmp.ne.s32.totalorder %s148, %s149
    %p163 = scmp.eq.s32.totalorder %s17, 1
    %p164 = por %p162, %p163
    %p166 = scmp.ne.s32.totalorder %s149, %s165
    %p167 = scmp.eq.s32.totalorder %s17, 0
    %p168 = por %p166, %p167
    %p169 = scmp.le.s32.totalorder 1, %s11
    %p170 = scmp.lt.s32.totalorder %s11, 3
    %p171 = pnand %p169, %p170
    %p172 = pneg %p171
    // Predicated region
    $region9: #{tpu_custom_call.1} parent=5 // pred_check
      _
    $region10: #{tpu_custom_call.1} parent=5 // pred_check_branch
      %174 = sbr.rel (%p171) target = $region12
    $region11: #{tpu_custom_call.1} parent=5 // pred_region
      %s175 = ssub.s32 %s11, 1
      // Predicated region
      $region13: #{tpu_custom_call.1} parent=11 // pred_check
        %p176 = pneg %p70
      $region14: #{tpu_custom_call.1} parent=11 // pred_check_branch
        %178 = sbr.rel (%p176) target = $region16
      $region15: #{tpu_custom_call.1} parent=11 // pred_region
        _
      $region16: #{tpu_custom_call.1} parent=11 // pred_fallthru
        _
      // Predicated region
      $region17: #{tpu_custom_call.1} parent=11 // pred_check
        %p179 = pneg %p91
      $region18: #{tpu_custom_call.1} parent=11 // pred_check_branch
        %181 = sbr.rel (%p179) target = $region20
      $region19: #{tpu_custom_call.1} parent=11 // pred_region
        _
      $region20: #{tpu_custom_call.1} parent=11 // pred_fallthru
        _
      // Predicated region
      $region21: #{tpu_custom_call.1} parent=11 // pred_check
        %p182 = pneg %p112
      $region22: #{tpu_custom_call.1} parent=11 // pred_check_branch
        %184 = sbr.rel (%p182) target = $region24
      $region23: #{tpu_custom_call.1} parent=11 // pred_region
        _
      $region24: #{tpu_custom_call.1} parent=11 // pred_fallthru
        _
      // Predicated region
      $region25: #{tpu_custom_call.1} parent=11 // pred_check
        %p185 = pneg %p133
      $region26: #{tpu_custom_call.1} parent=11 // pred_check_branch
        %187 = sbr.rel (%p185) target = $region28
      $region27: #{tpu_custom_call.1} parent=11 // pred_region
        _
      $region28: #{tpu_custom_call.1} parent=11 // pred_fallthru
        _
    $region12: #{tpu_custom_call.1} parent=5 // pred_fallthru
      _
    %p188 = scmp.lt.s32.totalorder %s11, 2
    // Predicated region
    $region29: #{tpu_custom_call.1} parent=5 // pred_check
      %p189 = pneg %p188
    $region30: #{tpu_custom_call.1} parent=5 // pred_check_branch
      %191 = sbr.rel (%p189) target = $region32
    $region31: #{tpu_custom_call.1} parent=5 // pred_region
      // Predicated region
      $region33: #{tpu_custom_call.1} parent=31 // pred_check
        %p192 = pneg %p43
      $region34: #{tpu_custom_call.1} parent=31 // pred_check_branch
        %194 = sbr.rel (%p192) target = $region36
      $region35: #{tpu_custom_call.1} parent=31 // pred_region
        %p195 = scmp.lt.s32.totalorder %s18, 1
        %s196 = scalar_select %p195, %s18, 1
        %s197 = smul.addr %s196, 32
        %s198 = smul.addr %s197, 4
        %s199 = scalar_lea.vmem %s0, %s198
      $region36: #{tpu_custom_call.1} parent=31 // pred_fallthru
        _
    $region32: #{tpu_custom_call.1} parent=5 // pred_fallthru
      _
    %p200 = scmp.le.s32.totalorder 1, %s11
    %p201 = scmp.lt.s32.totalorder %s11, 3
    %p202 = pnand %p200, %p201
    %p203 = pneg %p202
    // Predicated region
    $region37: #{tpu_custom_call.1} parent=5 // pred_check
      _
    $region38: #{tpu_custom_call.1} parent=5 // pred_check_branch
      %205 = sbr.rel (%p202) target = $region40
    $region39: #{tpu_custom_call.1} parent=5 // pred_region
      %s206 = ssub.s32 %s11, 1
      %p207 = scmp.lt.s32.totalorder %s20, 1
      %s208 = scalar_select %p207, %s20, 1
      %s209 = smul.addr %s208, 32
      %s210 = smul.addr %s209, 4
      %s211 = scalar_lea.vmem %s0, %s210
      %p212 = pneg %p49
      %p213 = pneg %p46
      %p214 = pneg %p70
      %p215 = pneg %p67
      %p216 = pneg %p91
      %p217 = pneg %p88
      %p218 = pneg %p112
      %p219 = pneg %p109
      %p220 = pneg %p133
      %p221 = pneg %p130
      %p222 = pneg %p161
      %p223 = pneg %p158
      %s224 = smul.u32 32, %s21
      %p225 = scmp.lt.s32.totalorder %s20, 1
      %s226 = scalar_select %p225, %s20, 1
      %p227 = scmp.lt.s32.totalorder %s224, 31
      %s228 = scalar_select %p227, %s224, 31
      %s229 = smul.addr %s226, 32
      %s230 = sadd.s32 %s228, %s229
      %s231 = smul.addr %s230, 8
      %s232 = scalar_lea.vmem %s5, %s231
      %p233 = scmp.lt.s32.totalorder %s20, 1
      %s234 = scalar_select %p233, %s20, 1
      %s235 = smul.addr %s234, 32
      %s236 = smul.addr %s235, 4
      %s237 = scalar_lea.vmem %s0, %s236
      %s238 = smul.u32 32, %s21
      %p239 = scmp.lt.s32.totalorder %s20, 1
      %s240 = scalar_select %p239, %s20, 1
      %p241 = scmp.lt.s32.totalorder %s238, 31
      %s242 = scalar_select %p241, %s238, 31
      %s243 = smul.addr %s240, 32
      %s244 = sadd.s32 %s242, %s243
      %s245 = smul.addr %s244, 8
      %s246 = scalar_lea.vmem %s5, %s245
      %s247 = smul.u32 32, %s21
      %p249 = scmp.eq.s32.totalorder %s21, 0
      // Predicated region
      $region41: #{tpu_custom_call.1} parent=39 // pred_check
        %p250 = pneg %p249
      $region42: #{tpu_custom_call.1} parent=39 // pred_check_branch
        %252 = sbr.rel (%p250) target = $region44
      $region43: #{tpu_custom_call.1} parent=39 // pred_region
        %vm253 = vcmask 57344
        %254 = vst.msk [vmem:[#allocation2] sm:$0x1] %vm253, 0
        %255 = vst.msk [vmem:[#allocation2 + $0xc] sm:$0x1] %vm253, 0
        %256 = vst.msk [vmem:[#allocation2 + $0x18] sm:$0x1] %vm253, 0
        %257 = vst.msk [vmem:[#allocation2 + $0x24] sm:$0x1] %vm253, 0
        %258 = vst.msk [vmem:[#allocation2 + $0x30] sm:$0x1] %vm253, 0
        %259 = vst.msk [vmem:[#allocation2 + $0x3c] sm:$0x1] %vm253, 0
        %260 = vst.msk [vmem:[#allocation2 + $0x48] sm:$0x1] %vm253, 0
        %261 = vst.msk [vmem:[#allocation2 + $0x54] sm:$0x1] %vm253, 0
        %262 = vst.msk [vmem:[#allocation2 + $0x60] sm:$0x1] %vm253, 0
        %263 = vst.msk [vmem:[#allocation2 + $0x6c] sm:$0x1] %vm253, 0
        %264 = vst.msk [vmem:[#allocation2 + $0x78] sm:$0x1] %vm253, 0
        %265 = vst.msk [vmem:[#allocation2 + $0x84] sm:$0x1] %vm253, 0
        %266 = vst.msk [vmem:[#allocation2 + $0x90] sm:$0x1] %vm253, 0
        %267 = vst.msk [vmem:[#allocation2 + $0x9c] sm:$0x1] %vm253, 0
        %268 = vst.msk [vmem:[#allocation2 + $0xa8] sm:$0x1] %vm253, 0
        %269 = vst.msk [vmem:[#allocation2 + $0xb4] sm:$0x1] %vm253, 0
        %270 = vst.msk [vmem:[#allocation2 + $0xc0] sm:$0x1] %vm253, 0
        %271 = vst.msk [vmem:[#allocation2 + $0xcc] sm:$0x1] %vm253, 0
        %272 = vst.msk [vmem:[#allocation2 + $0xd8] sm:$0x1] %vm253, 0
        %273 = vst.msk [vmem:[#allocation2 + $0xe4] sm:$0x1] %vm253, 0
        %vm274 = vcmask 58369
        %275 = vst.msk [vmem:[#allocation2 + $0x8] sm:$0x2] %vm274, 0
        %276 = vst.msk [vmem:[#allocation2 + $0x14] sm:$0x2] %vm274, 0
        %277 = vst.msk [vmem:[#allocation2 + $0x20] sm:$0x2] %vm274, 0
        %278 = vst.msk [vmem:[#allocation2 + $0x2c] sm:$0x2] %vm274, 0
        %279 = vst.msk [vmem:[#allocation2 + $0x38] sm:$0x2] %vm274, 0
        %280 = vst.msk [vmem:[#allocation2 + $0x44] sm:$0x2] %vm274, 0
        %281 = vst.msk [vmem:[#allocation2 + $0x50] sm:$0x2] %vm274, 0
        %282 = vst.msk [vmem:[#allocation2 + $0x5c] sm:$0x2] %vm274, 0
        %283 = vst.msk [vmem:[#allocation2 + $0x68] sm:$0x2] %vm274, 0
        %284 = vst.msk [vmem:[#allocation2 + $0x74] sm:$0x2] %vm274, 0
        %285 = vst.msk [vmem:[#allocation2 + $0x80] sm:$0x2] %vm274, 0
        %286 = vst.msk [vmem:[#allocation2 + $0x8c] sm:$0x2] %vm274, 0
        %287 = vst.msk [vmem:[#allocation2 + $0x98] sm:$0x2] %vm274, 0
        %288 = vst.msk [vmem:[#allocation2 + $0xa4] sm:$0x2] %vm274, 0
        %289 = vst.msk [vmem:[#allocation2 + $0xb0] sm:$0x2] %vm274, 0
        %290 = vst.msk [vmem:[#allocation2 + $0xbc] sm:$0x2] %vm274, 0
        %291 = vst.msk [vmem:[#allocation2 + $0xc8] sm:$0x2] %vm274, 0
        %292 = vst.msk [vmem:[#allocation2 + $0xd4] sm:$0x2] %vm274, 0
        %293 = vst.msk [vmem:[#allocation2 + $0xe0] sm:$0x2] %vm274, 0
        %294 = vst.msk [vmem:[#allocation2 + $0xec] sm:$0x2] %vm274, 0
      $region44: #{tpu_custom_call.1} parent=39 // pred_fallthru
        _
      %v295 = vld [vmem:[%s1] sm:$0x3]
      %v296 = vld [vmem:[%s2] sm:$0x1]
      %v297 = vld [vmem:[%s3] sm:$0x1]
      %v298 = vld [vmem:[%s237] sm:$0xf]
      %v299 = vld [vmem:[%s237 + $0x4] sm:$0xf]
      %v300 = vld [vmem:[%s237 + $0x8] sm:$0xf]
      %v301 = vld [vmem:[%s237 + $0xc] sm:$0xf]
      %v302 = vld [vmem:[%s237 + $0x10] sm:$0xf]
      %v303 = vld [vmem:[%s237 + $0x14] sm:$0xf]
      %v304 = vld [vmem:[%s237 + $0x18] sm:$0xf]
      %v305 = vld [vmem:[%s237 + $0x1c] sm:$0xf]
      %v306 = vld [vmem:[%s237 + $0x20] sm:$0xf]
      %v307 = vld [vmem:[%s237 + $0x24] sm:$0xf]
      %v308 = vld [vmem:[%s237 + $0x28] sm:$0xf]
      %v309 = vld [vmem:[%s237 + $0x2c] sm:$0xf]
      %v310 = vld [vmem:[%s237 + $0x30] sm:$0xf]
      %v311 = vld [vmem:[%s237 + $0x34] sm:$0xf]
      %v312 = vld [vmem:[%s237 + $0x38] sm:$0xf]
      %v313 = vld [vmem:[%s237 + $0x3c] sm:$0xf]
      %v314 = vld [vmem:[%s237 + $0x40] sm:$0xf]
      %v315 = vld [vmem:[%s237 + $0x44] sm:$0xf]
      %v316 = vld [vmem:[%s237 + $0x48] sm:$0xf]
      %v317 = vld [vmem:[%s237 + $0x4c] sm:$0xf]
      %v318 = vld [vmem:[%s237 + $0x50] sm:$0xf]
      %v319 = vld [vmem:[%s237 + $0x54] sm:$0xf]
      %v320 = vld [vmem:[%s237 + $0x58] sm:$0xf]
      %v321 = vld [vmem:[%s237 + $0x5c] sm:$0xf]
      %v322 = vld [vmem:[%s237 + $0x60] sm:$0xf]
      %v323 = vld [vmem:[%s237 + $0x64] sm:$0xf]
      %v324 = vld [vmem:[%s237 + $0x68] sm:$0xf]
      %v325 = vld [vmem:[%s237 + $0x6c] sm:$0xf]
      %v326 = vld [vmem:[%s237 + $0x70] sm:$0xf]
      %v327 = vld [vmem:[%s237 + $0x74] sm:$0xf]
      %v328 = vld [vmem:[%s237 + $0x78] sm:$0xf]
      %v329 = vld [vmem:[%s237 + $0x7c] sm:$0xf]
      %v330 = vmax.bf16 %v298, 0
      %v331 = vmax.bf16 %v299, 0
      %v332 = vmax.bf16 %v300, 0
      %v333 = vmax.bf16 %v301, 0
      %v334 = vmax.bf16 %v302, 0
      %v335 = vmax.bf16 %v303, 0
      %v336 = vmax.bf16 %v304, 0
      %v337 = vmax.bf16 %v305, 0
      %v338 = vmax.bf16 %v306, 0
      %v339 = vmax.bf16 %v307, 0
      %v340 = vmax.bf16 %v308, 0
      %v341 = vmax.bf16 %v309, 0
      %v342 = vmax.bf16 %v310, 0
      %v343 = vmax.bf16 %v311, 0
      %v344 = vmax.bf16 %v312, 0
      %v345 = vmax.bf16 %v313, 0
      %v346 = vmax.bf16 %v314, 0
      %v347 = vmax.bf16 %v315, 0
      %v348 = vmax.bf16 %v316, 0
      %v349 = vmax.bf16 %v317, 0
      %v350 = vmax.bf16 %v318, 0
      %v351 = vmax.bf16 %v319, 0
      %v352 = vmax.bf16 %v320, 0
      %v353 = vmax.bf16 %v321, 0
      %v354 = vmax.bf16 %v322, 0
      %v355 = vmax.bf16 %v323, 0
      %v356 = vmax.bf16 %v324, 0
      %v357 = vmax.bf16 %v325, 0
      %v358 = vmax.bf16 %v326, 0
      %v359 = vmax.bf16 %v327, 0
      %v360 = vmax.bf16 %v328, 0
      %v361 = vmax.bf16 %v329, 0
      %v394 = vunpack.c.l.b16 %v330
      %v395 = vunpack.c.l.b16 %v331
      %v396 = vunpack.c.l.b16 %v332
      %v397 = vunpack.c.l.b16 %v333
      %v398 = vunpack.c.l.b16 %v334
      %v399 = vunpack.c.l.b16 %v335
      %v400 = vunpack.c.l.b16 %v336
      %v401 = vunpack.c.l.b16 %v337
      %v402 = vunpack.c.l.b16 %v338
      %v403 = vunpack.c.l.b16 %v339
      %v404 = vunpack.c.l.b16 %v340
      %v405 = vunpack.c.l.b16 %v341
      %v406 = vunpack.c.l.b16 %v342
      %v407 = vunpack.c.l.b16 %v343
      %v408 = vunpack.c.l.b16 %v344
      %v409 = vunpack.c.l.b16 %v345
      %v410 = vunpack.c.l.b16 %v346
      %v411 = vunpack.c.l.b16 %v347
      %v412 = vunpack.c.l.b16 %v348
      %v413 = vunpack.c.l.b16 %v349
      %v414 = vunpack.c.l.b16 %v350
      %v415 = vunpack.c.l.b16 %v351
      %v416 = vunpack.c.l.b16 %v352
      %v417 = vunpack.c.l.b16 %v353
      %v418 = vunpack.c.l.b16 %v354
      %v419 = vunpack.c.l.b16 %v355
      %v420 = vunpack.c.l.b16 %v356
      %v421 = vunpack.c.l.b16 %v357
      %v422 = vunpack.c.l.b16 %v358
      %v423 = vunpack.c.l.b16 %v359
      %v424 = vunpack.c.l.b16 %v360
      %v425 = vunpack.c.l.b16 %v361
      %v426 = vpack.c.b16 %v395, %v394
      %v427 = vpack.c.b16 %v397, %v396
      %v428 = vpack.c.b16 %v399, %v398
      %v429 = vpack.c.b16 %v401, %v400
      %v430 = vpack.c.b16 %v403, %v402
      %v431 = vpack.c.b16 %v405, %v404
      %v432 = vpack.c.b16 %v407, %v406
      %v433 = vpack.c.b16 %v409, %v408
      %v434 = vpack.c.b16 %v411, %v410
      %v435 = vpack.c.b16 %v413, %v412
      %v436 = vpack.c.b16 %v415, %v414
      %v437 = vpack.c.b16 %v417, %v416
      %v438 = vpack.c.b16 %v419, %v418
      %v439 = vpack.c.b16 %v421, %v420
      %v440 = vpack.c.b16 %v423, %v422
      %v441 = vpack.c.b16 %v425, %v424
      %vm442 = vcmask 31744
      %v444 = vsel %vm442, %v426, 0
      %v447 = vsel %vm442, %v427, 0
      %v450 = vsel %vm442, %v428, 0
      %v453 = vsel %vm442, %v429, 0
      %v456 = vsel %vm442, %v430, 0
      %v459 = vsel %vm442, %v431, 0
      %v462 = vsel %vm442, %v432, 0
      %v465 = vsel %vm442, %v433, 0
      %v468 = vsel %vm442, %v434, 0
      %v471 = vsel %vm442, %v435, 0
      %v474 = vsel %vm442, %v436, 0
      %v477 = vsel %vm442, %v437, 0
      %v480 = vsel %vm442, %v438, 0
      %v483 = vsel %vm442, %v439, 0
      %v486 = vsel %vm442, %v440, 0
      %v489 = vsel %vm442, %v441, 0
      %vm491 = vcmask 1041408
      %v493 = vsel %vm491, %v295, 0
      %495 = vmatprep.subr.bf16.mxu0 0
      %496 = vmatpush1.bf16.msra.mxu0 %v493
      %497 = vmatprep.subr.bf16.mxu0 0
      %498 = vmatpush1.bf16.msra.mxu0 0
      %499 = vmatprep.subr.bf16.mxu0 0
      %500 = vmatpush1.bf16.msra.mxu0 0
      %501 = vmatprep.subr.bf16.mxu0 0
      %502 = vmatpush1.bf16.msra.mxu0 0
      %503 = vmatprep.subr.bf16.mxu0 0
      %504 = vmatpush1.bf16.msra.mxu0 0
      %505 = vmatprep.subr.bf16.mxu0 0
      %506 = vmatpush1.bf16.msra.mxu0 0
      %507 = vmatprep.subr.bf16.mxu0 0
      %508 = vmatpush1.bf16.msra.mxu0 0
      %509 = vmatprep.subr.bf16.mxu0 0
      %510 = vmatpush1.bf16.msra.mxu0 0
      %511 = vmatprep.subr.bf16.mxu0 0
      %512 = vmatpush1.bf16.msra.mxu0 0
      %513 = vmatprep.subr.bf16.mxu0 0
      %514 = vmatpush1.bf16.msra.mxu0 0
      %515 = vmatprep.subr.bf16.mxu0 0
      %516 = vmatpush1.bf16.msra.mxu0 0
      %517 = vmatprep.subr.bf16.mxu0 0
      %518 = vmatpush1.bf16.msra.mxu0 0
      %519 = vmatprep.subr.bf16.mxu0 0
      %520 = vmatpush1.bf16.msra.mxu0 0
      %521 = vmatprep.subr.bf16.mxu0 0
      %522 = vmatpush1.bf16.msra.mxu0 0
      %523 = vmatprep.subr.bf16.mxu0 0
      %524 = vmatpush1.bf16.msra.mxu0 0
      %525 = vmatprep.subr.bf16.mxu0 0
      %526 = vmatpush1.bf16.msra.mxu0 0
      %527 = vmatprep.mubr.bf16.mxu0 0
      %528 = vmatmul.mubr.bf16.gmra.mrb[0].mxu0 %v444
      %v529 = vpop.f32.mrb[0].mxu0
      %v530 = vadd.f32 0.0, %v529
      %v531 = vpop.f32.mrb[0].mxu0
      %v532 = vpop.f32.mrb[0].mxu0
      %v533 = vadd.f32 0.0, %v532
      %v534 = vpop.f32.mrb[0].mxu0
      %535 = vmatprep.mubr.bf16.mxu0 0
      %536 = vmatmul.mubr.bf16.gmra.mrb[0].mxu0 %v447
      %v537 = vpop.f32.mrb[0].mxu0
      %v538 = vadd.f32 0.0, %v537
      %v539 = vpop.f32.mrb[0].mxu0
      %v540 = vpop.f32.mrb[0].mxu0
      %v541 = vadd.f32 0.0, %v540
      %v542 = vpop.f32.mrb[0].mxu0
      %543 = vmatprep.mubr.bf16.mxu0 0
      %544 = vmatmul.mubr.bf16.gmra.mrb[0].mxu0 %v450
      %v545 = vpop.f32.mrb[0].mxu0
      %v546 = vadd.f32 0.0, %v545
      %v547 = vpop.f32.mrb[0].mxu0
      %v548 = vpop.f32.mrb[0].mxu0
      %v549 = vadd.f32 0.0, %v548
      %v550 = vpop.f32.mrb[0].mxu0
      %551 = vmatprep.mubr.bf16.mxu0 0
      %552 = vmatmul.mubr.bf16.gmra.mrb[0].mxu0 %v453
      %v553 = vpop.f32.mrb[0].mxu0
      %v554 = vadd.f32 0.0, %v553
      %v555 = vpop.f32.mrb[0].mxu0
      %v556 = vpop.f32.mrb[0].mxu0
      %v557 = vadd.f32 0.0, %v556
      %v558 = vpop.f32.mrb[0].mxu0
      %559 = vmatprep.mubr.bf16.mxu0 0
      %560 = vmatmul.mubr.bf16.gmra.mrb[0].mxu0 %v456
      %v561 = vpop.f32.mrb[0].mxu0
      %v562 = vadd.f32 0.0, %v561
      %v563 = vpop.f32.mrb[0].mxu0
      %v564 = vpop.f32.mrb[0].mxu0
      %v565 = vadd.f32 0.0, %v564
      %v566 = vpop.f32.mrb[0].mxu0
      %567 = vmatprep.mubr.bf16.mxu0 0
      %568 = vmatmul.mubr.bf16.gmra.mrb[0].mxu0 %v459
      %v569 = vpop.f32.mrb[0].mxu0
      %v570 = vadd.f32 0.0, %v569
      %v571 = vpop.f32.mrb[0].mxu0
      %v572 = vpop.f32.mrb[0].mxu0
      %v573 = vadd.f32 0.0, %v572
      %v574 = vpop.f32.mrb[0].mxu0
      %575 = vmatprep.mubr.bf16.mxu0 0
      %576 = vmatmul.mubr.bf16.gmra.mrb[0].mxu0 %v462
      %v577 = vpop.f32.mrb[0].mxu0
      %v578 = vadd.f32 0.0, %v577
      %v579 = vpop.f32.mrb[0].mxu0
      %v580 = vpop.f32.mrb[0].mxu0
      %v581 = vadd.f32 0.0, %v580
      %v582 = vpop.f32.mrb[0].mxu0
      %583 = vmatprep.mubr.bf16.mxu0 0
      %584 = vmatmul.mubr.bf16.gmra.mrb[0].mxu0 %v465
      %v585 = vpop.f32.mrb[0].mxu0
      %v586 = vadd.f32 0.0, %v585
      %v587 = vpop.f32.mrb[0].mxu0
      %v588 = vpop.f32.mrb[0].mxu0
      %v589 = vadd.f32 0.0, %v588
      %v590 = vpop.f32.mrb[0].mxu0
      %591 = vmatprep.mubr.bf16.mxu0 0
      %592 = vmatmul.mubr.bf16.gmra.mrb[0].mxu0 %v468
      %v593 = vpop.f32.mrb[0].mxu0
      %v594 = vadd.f32 0.0, %v593
      %v595 = vpop.f32.mrb[0].mxu0
      %v596 = vpop.f32.mrb[0].mxu0
      %v597 = vadd.f32 0.0, %v596
      %v598 = vpop.f32.mrb[0].mxu0
      %599 = vmatprep.mubr.bf16.mxu0 0
      %600 = vmatmul.mubr.bf16.gmra.mrb[0].mxu0 %v471
      %v601 = vpop.f32.mrb[0].mxu0
      %v602 = vadd.f32 0.0, %v601
      %v603 = vpop.f32.mrb[0].mxu0
      %v604 = vpop.f32.mrb[0].mxu0
      %v605 = vadd.f32 0.0, %v604
      %v606 = vpop.f32.mrb[0].mxu0
      %607 = vmatprep.mubr.bf16.mxu0 0
      %608 = vmatmul.mubr.bf16.gmra.mrb[0].mxu0 %v474
      %v609 = vpop.f32.mrb[0].mxu0
      %v610 = vadd.f32 0.0, %v609
      %v611 = vpop.f32.mrb[0].mxu0
      %v612 = vpop.f32.mrb[0].mxu0
      %v613 = vadd.f32 0.0, %v612
      %v614 = vpop.f32.mrb[0].mxu0
      %615 = vmatprep.mubr.bf16.mxu0 0
      %616 = vmatmul.mubr.bf16.gmra.mrb[0].mxu0 %v477
      %v617 = vpop.f32.mrb[0].mxu0
      %v618 = vadd.f32 0.0, %v617
      %v619 = vpop.f32.mrb[0].mxu0
      %v620 = vpop.f32.mrb[0].mxu0
      %v621 = vadd.f32 0.0, %v620
      %v622 = vpop.f32.mrb[0].mxu0
      %623 = vmatprep.mubr.bf16.mxu0 0
      %624 = vmatmul.mubr.bf16.gmra.mrb[0].mxu0 %v480
      %v625 = vpop.f32.mrb[0].mxu0
      %v626 = vadd.f32 0.0, %v625
      %v627 = vpop.f32.mrb[0].mxu0
      %v628 = vpop.f32.mrb[0].mxu0
      %v629 = vadd.f32 0.0, %v628
      %v630 = vpop.f32.mrb[0].mxu0
      %631 = vmatprep.mubr.bf16.mxu0 0
      %632 = vmatmul.mubr.bf16.gmra.mrb[0].mxu0 %v483
      %v633 = vpop.f32.mrb[0].mxu0
      %v634 = vadd.f32 0.0, %v633
      %v635 = vpop.f32.mrb[0].mxu0
      %v636 = vpop.f32.mrb[0].mxu0
      %v637 = vadd.f32 0.0, %v636
      %v638 = vpop.f32.mrb[0].mxu0
      %639 = vmatprep.mubr.bf16.mxu0 0
      %640 = vmatmul.mubr.bf16.gmra.mrb[0].mxu0 %v486
      %v641 = vpop.f32.mrb[0].mxu0
      %v642 = vadd.f32 0.0, %v641
      %v643 = vpop.f32.mrb[0].mxu0
      %v644 = vpop.f32.mrb[0].mxu0
      %v645 = vadd.f32 0.0, %v644
      %v646 = vpop.f32.mrb[0].mxu0
      %647 = vmatprep.mubr.bf16.mxu0 0
      %648 = vmatmul.mubr.bf16.gmra.mrb[0].mxu0 %v489
      %v649 = vpop.f32.mrb[0].mxu0
      %v650 = vadd.f32 0.0, %v649
      %v651 = vpop.f32.mrb[0].mxu0
      %v652 = vpop.f32.mrb[0].mxu0
      %v653 = vadd.f32 0.0, %v652
      %v654 = vpop.f32.mrb[0].mxu0
      %655 = vdwg.mxu0
      %v657 = vlaneseq
      %v658 = vshrl.u32 %v657, 7
      %v659 = vsub.s32 0, %v658
      %v660 = vrot.slane %v296, %v659
      %v662 = vmul.f32 %v530, %v660
      %v663 = vmul.f32 %v533, %v660
      %v664 = vmul.f32 %v538, %v660
      %v665 = vmul.f32 %v541, %v660
      %v666 = vmul.f32 %v546, %v660
      %v667 = vmul.f32 %v549, %v660
      %v668 = vmul.f32 %v554, %v660
      %v669 = vmul.f32 %v557, %v660
      %v670 = vmul.f32 %v562, %v660
      %v671 = vmul.f32 %v565, %v660
      %v672 = vmul.f32 %v570, %v660
      %v673 = vmul.f32 %v573, %v660
      %v674 = vmul.f32 %v578, %v660
      %v675 = vmul.f32 %v581, %v660
      %v676 = vmul.f32 %v586, %v660
      %v677 = vmul.f32 %v589, %v660
      %v678 = vmul.f32 %v594, %v660
      %v679 = vmul.f32 %v597, %v660
      %v680 = vmul.f32 %v602, %v660
      %v681 = vmul.f32 %v605, %v660
      %v682 = vmul.f32 %v610, %v660
      %v683 = vmul.f32 %v613, %v660
      %v684 = vmul.f32 %v618, %v660
      %v685 = vmul.f32 %v621, %v660
      %v686 = vmul.f32 %v626, %v660
      %v687 = vmul.f32 %v629, %v660
      %v688 = vmul.f32 %v634, %v660
      %v689 = vmul.f32 %v637, %v660
      %v690 = vmul.f32 %v642, %v660
      %v691 = vmul.f32 %v645, %v660
      %v692 = vmul.f32 %v650, %v660
      %v693 = vmul.f32 %v653, %v660
      %v695 = vlaneseq
      %v696 = vshrl.u32 %v695, 7
      %v697 = vsub.s32 0, %v696
      %v698 = vrot.slane %v297, %v697
      %v700 = vadd.f32 %v662, %v698
      %v701 = vadd.f32 %v663, %v698
      %v702 = vadd.f32 %v664, %v698
      %v703 = vadd.f32 %v665, %v698
      %v704 = vadd.f32 %v666, %v698
      %v705 = vadd.f32 %v667, %v698
      %v706 = vadd.f32 %v668, %v698
      %v707 = vadd.f32 %v669, %v698
      %v708 = vadd.f32 %v670, %v698
      %v709 = vadd.f32 %v671, %v698
      %v710 = vadd.f32 %v672, %v698
      %v711 = vadd.f32 %v673, %v698
      %v712 = vadd.f32 %v674, %v698
      %v713 = vadd.f32 %v675, %v698
      %v714 = vadd.f32 %v676, %v698
      %v715 = vadd.f32 %v677, %v698
      %v716 = vadd.f32 %v678, %v698
      %v717 = vadd.f32 %v679, %v698
      %v718 = vadd.f32 %v680, %v698
      %v719 = vadd.f32 %v681, %v698
      %v720 = vadd.f32 %v682, %v698
      %v721 = vadd.f32 %v683, %v698
      %v722 = vadd.f32 %v684, %v698
      %v723 = vadd.f32 %v685, %v698
      %v724 = vadd.f32 %v686, %v698
      %v725 = vadd.f32 %v687, %v698
      %v726 = vadd.f32 %v688, %v698
      %v727 = vadd.f32 %v689, %v698
      %v728 = vadd.f32 %v690, %v698
      %v729 = vadd.f32 %v691, %v698
      %v730 = vadd.f32 %v692, %v698
      %v731 = vadd.f32 %v693, %v698
      %v732 = vmax.f32 %v700, 0.0
      %v733 = vmax.f32 %v701, 0.0
      %v734 = vmax.f32 %v702, 0.0
      %v735 = vmax.f32 %v703, 0.0
      %v736 = vmax.f32 %v704, 0.0
      %v737 = vmax.f32 %v705, 0.0
      %v738 = vmax.f32 %v706, 0.0
      %v739 = vmax.f32 %v707, 0.0
      %v740 = vmax.f32 %v708, 0.0
      %v741 = vmax.f32 %v709, 0.0
      %v742 = vmax.f32 %v710, 0.0
      %v743 = vmax.f32 %v711, 0.0
      %v744 = vmax.f32 %v712, 0.0
      %v745 = vmax.f32 %v713, 0.0
      %v746 = vmax.f32 %v714, 0.0
      %v747 = vmax.f32 %v715, 0.0
      %v748 = vmax.f32 %v716, 0.0
      %v749 = vmax.f32 %v717, 0.0
      %v750 = vmax.f32 %v718, 0.0
      %v751 = vmax.f32 %v719, 0.0
      %v752 = vmax.f32 %v720, 0.0
      %v753 = vmax.f32 %v721, 0.0
      %v754 = vmax.f32 %v722, 0.0
      %v755 = vmax.f32 %v723, 0.0
      %v756 = vmax.f32 %v724, 0.0
      %v757 = vmax.f32 %v725, 0.0
      %v758 = vmax.f32 %v726, 0.0
      %v759 = vmax.f32 %v727, 0.0
      %v760 = vmax.f32 %v728, 0.0
      %v761 = vmax.f32 %v729, 0.0
      %v762 = vmax.f32 %v730, 0.0
      %v763 = vmax.f32 %v731, 0.0
      %v764 = vpack.c.bf16 %v733, %v732
      %v765 = vpack.c.bf16 %v735, %v734
      %v766 = vpack.c.bf16 %v737, %v736
      %v767 = vpack.c.bf16 %v739, %v738
      %v768 = vpack.c.bf16 %v741, %v740
      %v769 = vpack.c.bf16 %v743, %v742
      %v770 = vpack.c.bf16 %v745, %v744
      %v771 = vpack.c.bf16 %v747, %v746
      %v772 = vpack.c.bf16 %v749, %v748
      %v773 = vpack.c.bf16 %v751, %v750
      %v774 = vpack.c.bf16 %v753, %v752
      %v775 = vpack.c.bf16 %v755, %v754
      %v776 = vpack.c.bf16 %v757, %v756
      %v777 = vpack.c.bf16 %v759, %v758
      %v778 = vpack.c.bf16 %v761, %v760
      %v779 = vpack.c.bf16 %v763, %v762
      %vm780 = vcmask 60417
      %781 = vst.msk [vmem:[#allocation2] sm:$0xe] %vm780, 0
      %vm782 = vcmask 60416
      %783 = vst.msk [vmem:[#allocation2 + $0x4] sm:$0xf] %vm782, 0
      %vm784 = vcmask 57344
      %785 = vst.msk [vmem:[#allocation2 + $0x8] sm:$0x1] %vm784, 0
      %786 = vst.msk [vmem:[#allocation2 + $0xc] sm:$0xe] %vm780, 0
      %787 = vst.msk [vmem:[#allocation2 + $0x10] sm:$0xf] %vm782, 0
      %788 = vst.msk [vmem:[#allocation2 + $0x14] sm:$0x1] %vm784, 0
      %s789 = scalar_lea.vmem [#allocation2], 216
      %790 = vst.msk [vmem:[%s789] sm:$0xe] %vm780, 0
      %791 = vst.msk [vmem:[%s789 + $0x4] sm:$0xf] %vm782, 0
      %792 = vst.msk [vmem:[%s789 + $0x8] sm:$0x1] %vm784, 0
      %793 = vst.msk [vmem:[%s789 + $0xc] sm:$0xe] %vm780, 0
      %794 = vst.msk [vmem:[%s789 + $0x10] sm:$0xf] %vm782, 0
      %795 = vst.msk [vmem:[%s789 + $0x14] sm:$0x1] %vm784, 0
      %v812 = vunpack.c.l.b16 %v764
      %v813 = vunpack.c.h.b16 %v764
      %v814 = vunpack.c.l.b16 %v765
      %v815 = vunpack.c.h.b16 %v765
      %v816 = vunpack.c.l.b16 %v766
      %v817 = vunpack.c.h.b16 %v766
      %v818 = vunpack.c.l.b16 %v767
      %v819 = vunpack.c.h.b16 %v767
      %v820 = vunpack.c.l.b16 %v768
      %v821 = vunpack.c.h.b16 %v768
      %v822 = vunpack.c.l.b16 %v769
      %v823 = vunpack.c.h.b16 %v769
      %v824 = vunpack.c.l.b16 %v770
      %v825 = vunpack.c.h.b16 %v770
      %v826 = vunpack.c.l.b16 %v771
      %v827 = vunpack.c.h.b16 %v771
      %v828 = vunpack.c.l.b16 %v772
      %v829 = vunpack.c.h.b16 %v772
      %v830 = vunpack.c.l.b16 %v773
      %v831 = vunpack.c.h.b16 %v773
      %v832 = vunpack.c.l.b16 %v774
      %v833 = vunpack.c.h.b16 %v774
      %v834 = vunpack.c.l.b16 %v775
      %v835 = vunpack.c.h.b16 %v775
      %v836 = vunpack.c.l.b16 %v776
      %v837 = vunpack.c.h.b16 %v776
      %v838 = vunpack.c.l.b16 %v777
      %v839 = vunpack.c.h.b16 %v777
      %v840 = vunpack.c.l.b16 %v778
      %v841 = vunpack.c.h.b16 %v778
      %v842 = vunpack.c.l.b16 %v779
      %v843 = vunpack.c.h.b16 %v779
      %v844 = vpack.c.b16 %v812, %v812
      %v845 = vpack.c.b16 %v813, %v813
      %v846 = vpack.c.b16 %v814, %v814
      %v847 = vpack.c.b16 %v815, %v815
      %v848 = vpack.c.b16 %v816, %v816
      %v849 = vpack.c.b16 %v817, %v817
      %v850 = vpack.c.b16 %v818, %v818
      %v851 = vpack.c.b16 %v819, %v819
      %v852 = vpack.c.b16 %v820, %v820
      %v853 = vpack.c.b16 %v821, %v821
      %v854 = vpack.c.b16 %v822, %v822
      %v855 = vpack.c.b16 %v823, %v823
      %v856 = vpack.c.b16 %v824, %v824
      %v857 = vpack.c.b16 %v825, %v825
      %v858 = vpack.c.b16 %v826, %v826
      %v859 = vpack.c.b16 %v827, %v827
      %v860 = vpack.c.b16 %v828, %v828
      %v861 = vpack.c.b16 %v829, %v829
      %v862 = vpack.c.b16 %v830, %v830
      %v863 = vpack.c.b16 %v831, %v831
      %v864 = vpack.c.b16 %v832, %v832
      %v865 = vpack.c.b16 %v833, %v833
      %v866 = vpack.c.b16 %v834, %v834
      %v867 = vpack.c.b16 %v835, %v835
      %v868 = vpack.c.b16 %v836, %v836
      %v869 = vpack.c.b16 %v837, %v837
      %v870 = vpack.c.b16 %v838, %v838
      %v871 = vpack.c.b16 %v839, %v839
      %v872 = vpack.c.b16 %v840, %v840
      %v873 = vpack.c.b16 %v841, %v841
      %v874 = vpack.c.b16 %v842, %v842
      %v875 = vpack.c.b16 %v843, %v843
      %vm876 = vcmask 1040384
      %vm877 = vcmask 1044484
      %vm878 = vmor %vm876, %vm877
      %v879 = vrot.slane %v844, 7
      %v880 = vrot.slane %v879, 4
      %v881 = vrot.slane %v845, 7
      %v882 = vsel %vm878, %v880, %v881
      %v883 = vrot.slane %v881, 4
      %v884 = vrot.slane %v846, 7
      %v885 = vrot.slane %v884, 4
      %v886 = vrot.slane %v847, 7
      %v887 = vsel %vm878, %v885, %v886
      %v888 = vrot.slane %v886, 4
      %v889 = vrot.slane %v848, 7
      %v890 = vrot.slane %v889, 4
      %v891 = vrot.slane %v849, 7
      %v892 = vsel %vm878, %v890, %v891
      %v893 = vrot.slane %v891, 4
      %v894 = vrot.slane %v850, 7
      %v895 = vrot.slane %v894, 4
      %v896 = vrot.slane %v851, 7
      %v897 = vsel %vm878, %v895, %v896
      %v898 = vrot.slane %v896, 4
      %v899 = vrot.slane %v852, 7
      %v900 = vrot.slane %v899, 4
      %v901 = vrot.slane %v853, 7
      %v902 = vsel %vm878, %v900, %v901
      %v903 = vrot.slane %v901, 4
      %v904 = vrot.slane %v854, 7
      %v905 = vrot.slane %v904, 4
      %v906 = vrot.slane %v855, 7
      %v907 = vsel %vm878, %v905, %v906
      %v908 = vrot.slane %v906, 4
      %v909 = vrot.slane %v856, 7
      %v910 = vrot.slane %v909, 4
      %v911 = vrot.slane %v857, 7
      %v912 = vsel %vm878, %v910, %v911
      %v913 = vrot.slane %v911, 4
      %v914 = vrot.slane %v858, 7
      %v915 = vrot.slane %v914, 4
      %v916 = vrot.slane %v859, 7
      %v917 = vsel %vm878, %v915, %v916
      %v918 = vrot.slane %v916, 4
      %v919 = vrot.slane %v860, 7
      %v920 = vrot.slane %v919, 4
      %v921 = vrot.slane %v861, 7
      %v922 = vsel %vm878, %v920, %v921
      %v923 = vrot.slane %v921, 4
      %v924 = vrot.slane %v862, 7
      %v925 = vrot.slane %v924, 4
      %v926 = vrot.slane %v863, 7
      %v927 = vsel %vm878, %v925, %v926
      %v928 = vrot.slane %v926, 4
      %v929 = vrot.slane %v864, 7
      %v930 = vrot.slane %v929, 4
      %v931 = vrot.slane %v865, 7
      %v932 = vsel %vm878, %v930, %v931
      %v933 = vrot.slane %v931, 4
      %v934 = vrot.slane %v866, 7
      %v935 = vrot.slane %v934, 4
      %v936 = vrot.slane %v867, 7
      %v937 = vsel %vm878, %v935, %v936
      %v938 = vrot.slane %v936, 4
      %v939 = vrot.slane %v868, 7
      %v940 = vrot.slane %v939, 4
      %v941 = vrot.slane %v869, 7
      %v942 = vsel %vm878, %v940, %v941
      %v943 = vrot.slane %v941, 4
      %v944 = vrot.slane %v870, 7
      %v945 = vrot.slane %v944, 4
      %v946 = vrot.slane %v871, 7
      %v947 = vsel %vm878, %v945, %v946
      %v948 = vrot.slane %v946, 4
      %v949 = vrot.slane %v872, 7
      %v950 = vrot.slane %v949, 4
      %v951 = vrot.slane %v873, 7
      %v952 = vsel %vm878, %v950, %v951
      %v953 = vrot.slane %v951, 4
      %v954 = vrot.slane %v874, 7
      %v955 = vrot.slane %v954, 4
      %v956 = vrot.slane %v875, 7
      %v957 = vsel %vm878, %v955, %v956
      %v958 = vrot.slane %v956, 4
      %s1007 = scalar_lea.vmem [#allocation2], 24
      %1008 = vst.msk [vmem:[%s1007] sm:$0xe] %vm780, %v879
      %1009 = vst.msk [vmem:[%s1007 + $0x4] sm:$0xf] %vm782, %v882
      %1010 = vst.msk [vmem:[%s1007 + $0x8] sm:$0x1] %vm784, %v883
      %1011 = vst.msk [vmem:[%s1007 + $0xc] sm:$0xe] %vm780, %v884
      %1012 = vst.msk [vmem:[%s1007 + $0x10] sm:$0xf] %vm782, %v887
      %1013 = vst.msk [vmem:[%s1007 + $0x14] sm:$0x1] %vm784, %v888
      %1014 = vst.msk [vmem:[%s1007 + $0x18] sm:$0xe] %vm780, %v889
      %1015 = vst.msk [vmem:[%s1007 + $0x1c] sm:$0xf] %vm782, %v892
      %1016 = vst.msk [vmem:[%s1007 + $0x20] sm:$0x1] %vm784, %v893
      %1017 = vst.msk [vmem:[%s1007 + $0x24] sm:$0xe] %vm780, %v894
      %1018 = vst.msk [vmem:[%s1007 + $0x28] sm:$0xf] %vm782, %v897
      %1019 = vst.msk [vmem:[%s1007 + $0x2c] sm:$0x1] %vm784, %v898
      %1020 = vst.msk [vmem:[%s1007 + $0x30] sm:$0xe] %vm780, %v899
      %1021 = vst.msk [vmem:[%s1007 + $0x34] sm:$0xf] %vm782, %v902
      %1022 = vst.msk [vmem:[%s1007 + $0x38] sm:$0x1] %vm784, %v903
      %1023 = vst.msk [vmem:[%s1007 + $0x3c] sm:$0xe] %vm780, %v904
      %1024 = vst.msk [vmem:[%s1007 + $0x40] sm:$0xf] %vm782, %v907
      %1025 = vst.msk [vmem:[%s1007 + $0x44] sm:$0x1] %vm784, %v908
      %1026 = vst.msk [vmem:[%s1007 + $0x48] sm:$0xe] %vm780, %v909
      %1027 = vst.msk [vmem:[%s1007 + $0x4c] sm:$0xf] %vm782, %v912
      %1028 = vst.msk [vmem:[%s1007 + $0x50] sm:$0x1] %vm784, %v913
      %1029 = vst.msk [vmem:[%s1007 + $0x54] sm:$0xe] %vm780, %v914
      %1030 = vst.msk [vmem:[%s1007 + $0x58] sm:$0xf] %vm782, %v917
      %1031 = vst.msk [vmem:[%s1007 + $0x5c] sm:$0x1] %vm784, %v918
      %1032 = vst.msk [vmem:[%s1007 + $0x60] sm:$0xe] %vm780, %v919
      %1033 = vst.msk [vmem:[%s1007 + $0x64] sm:$0xf] %vm782, %v922
      %1034 = vst.msk [vmem:[%s1007 + $0x68] sm:$0x1] %vm784, %v923
      %1035 = vst.msk [vmem:[%s1007 + $0x6c] sm:$0xe] %vm780, %v924
      %1036 = vst.msk [vmem:[%s1007 + $0x70] sm:$0xf] %vm782, %v927
      %1037 = vst.msk [vmem:[%s1007 + $0x74] sm:$0x1] %vm784, %v928
      %1038 = vst.msk [vmem:[%s1007 + $0x78] sm:$0xe] %vm780, %v929
      %1039 = vst.msk [vmem:[%s1007 + $0x7c] sm:$0xf] %vm782, %v932
      %1040 = vst.msk [vmem:[%s1007 + $0x80] sm:$0x1] %vm784, %v933
      %1041 = vst.msk [vmem:[%s1007 + $0x84] sm:$0xe] %vm780, %v934
      %1042 = vst.msk [vmem:[%s1007 + $0x88] sm:$0xf] %vm782, %v937
      %1043 = vst.msk [vmem:[%s1007 + $0x8c] sm:$0x1] %vm784, %v938
      %1044 = vst.msk [vmem:[%s1007 + $0x90] sm:$0xe] %vm780, %v939
      %1045 = vst.msk [vmem:[%s1007 + $0x94] sm:$0xf] %vm782, %v942
      %1046 = vst.msk [vmem:[%s1007 + $0x98] sm:$0x1] %vm784, %v943
      %1047 = vst.msk [vmem:[%s1007 + $0x9c] sm:$0xe] %vm780, %v944
      %1048 = vst.msk [vmem:[%s1007 + $0xa0] sm:$0xf] %vm782, %v947
      %1049 = vst.msk [vmem:[%s1007 + $0xa4] sm:$0x1] %vm784, %v948
      %1050 = vst.msk [vmem:[%s1007 + $0xa8] sm:$0xe] %vm780, %v949
      %1051 = vst.msk [vmem:[%s1007 + $0xac] sm:$0xf] %vm782, %v952
      %1052 = vst.msk [vmem:[%s1007 + $0xb0] sm:$0x1] %vm784, %v953
      %1053 = vst.msk [vmem:[%s1007 + $0xb4] sm:$0xe] %vm780, %v954
      %1054 = vst.msk [vmem:[%s1007 + $0xb8] sm:$0xf] %vm782, %v957
      %1055 = vst.msk [vmem:[%s1007 + $0xbc] sm:$0x1] %vm784, %v958
      %v1056 = vld [vmem:[#allocation2] sm:$0xf]
      %v1057 = vld [vmem:[#allocation2 + $0x4] sm:$0xf]
      %v1058 = vld [vmem:[#allocation2 + $0xc] sm:$0xf]
      %v1059 = vld [vmem:[#allocation2 + $0x10] sm:$0xf]
      %v1060 = vld [vmem:[#allocation2 + $0x18] sm:$0xf]
      %v1061 = vld [vmem:[#allocation2 + $0x1c] sm:$0xf]
      %v1062 = vld [vmem:[#allocation2 + $0x24] sm:$0xf]
      %v1063 = vld [vmem:[#allocation2 + $0x28] sm:$0xf]
      %v1064 = vld [vmem:[#allocation2 + $0x30] sm:$0xf]
      %v1065 = vld [vmem:[#allocation2 + $0x34] sm:$0xf]
      %v1066 = vld [vmem:[#allocation2 + $0x3c] sm:$0xf]
      %v1067 = vld [vmem:[#allocation2 + $0x40] sm:$0xf]
      %v1068 = vld [vmem:[#allocation2 + $0x48] sm:$0xf]
      %v1069 = vld [vmem:[#allocation2 + $0x4c] sm:$0xf]
      %v1070 = vld [vmem:[#allocation2 + $0x54] sm:$0xf]
      %v1071 = vld [vmem:[#allocation2 + $0x58] sm:$0xf]
      %v1072 = vld [vmem:[#allocation2 + $0x60] sm:$0xf]
      %v1073 = vld [vmem:[#allocation2 + $0x64] sm:$0xf]
      %v1074 = vld [vmem:[#allocation2 + $0x6c] sm:$0xf]
      %v1075 = vld [vmem:[#allocation2 + $0x70] sm:$0xf]
      %v1076 = vld [vmem:[#allocation2 + $0x78] sm:$0xf]
      %v1077 = vld [vmem:[#allocation2 + $0x7c] sm:$0xf]
      %v1078 = vld [vmem:[#allocation2 + $0x84] sm:$0xf]
      %v1079 = vld [vmem:[#allocation2 + $0x88] sm:$0xf]
      %v1080 = vld [vmem:[#allocation2 + $0x90] sm:$0xf]
      %v1081 = vld [vmem:[#allocation2 + $0x94] sm:$0xf]
      %v1082 = vld [vmem:[#allocation2 + $0x9c] sm:$0xf]
      %v1083 = vld [vmem:[#allocation2 + $0xa0] sm:$0xf]
      %v1084 = vld [vmem:[#allocation2 + $0xa8] sm:$0xf]
      %v1085 = vld [vmem:[#allocation2 + $0xac] sm:$0xf]
      %v1086 = vld [vmem:[#allocation2 + $0xb4] sm:$0xf]
      %v1087 = vld [vmem:[#allocation2 + $0xb8] sm:$0xf]
      %v1088 = vld [vmem:[#allocation2 + $0xc0] sm:$0xf]
      %v1089 = vld [vmem:[#allocation2 + $0xc4] sm:$0xf]
      %v1090 = vld [vmem:[#allocation2 + $0xcc] sm:$0xf]
      %v1091 = vld [vmem:[#allocation2 + $0xd0] sm:$0xf]
      %v1092 = vld [vmem:[#allocation2 + $0xd8] sm:$0xf]
      %v1093 = vld [vmem:[#allocation2 + $0xdc] sm:$0xf]
      %v1094 = vld [vmem:[#allocation2 + $0xe4] sm:$0xf]
      %v1095 = vld [vmem:[#allocation2 + $0xe8] sm:$0xf]
      %v1096 = vld [vmem:[%s4] sm:$0xf]
      %s1097 = scalar_lea.vmem %s4, 12
      %v1098 = vld [vmem:[%s1097] sm:$0xf]
      %v1131 = vunpack.c.l.b16 %v1060
      %v1132 = vunpack.c.l.b16 %v1061
      %v1133 = vunpack.c.l.b16 %v1062
      %v1134 = vunpack.c.l.b16 %v1063
      %v1135 = vunpack.c.l.b16 %v1064
      %v1136 = vunpack.c.l.b16 %v1065
      %v1137 = vunpack.c.l.b16 %v1066
      %v1138 = vunpack.c.l.b16 %v1067
      %v1139 = vunpack.c.l.b16 %v1068
      %v1140 = vunpack.c.l.b16 %v1069
      %v1141 = vunpack.c.l.b16 %v1070
      %v1142 = vunpack.c.l.b16 %v1071
      %v1143 = vunpack.c.l.b16 %v1072
      %v1144 = vunpack.c.l.b16 %v1073
      %v1145 = vunpack.c.l.b16 %v1074
      %v1146 = vunpack.c.l.b16 %v1075
      %v1147 = vunpack.c.l.b16 %v1076
      %v1148 = vunpack.c.l.b16 %v1077
      %v1149 = vunpack.c.l.b16 %v1078
      %v1150 = vunpack.c.l.b16 %v1079
      %v1151 = vunpack.c.l.b16 %v1080
      %v1152 = vunpack.c.l.b16 %v1081
      %v1153 = vunpack.c.l.b16 %v1082
      %v1154 = vunpack.c.l.b16 %v1083
      %v1155 = vunpack.c.l.b16 %v1084
      %v1156 = vunpack.c.l.b16 %v1085
      %v1157 = vunpack.c.l.b16 %v1086
      %v1158 = vunpack.c.l.b16 %v1087
      %v1159 = vunpack.c.l.b16 %v1088
      %v1160 = vunpack.c.l.b16 %v1089
      %v1161 = vunpack.c.l.b16 %v1090
      %v1162 = vunpack.c.l.b16 %v1091
      %v1163 = vpack.c.b16 %v1132, %v1131
      %v1164 = vpack.c.b16 %v1134, %v1133
      %v1165 = vpack.c.b16 %v1136, %v1135
      %v1166 = vpack.c.b16 %v1138, %v1137
      %v1167 = vpack.c.b16 %v1140, %v1139
      %v1168 = vpack.c.b16 %v1142, %v1141
      %v1169 = vpack.c.b16 %v1144, %v1143
      %v1170 = vpack.c.b16 %v1146, %v1145
      %v1171 = vpack.c.b16 %v1148, %v1147
      %v1172 = vpack.c.b16 %v1150, %v1149
      %v1173 = vpack.c.b16 %v1152, %v1151
      %v1174 = vpack.c.b16 %v1154, %v1153
      %v1175 = vpack.c.b16 %v1156, %v1155
      %v1176 = vpack.c.b16 %v1158, %v1157
      %v1177 = vpack.c.b16 %v1160, %v1159
      %v1178 = vpack.c.b16 %v1162, %v1161
      %vm1179 = vcmask 64512
      %v1181 = vsel %vm1179, %v1163, 0
      %v1184 = vsel %vm1179, %v1164, 0
      %v1187 = vsel %vm1179, %v1165, 0
      %v1190 = vsel %vm1179, %v1166, 0
      %v1193 = vsel %vm1179, %v1167, 0
      %v1196 = vsel %vm1179, %v1168, 0
      %v1199 = vsel %vm1179, %v1169, 0
      %v1202 = vsel %vm1179, %v1170, 0
      %v1205 = vsel %vm1179, %v1171, 0
      %v1208 = vsel %vm1179, %v1172, 0
      %v1211 = vsel %vm1179, %v1173, 0
      %v1214 = vsel %vm1179, %v1174, 0
      %v1217 = vsel %vm1179, %v1175, 0
      %v1220 = vsel %vm1179, %v1176, 0
      %v1223 = vsel %vm1179, %v1177, 0
      %v1226 = vsel %vm1179, %v1178, 0
      %vm1228 = vcmask 1043456
      %v1230 = vsel %vm1228, %v1098, 0
      %1232 = vmatprep.subr.bf16.mxu0 0
      %1233 = vmatpush1.bf16.msra.mxu0 %v1230
      %1234 = vmatprep.subr.bf16.mxu0 0
      %1235 = vmatpush1.bf16.msra.mxu0 0
      %1236 = vmatprep.subr.bf16.mxu0 0
      %1237 = vmatpush1.bf16.msra.mxu0 0
      %1238 = vmatprep.subr.bf16.mxu0 0
      %1239 = vmatpush1.bf16.msra.mxu0 0
      %1240 = vmatprep.subr.bf16.mxu0 0
      %1241 = vmatpush1.bf16.msra.mxu0 0
      %1242 = vmatprep.subr.bf16.mxu0 0
      %1243 = vmatpush1.bf16.msra.mxu0 0
      %1244 = vmatprep.subr.bf16.mxu0 0
      %1245 = vmatpush1.bf16.msra.mxu0 0
      %1246 = vmatprep.subr.bf16.mxu0 0
      %1247 = vmatpush1.bf16.msra.mxu0 0
      %1248 = vmatprep.subr.bf16.mxu0 0
      %1249 = vmatpush1.bf16.msra.mxu0 0
      %1250 = vmatprep.subr.bf16.mxu0 0
      %1251 = vmatpush1.bf16.msra.mxu0 0
      %1252 = vmatprep.subr.bf16.mxu0 0
      %1253 = vmatpush1.bf16.msra.mxu0 0
      %1254 = vmatprep.subr.bf16.mxu0 0
      %1255 = vmatpush1.bf16.msra.mxu0 0
      %1256 = vmatprep.subr.bf16.mxu0 0
      %1257 = vmatpush1.bf16.msra.mxu0 0
      %1258 = vmatprep.subr.bf16.mxu0 0
      %1259 = vmatpush1.bf16.msra.mxu0 0
      %1260 = vmatprep.subr.bf16.mxu0 0
      %1261 = vmatpush1.bf16.msra.mxu0 0
      %1262 = vmatprep.subr.bf16.mxu0 0
      %1263 = vmatpush1.bf16.msra.mxu0 0
      %1264 = vmatprep.mubr.bf16.mxu0 0
      %1265 = vmatmul.mubr.bf16.gmra.mrb[0].mxu0 %v1181
      %v1266 = vpop.f32.mrb[0].mxu0
      %v1267 = vadd.f32 0.0, %v1266
      %v1268 = vpop.f32.mrb[0].mxu0
      %v1269 = vpop.f32.mrb[0].mxu0
      %v1270 = vadd.f32 0.0, %v1269
      %v1271 = vpop.f32.mrb[0].mxu0
      %1272 = vmatprep.mubr.bf16.mxu0 0
      %1273 = vmatmul.mubr.bf16.gmra.mrb[0].mxu0 %v1184
      %v1274 = vpop.f32.mrb[0].mxu0
      %v1275 = vadd.f32 0.0, %v1274
      %v1276 = vpop.f32.mrb[0].mxu0
      %v1277 = vpop.f32.mrb[0].mxu0
      %v1278 = vadd.f32 0.0, %v1277
      %v1279 = vpop.f32.mrb[0].mxu0
      %1280 = vmatprep.mubr.bf16.mxu0 0
      %1281 = vmatmul.mubr.bf16.gmra.mrb[0].mxu0 %v1187
      %v1282 = vpop.f32.mrb[0].mxu0
      %v1283 = vadd.f32 0.0, %v1282
      %v1284 = vpop.f32.mrb[0].mxu0
      %v1285 = vpop.f32.mrb[0].mxu0
      %v1286 = vadd.f32 0.0, %v1285
      %v1287 = vpop.f32.mrb[0].mxu0
      %1288 = vmatprep.mubr.bf16.mxu0 0
      %1289 = vmatmul.mubr.bf16.gmra.mrb[0].mxu0 %v1190
      %v1290 = vpop.f32.mrb[0].mxu0
      %v1291 = vadd.f32 0.0, %v1290
      %v1292 = vpop.f32.mrb[0].mxu0
      %v1293 = vpop.f32.mrb[0].mxu0
      %v1294 = vadd.f32 0.0, %v1293
      %v1295 = vpop.f32.mrb[0].mxu0
      %1296 = vmatprep.mubr.bf16.mxu0 0
      %1297 = vmatmul.mubr.bf16.gmra.mrb[0].mxu0 %v1193
      %v1298 = vpop.f32.mrb[0].mxu0
      %v1299 = vadd.f32 0.0, %v1298
      %v1300 = vpop.f32.mrb[0].mxu0
      %v1301 = vpop.f32.mrb[0].mxu0
      %v1302 = vadd.f32 0.0, %v1301
      %v1303 = vpop.f32.mrb[0].mxu0
      %1304 = vmatprep.mubr.bf16.mxu0 0
      %1305 = vmatmul.mubr.bf16.gmra.mrb[0].mxu0 %v1196
      %v1306 = vpop.f32.mrb[0].mxu0
      %v1307 = vadd.f32 0.0, %v1306
      %v1308 = vpop.f32.mrb[0].mxu0
      %v1309 = vpop.f32.mrb[0].mxu0
      %v1310 = vadd.f32 0.0, %v1309
      %v1311 = vpop.f32.mrb[0].mxu0
      %1312 = vmatprep.mubr.bf16.mxu0 0
      %1313 = vmatmul.mubr.bf16.gmra.mrb[0].mxu0 %v1199
      %v1314 = vpop.f32.mrb[0].mxu0
      %v1315 = vadd.f32 0.0, %v1314
      %v1316 = vpop.f32.mrb[0].mxu0
      %v1317 = vpop.f32.mrb[0].mxu0
      %v1318 = vadd.f32 0.0, %v1317
      %v1319 = vpop.f32.mrb[0].mxu0
      %1320 = vmatprep.mubr.bf16.mxu0 0
      %1321 = vmatmul.mubr.bf16.gmra.mrb[0].mxu0 %v1202
      %v1322 = vpop.f32.mrb[0].mxu0
      %v1323 = vadd.f32 0.0, %v1322
      %v1324 = vpop.f32.mrb[0].mxu0
      %v1325 = vpop.f32.mrb[0].mxu0
      %v1326 = vadd.f32 0.0, %v1325
      %v1327 = vpop.f32.mrb[0].mxu0
      %1328 = vmatprep.mubr.bf16.mxu0 0
      %1329 = vmatmul.mubr.bf16.gmra.mrb[0].mxu0 %v1205
      %v1330 = vpop.f32.mrb[0].mxu0
      %v1331 = vadd.f32 0.0, %v1330
      %v1332 = vpop.f32.mrb[0].mxu0
      %v1333 = vpop.f32.mrb[0].mxu0
      %v1334 = vadd.f32 0.0, %v1333
      %v1335 = vpop.f32.mrb[0].mxu0
      %1336 = vmatprep.mubr.bf16.mxu0 0
      %1337 = vmatmul.mubr.bf16.gmra.mrb[0].mxu0 %v1208
      %v1338 = vpop.f32.mrb[0].mxu0
      %v1339 = vadd.f32 0.0, %v1338
      %v1340 = vpop.f32.mrb[0].mxu0
      %v1341 = vpop.f32.mrb[0].mxu0
      %v1342 = vadd.f32 0.0, %v1341
      %v1343 = vpop.f32.mrb[0].mxu0
      %1344 = vmatprep.mubr.bf16.mxu0 0
      %1345 = vmatmul.mubr.bf16.gmra.mrb[0].mxu0 %v1211
      %v1346 = vpop.f32.mrb[0].mxu0
      %v1347 = vadd.f32 0.0, %v1346
      %v1348 = vpop.f32.mrb[0].mxu0
      %v1349 = vpop.f32.mrb[0].mxu0
      %v1350 = vadd.f32 0.0, %v1349
      %v1351 = vpop.f32.mrb[0].mxu0
      %1352 = vmatprep.mubr.bf16.mxu0 0
      %1353 = vmatmul.mubr.bf16.gmra.mrb[0].mxu0 %v1214
      %v1354 = vpop.f32.mrb[0].mxu0
      %v1355 = vadd.f32 0.0, %v1354
      %v1356 = vpop.f32.mrb[0].mxu0
      %v1357 = vpop.f32.mrb[0].mxu0
      %v1358 = vadd.f32 0.0, %v1357
      %v1359 = vpop.f32.mrb[0].mxu0
      %1360 = vmatprep.mubr.bf16.mxu0 0
      %1361 = vmatmul.mubr.bf16.gmra.mrb[0].mxu0 %v1217
      %v1362 = vpop.f32.mrb[0].mxu0
      %v1363 = vadd.f32 0.0, %v1362
      %v1364 = vpop.f32.mrb[0].mxu0
      %v1365 = vpop.f32.mrb[0].mxu0
      %v1366 = vadd.f32 0.0, %v1365
      %v1367 = vpop.f32.mrb[0].mxu0
      %1368 = vmatprep.mubr.bf16.mxu0 0
      %1369 = vmatmul.mubr.bf16.gmra.mrb[0].mxu0 %v1220
      %v1370 = vpop.f32.mrb[0].mxu0
      %v1371 = vadd.f32 0.0, %v1370
      %v1372 = vpop.f32.mrb[0].mxu0
      %v1373 = vpop.f32.mrb[0].mxu0
      %v1374 = vadd.f32 0.0, %v1373
      %v1375 = vpop.f32.mrb[0].mxu0
      %1376 = vmatprep.mubr.bf16.mxu0 0
      %1377 = vmatmul.mubr.bf16.gmra.mrb[0].mxu0 %v1223
      %v1378 = vpop.f32.mrb[0].mxu0
      %v1379 = vadd.f32 0.0, %v1378
      %v1380 = vpop.f32.mrb[0].mxu0
      %v1381 = vpop.f32.mrb[0].mxu0
      %v1382 = vadd.f32 0.0, %v1381
      %v1383 = vpop.f32.mrb[0].mxu0
      %1384 = vmatprep.mubr.bf16.mxu0 0
      %1385 = vmatmul.mubr.bf16.gmra.mrb[0].mxu0 %v1226
      %v1386 = vpop.f32.mrb[0].mxu0
      %v1387 = vadd.f32 0.0, %v1386
      %v1388 = vpop.f32.mrb[0].mxu0
      %v1389 = vpop.f32.mrb[0].mxu0
      %v1390 = vadd.f32 0.0, %v1389
      %v1391 = vpop.f32.mrb[0].mxu0
      %1392 = vdwg.mxu0
      %v1397 = vunpack.c.l.b16 %v1056
      %v1398 = vunpack.c.l.b16 %v1057
      %v1399 = vunpack.c.l.b16 %v1058
      %v1400 = vunpack.c.l.b16 %v1059
      %v1401 = vpack.c.b16 %v1398, %v1397
      %v1402 = vpack.c.b16 %v1400, %v1399
      %v1404 = vsel %vm1179, %v1401, 0
      %v1407 = vsel %vm1179, %v1402, 0
      %v1410 = vsel %vm1228, %v1096, 0
      %1412 = vmatprep.subr.bf16.mxu0 0
      %1413 = vmatpush1.bf16.msra.mxu0 %v1410
      %1414 = vmatprep.subr.bf16.mxu0 0
      %1415 = vmatpush1.bf16.msra.mxu0 0
      %1416 = vmatprep.subr.bf16.mxu0 0
      %1417 = vmatpush1.bf16.msra.mxu0 0
      %1418 = vmatprep.subr.bf16.mxu0 0
      %1419 = vmatpush1.bf16.msra.mxu0 0
      %1420 = vmatprep.subr.bf16.mxu0 0
      %1421 = vmatpush1.bf16.msra.mxu0 0
      %1422 = vmatprep.subr.bf16.mxu0 0
      %1423 = vmatpush1.bf16.msra.mxu0 0
      %1424 = vmatprep.subr.bf16.mxu0 0
      %1425 = vmatpush1.bf16.msra.mxu0 0
      %1426 = vmatprep.subr.bf16.mxu0 0
      %1427 = vmatpush1.bf16.msra.mxu0 0
      %1428 = vmatprep.subr.bf16.mxu0 0
      %1429 = vmatpush1.bf16.msra.mxu0 0
      %1430 = vmatprep.subr.bf16.mxu0 0
      %1431 = vmatpush1.bf16.msra.mxu0 0
      %1432 = vmatprep.subr.bf16.mxu0 0
      %1433 = vmatpush1.bf16.msra.mxu0 0
      %1434 = vmatprep.subr.bf16.mxu0 0
      %1435 = vmatpush1.bf16.msra.mxu0 0
      %1436 = vmatprep.subr.bf16.mxu0 0
      %1437 = vmatpush1.bf16.msra.mxu0 0
      %1438 = vmatprep.subr.bf16.mxu0 0
      %1439 = vmatpush1.bf16.msra.mxu0 0
      %1440 = vmatprep.subr.bf16.mxu0 0
      %1441 = vmatpush1.bf16.msra.mxu0 0
      %1442 = vmatprep.subr.bf16.mxu0 0
      %1443 = vmatpush1.bf16.msra.mxu0 0
      %1444 = vmatprep.mubr.bf16.mxu0 0
      %1445 = vmatmul.mubr.bf16.gmra.mrb[0].mxu0 %v1404
      %v1446 = vpop.f32.mrb[0].mxu0
      %v1447 = vadd.f32 %v1267, %v1446
      %v1448 = vpop.f32.mrb[0].mxu0
      %v1449 = vpop.f32.mrb[0].mxu0
      %v1450 = vadd.f32 %v1270, %v1449
      %v1451 = vpop.f32.mrb[0].mxu0
      %1452 = vmatprep.mubr.bf16.mxu0 0
      %1453 = vmatmul.mubr.bf16.gmra.mrb[0].mxu0 %v1407
      %v1454 = vpop.f32.mrb[0].mxu0
      %v1455 = vadd.f32 %v1275, %v1454
      %v1456 = vpop.f32.mrb[0].mxu0
      %v1457 = vpop.f32.mrb[0].mxu0
      %v1458 = vadd.f32 %v1278, %v1457
      %v1459 = vpop.f32.mrb[0].mxu0
      %1460 = vmatprep.mubr.bf16.mxu0 0
      %1461 = vmatmul.mubr.bf16.gmra.mrb[0].mxu0 %v1181
      %v1462 = vpop.f32.mrb[0].mxu0
      %v1463 = vadd.f32 %v1283, %v1462
      %v1464 = vpop.f32.mrb[0].mxu0
      %v1465 = vpop.f32.mrb[0].mxu0
      %v1466 = vadd.f32 %v1286, %v1465
      %v1467 = vpop.f32.mrb[0].mxu0
      %1468 = vmatprep.mubr.bf16.mxu0 0
      %1469 = vmatmul.mubr.bf16.gmra.mrb[0].mxu0 %v1184
      %v1470 = vpop.f32.mrb[0].mxu0
      %v1471 = vadd.f32 %v1291, %v1470
      %v1472 = vpop.f32.mrb[0].mxu0
      %v1473 = vpop.f32.mrb[0].mxu0
      %v1474 = vadd.f32 %v1294, %v1473
      %v1475 = vpop.f32.mrb[0].mxu0
      %1476 = vmatprep.mubr.bf16.mxu0 0
      %1477 = vmatmul.mubr.bf16.gmra.mrb[0].mxu0 %v1187
      %v1478 = vpop.f32.mrb[0].mxu0
      %v1479 = vadd.f32 %v1299, %v1478
      %v1480 = vpop.f32.mrb[0].mxu0
      %v1481 = vpop.f32.mrb[0].mxu0
      %v1482 = vadd.f32 %v1302, %v1481
      %v1483 = vpop.f32.mrb[0].mxu0
      %1484 = vmatprep.mubr.bf16.mxu0 0
      %1485 = vmatmul.mubr.bf16.gmra.mrb[0].mxu0 %v1190
      %v1486 = vpop.f32.mrb[0].mxu0
      %v1487 = vadd.f32 %v1307, %v1486
      %v1488 = vpop.f32.mrb[0].mxu0
      %v1489 = vpop.f32.mrb[0].mxu0
      %v1490 = vadd.f32 %v1310, %v1489
      %v1491 = vpop.f32.mrb[0].mxu0
      %1492 = vmatprep.mubr.bf16.mxu0 0
      %1493 = vmatmul.mubr.bf16.gmra.mrb[0].mxu0 %v1193
      %v1494 = vpop.f32.mrb[0].mxu0
      %v1495 = vadd.f32 %v1315, %v1494
      %v1496 = vpop.f32.mrb[0].mxu0
      %v1497 = vpop.f32.mrb[0].mxu0
      %v1498 = vadd.f32 %v1318, %v1497
      %v1499 = vpop.f32.mrb[0].mxu0
      %1500 = vmatprep.mubr.bf16.mxu0 0
      %1501 = vmatmul.mubr.bf16.gmra.mrb[0].mxu0 %v1196
      %v1502 = vpop.f32.mrb[0].mxu0
      %v1503 = vadd.f32 %v1323, %v1502
      %v1504 = vpop.f32.mrb[0].mxu0
      %v1505 = vpop.f32.mrb[0].mxu0
      %v1506 = vadd.f32 %v1326, %v1505
      %v1507 = vpop.f32.mrb[0].mxu0
      %1508 = vmatprep.mubr.bf16.mxu0 0
      %1509 = vmatmul.mubr.bf16.gmra.mrb[0].mxu0 %v1199
      %v1510 = vpop.f32.mrb[0].mxu0
      %v1511 = vadd.f32 %v1331, %v1510
      %v1512 = vpop.f32.mrb[0].mxu0
      %v1513 = vpop.f32.mrb[0].mxu0
      %v1514 = vadd.f32 %v1334, %v1513
      %v1515 = vpop.f32.mrb[0].mxu0
      %1516 = vmatprep.mubr.bf16.mxu0 0
      %1517 = vmatmul.mubr.bf16.gmra.mrb[0].mxu0 %v1202
      %v1518 = vpop.f32.mrb[0].mxu0
      %v1519 = vadd.f32 %v1339, %v1518
      %v1520 = vpop.f32.mrb[0].mxu0
      %v1521 = vpop.f32.mrb[0].mxu0
      %v1522 = vadd.f32 %v1342, %v1521
      %v1523 = vpop.f32.mrb[0].mxu0
      %1524 = vmatprep.mubr.bf16.mxu0 0
      %1525 = vmatmul.mubr.bf16.gmra.mrb[0].mxu0 %v1205
      %v1526 = vpop.f32.mrb[0].mxu0
      %v1527 = vadd.f32 %v1347, %v1526
      %v1528 = vpop.f32.mrb[0].mxu0
      %v1529 = vpop.f32.mrb[0].mxu0
      %v1530 = vadd.f32 %v1350, %v1529
      %v1531 = vpop.f32.mrb[0].mxu0
      %1532 = vmatprep.mubr.bf16.mxu0 0
      %1533 = vmatmul.mubr.bf16.gmra.mrb[0].mxu0 %v1208
      %v1534 = vpop.f32.mrb[0].mxu0
      %v1535 = vadd.f32 %v1355, %v1534
      %v1536 = vpop.f32.mrb[0].mxu0
      %v1537 = vpop.f32.mrb[0].mxu0
      %v1538 = vadd.f32 %v1358, %v1537
      %v1539 = vpop.f32.mrb[0].mxu0
      %1540 = vmatprep.mubr.bf16.mxu0 0
      %1541 = vmatmul.mubr.bf16.gmra.mrb[0].mxu0 %v1211
      %v1542 = vpop.f32.mrb[0].mxu0
      %v1543 = vadd.f32 %v1363, %v1542
      %v1544 = vpop.f32.mrb[0].mxu0
      %v1545 = vpop.f32.mrb[0].mxu0
      %v1546 = vadd.f32 %v1366, %v1545
      %v1547 = vpop.f32.mrb[0].mxu0
      %1548 = vmatprep.mubr.bf16.mxu0 0
      %1549 = vmatmul.mubr.bf16.gmra.mrb[0].mxu0 %v1214
      %v1550 = vpop.f32.mrb[0].mxu0
      %v1551 = vadd.f32 %v1371, %v1550
      %v1552 = vpop.f32.mrb[0].mxu0
      %v1553 = vpop.f32.mrb[0].mxu0
      %v1554 = vadd.f32 %v1374, %v1553
      %v1555 = vpop.f32.mrb[0].mxu0
      %1556 = vmatprep.mubr.bf16.mxu0 0
      %1557 = vmatmul.mubr.bf16.gmra.mrb[0].mxu0 %v1217
      %v1558 = vpop.f32.mrb[0].mxu0
      %v1559 = vadd.f32 %v1379, %v1558
      %v1560 = vpop.f32.mrb[0].mxu0
      %v1561 = vpop.f32.mrb[0].mxu0
      %v1562 = vadd.f32 %v1382, %v1561
      %v1563 = vpop.f32.mrb[0].mxu0
      %1564 = vmatprep.mubr.bf16.mxu0 0
      %1565 = vmatmul.mubr.bf16.gmra.mrb[0].mxu0 %v1220
      %v1566 = vpop.f32.mrb[0].mxu0
      %v1567 = vadd.f32 %v1387, %v1566
      %v1568 = vpop.f32.mrb[0].mxu0
      %v1569 = vpop.f32.mrb[0].mxu0
      %v1570 = vadd.f32 %v1390, %v1569
      %v1571 = vpop.f32.mrb[0].mxu0
      %1572 = vdwg.mxu0
      %s1573 = scalar_lea.vmem %s4, 24
      %v1574 = vld [vmem:[%s1573] sm:$0xf]
      %v1579 = vunpack.c.l.b16 %v1092
      %v1580 = vunpack.c.l.b16 %v1093
      %v1581 = vunpack.c.l.b16 %v1094
      %v1582 = vunpack.c.l.b16 %v1095
      %v1583 = vpack.c.b16 %v1580, %v1579
      %v1584 = vpack.c.b16 %v1582, %v1581
      %v1586 = vsel %vm1179, %v1583, 0
      %v1589 = vsel %vm1179, %v1584, 0
      %v1592 = vsel %vm1228, %v1574, 0
      %1594 = vmatprep.subr.bf16.mxu0 0
      %1595 = vmatpush1.bf16.msra.mxu0 %v1592
      %1596 = vmatprep.subr.bf16.mxu0 0
      %1597 = vmatpush1.bf16.msra.mxu0 0
      %1598 = vmatprep.subr.bf16.mxu0 0
      %1599 = vmatpush1.bf16.msra.mxu0 0
      %1600 = vmatprep.subr.bf16.mxu0 0
      %1601 = vmatpush1.bf16.msra.mxu0 0
      %1602 = vmatprep.subr.bf16.mxu0 0
      %1603 = vmatpush1.bf16.msra.mxu0 0
      %1604 = vmatprep.subr.bf16.mxu0 0
      %1605 = vmatpush1.bf16.msra.mxu0 0
      %1606 = vmatprep.subr.bf16.mxu0 0
      %1607 = vmatpush1.bf16.msra.mxu0 0
      %1608 = vmatprep.subr.bf16.mxu0 0
      %1609 = vmatpush1.bf16.msra.mxu0 0
      %1610 = vmatprep.subr.bf16.mxu0 0
      %1611 = vmatpush1.bf16.msra.mxu0 0
      %1612 = vmatprep.subr.bf16.mxu0 0
      %1613 = vmatpush1.bf16.msra.mxu0 0
      %1614 = vmatprep.subr.bf16.mxu0 0
      %1615 = vmatpush1.bf16.msra.mxu0 0
      %1616 = vmatprep.subr.bf16.mxu0 0
      %1617 = vmatpush1.bf16.msra.mxu0 0
      %1618 = vmatprep.subr.bf16.mxu0 0
      %1619 = vmatpush1.bf16.msra.mxu0 0
      %1620 = vmatprep.subr.bf16.mxu0 0
      %1621 = vmatpush1.bf16.msra.mxu0 0
      %1622 = vmatprep.subr.bf16.mxu0 0
      %1623 = vmatpush1.bf16.msra.mxu0 0
      %1624 = vmatprep.subr.bf16.mxu0 0
      %1625 = vmatpush1.bf16.msra.mxu0 0
      %1626 = vmatprep.mubr.bf16.mxu0 0
      %1627 = vmatmul.mubr.bf16.gmra.mrb[0].mxu0 %v1187
      %v1628 = vpop.f32.mrb[0].mxu0
      %v1629 = vadd.f32 0.0, %v1628
      %v1630 = vpop.f32.mrb[0].mxu0
      %v1631 = vpop.f32.mrb[0].mxu0
      %v1632 = vadd.f32 0.0, %v1631
      %v1633 = vpop.f32.mrb[0].mxu0
      %1634 = vmatprep.mubr.bf16.mxu0 0
      %1635 = vmatmul.mubr.bf16.gmra.mrb[0].mxu0 %v1190
      %v1636 = vpop.f32.mrb[0].mxu0
      %v1637 = vadd.f32 0.0, %v1636
      %v1638 = vpop.f32.mrb[0].mxu0
      %v1639 = vpop.f32.mrb[0].mxu0
      %v1640 = vadd.f32 0.0, %v1639
      %v1641 = vpop.f32.mrb[0].mxu0
      %1642 = vmatprep.mubr.bf16.mxu0 0
      %1643 = vmatmul.mubr.bf16.gmra.mrb[0].mxu0 %v1193
      %v1644 = vpop.f32.mrb[0].mxu0
      %v1645 = vadd.f32 0.0, %v1644
      %v1646 = vpop.f32.mrb[0].mxu0
      %v1647 = vpop.f32.mrb[0].mxu0
      %v1648 = vadd.f32 0.0, %v1647
      %v1649 = vpop.f32.mrb[0].mxu0
      %1650 = vmatprep.mubr.bf16.mxu0 0
      %1651 = vmatmul.mubr.bf16.gmra.mrb[0].mxu0 %v1196
      %v1652 = vpop.f32.mrb[0].mxu0
      %v1653 = vadd.f32 0.0, %v1652
      %v1654 = vpop.f32.mrb[0].mxu0
      %v1655 = vpop.f32.mrb[0].mxu0
      %v1656 = vadd.f32 0.0, %v1655
      %v1657 = vpop.f32.mrb[0].mxu0
      %1658 = vmatprep.mubr.bf16.mxu0 0
      %1659 = vmatmul.mubr.bf16.gmra.mrb[0].mxu0 %v1199
      %v1660 = vpop.f32.mrb[0].mxu0
      %v1661 = vadd.f32 0.0, %v1660
      %v1662 = vpop.f32.mrb[0].mxu0
      %v1663 = vpop.f32.mrb[0].mxu0
      %v1664 = vadd.f32 0.0, %v1663
      %v1665 = vpop.f32.mrb[0].mxu0
      %1666 = vmatprep.mubr.bf16.mxu0 0
      %1667 = vmatmul.mubr.bf16.gmra.mrb[0].mxu0 %v1202
      %v1668 = vpop.f32.mrb[0].mxu0
      %v1669 = vadd.f32 0.0, %v1668
      %v1670 = vpop.f32.mrb[0].mxu0
      %v1671 = vpop.f32.mrb[0].mxu0
      %v1672 = vadd.f32 0.0, %v1671
      %v1673 = vpop.f32.mrb[0].mxu0
      %1674 = vmatprep.mubr.bf16.mxu0 0
      %1675 = vmatmul.mubr.bf16.gmra.mrb[0].mxu0 %v1205
      %v1676 = vpop.f32.mrb[0].mxu0
      %v1677 = vadd.f32 0.0, %v1676
      %v1678 = vpop.f32.mrb[0].mxu0
      %v1679 = vpop.f32.mrb[0].mxu0
      %v1680 = vadd.f32 0.0, %v1679
      %v1681 = vpop.f32.mrb[0].mxu0
      %1682 = vmatprep.mubr.bf16.mxu0 0
      %1683 = vmatmul.mubr.bf16.gmra.mrb[0].mxu0 %v1208
      %v1684 = vpop.f32.mrb[0].mxu0
      %v1685 = vadd.f32 0.0, %v1684
      %v1686 = vpop.f32.mrb[0].mxu0
      %v1687 = vpop.f32.mrb[0].mxu0
      %v1688 = vadd.f32 0.0, %v1687
      %v1689 = vpop.f32.mrb[0].mxu0
      %1690 = vmatprep.mubr.bf16.mxu0 0
      %1691 = vmatmul.mubr.bf16.gmra.mrb[0].mxu0 %v1211
      %v1692 = vpop.f32.mrb[0].mxu0
      %v1693 = vadd.f32 0.0, %v1692
      %v1694 = vpop.f32.mrb[0].mxu0
      %v1695 = vpop.f32.mrb[0].mxu0
      %v1696 = vadd.f32 0.0, %v1695
      %v1697 = vpop.f32.mrb[0].mxu0
      %1698 = vmatprep.mubr.bf16.mxu0 0
      %1699 = vmatmul.mubr.bf16.gmra.mrb[0].mxu0 %v1214
      %v1700 = vpop.f32.mrb[0].mxu0
      %v1701 = vadd.f32 0.0, %v1700
      %v1702 = vpop.f32.mrb[0].mxu0
      %v1703 = vpop.f32.mrb[0].mxu0
      %v1704 = vadd.f32 0.0, %v1703
      %v1705 = vpop.f32.mrb[0].mxu0
      %1706 = vmatprep.mubr.bf16.mxu0 0
      %1707 = vmatmul.mubr.bf16.gmra.mrb[0].mxu0 %v1217
      %v1708 = vpop.f32.mrb[0].mxu0
      %v1709 = vadd.f32 0.0, %v1708
      %v1710 = vpop.f32.mrb[0].mxu0
      %v1711 = vpop.f32.mrb[0].mxu0
      %v1712 = vadd.f32 0.0, %v1711
      %v1713 = vpop.f32.mrb[0].mxu0
      %1714 = vmatprep.mubr.bf16.mxu0 0
      %1715 = vmatmul.mubr.bf16.gmra.mrb[0].mxu0 %v1220
      %v1716 = vpop.f32.mrb[0].mxu0
      %v1717 = vadd.f32 0.0, %v1716
      %v1718 = vpop.f32.mrb[0].mxu0
      %v1719 = vpop.f32.mrb[0].mxu0
      %v1720 = vadd.f32 0.0, %v1719
      %v1721 = vpop.f32.mrb[0].mxu0
      %1722 = vmatprep.mubr.bf16.mxu0 0
      %1723 = vmatmul.mubr.bf16.gmra.mrb[0].mxu0 %v1223
      %v1724 = vpop.f32.mrb[0].mxu0
      %v1725 = vadd.f32 0.0, %v1724
      %v1726 = vpop.f32.mrb[0].mxu0
      %v1727 = vpop.f32.mrb[0].mxu0
      %v1728 = vadd.f32 0.0, %v1727
      %v1729 = vpop.f32.mrb[0].mxu0
      %1730 = vmatprep.mubr.bf16.mxu0 0
      %1731 = vmatmul.mubr.bf16.gmra.mrb[0].mxu0 %v1226
      %v1732 = vpop.f32.mrb[0].mxu0
      %v1733 = vadd.f32 0.0, %v1732
      %v1734 = vpop.f32.mrb[0].mxu0
      %v1735 = vpop.f32.mrb[0].mxu0
      %v1736 = vadd.f32 0.0, %v1735
      %v1737 = vpop.f32.mrb[0].mxu0
      %1738 = vmatprep.mubr.bf16.mxu0 0
      %1739 = vmatmul.mubr.bf16.gmra.mrb[0].mxu0 %v1586
      %v1740 = vpop.f32.mrb[0].mxu0
      %v1741 = vadd.f32 0.0, %v1740
      %v1742 = vpop.f32.mrb[0].mxu0
      %v1743 = vpop.f32.mrb[0].mxu0
      %v1744 = vadd.f32 0.0, %v1743
      %v1745 = vpop.f32.mrb[0].mxu0
      %1746 = vmatprep.mubr.bf16.mxu0 0
      %1747 = vmatmul.mubr.bf16.gmra.mrb[0].mxu0 %v1589
      %v1748 = vpop.f32.mrb[0].mxu0
      %v1749 = vadd.f32 0.0, %v1748
      %v1750 = vpop.f32.mrb[0].mxu0
      %v1751 = vpop.f32.mrb[0].mxu0
      %v1752 = vadd.f32 0.0, %v1751
      %v1753 = vpop.f32.mrb[0].mxu0
      %1754 = vdwg.mxu0
      %v1755 = vadd.f32 %v1447, %v1629
      %v1756 = vadd.f32 %v1450, %v1632
      %v1757 = vadd.f32 %v1455, %v1637
      %v1758 = vadd.f32 %v1458, %v1640
      %v1759 = vadd.f32 %v1463, %v1645
      %v1760 = vadd.f32 %v1466, %v1648
      %v1761 = vadd.f32 %v1471, %v1653
      %v1762 = vadd.f32 %v1474, %v1656
      %v1763 = vadd.f32 %v1479, %v1661
      %v1764 = vadd.f32 %v1482, %v1664
      %v1765 = vadd.f32 %v1487, %v1669
      %v1766 = vadd.f32 %v1490, %v1672
      %v1767 = vadd.f32 %v1495, %v1677
      %v1768 = vadd.f32 %v1498, %v1680
      %v1769 = vadd.f32 %v1503, %v1685
      %v1770 = vadd.f32 %v1506, %v1688
      %v1771 = vadd.f32 %v1511, %v1693
      %v1772 = vadd.f32 %v1514, %v1696
      %v1773 = vadd.f32 %v1519, %v1701
      %v1774 = vadd.f32 %v1522, %v1704
      %v1775 = vadd.f32 %v1527, %v1709
      %v1776 = vadd.f32 %v1530, %v1712
      %v1777 = vadd.f32 %v1535, %v1717
      %v1778 = vadd.f32 %v1538, %v1720
      %v1779 = vadd.f32 %v1543, %v1725
      %v1780 = vadd.f32 %v1546, %v1728
      %v1781 = vadd.f32 %v1551, %v1733
      %v1782 = vadd.f32 %v1554, %v1736
      %v1783 = vadd.f32 %v1559, %v1741
      %v1784 = vadd.f32 %v1562, %v1744
      %v1785 = vadd.f32 %v1567, %v1749
      %v1786 = vadd.f32 %v1570, %v1752
      %1787 = vst.msk [vmem:[%s246] sm:$0xff] %vm442, %v1755
      %1788 = vst.msk [vmem:[%s246 + $0x8] sm:$0xff] %vm442, %v1756
      %1789 = vst.msk [vmem:[%s246 + $0x10] sm:$0xff] %vm442, %v1757
      %1790 = vst.msk [vmem:[%s246 + $0x18] sm:$0xff] %vm442, %v1758
      %1791 = vst.msk [vmem:[%s246 + $0x20] sm:$0xff] %vm442, %v1759
      %1792 = vst.msk [vmem:[%s246 + $0x28] sm:$0xff] %vm442, %v1760
      %1793 = vst.msk [vmem:[%s246 + $0x30] sm:$0xff] %vm442, %v1761
      %1794 = vst.msk [vmem:[%s246 + $0x38] sm:$0xff] %vm442, %v1762
      %1795 = vst.msk [vmem:[%s246 + $0x40] sm:$0xff] %vm442, %v1763
      %1796 = vst.msk [vmem:[%s246 + $0x48] sm:$0xff] %vm442, %v1764
      %1797 = vst.msk [vmem:[%s246 + $0x50] sm:$0xff] %vm442, %v1765
      %1798 = vst.msk [vmem:[%s246 + $0x58] sm:$0xff] %vm442, %v1766
      %1799 = vst.msk [vmem:[%s246 + $0x60] sm:$0xff] %vm442, %v1767
      %1800 = vst.msk [vmem:[%s246 + $0x68] sm:$0xff] %vm442, %v1768
      %1801 = vst.msk [vmem:[%s246 + $0x70] sm:$0xff] %vm442, %v1769
      %1802 = vst.msk [vmem:[%s246 + $0x78] sm:$0xff] %vm442, %v1770
      %1803 = vst.msk [vmem:[%s246 + $0x80] sm:$0xff] %vm442, %v1771
      %1804 = vst.msk [vmem:[%s246 + $0x88] sm:$0xff] %vm442, %v1772
      %1805 = vst.msk [vmem:[%s246 + $0x90] sm:$0xff] %vm442, %v1773
      %1806 = vst.msk [vmem:[%s246 + $0x98] sm:$0xff] %vm442, %v1774
      %1807 = vst.msk [vmem:[%s246 + $0xa0] sm:$0xff] %vm442, %v1775
      %1808 = vst.msk [vmem:[%s246 + $0xa8] sm:$0xff] %vm442, %v1776
      %1809 = vst.msk [vmem:[%s246 + $0xb0] sm:$0xff] %vm442, %v1777
      %1810 = vst.msk [vmem:[%s246 + $0xb8] sm:$0xff] %vm442, %v1778
      %1811 = vst.msk [vmem:[%s246 + $0xc0] sm:$0xff] %vm442, %v1779
      %1812 = vst.msk [vmem:[%s246 + $0xc8] sm:$0xff] %vm442, %v1780
      %1813 = vst.msk [vmem:[%s246 + $0xd0] sm:$0xff] %vm442, %v1781
      %1814 = vst.msk [vmem:[%s246 + $0xd8] sm:$0xff] %vm442, %v1782
      %1815 = vst.msk [vmem:[%s246 + $0xe0] sm:$0xff] %vm442, %v1783
      %1816 = vst.msk [vmem:[%s246 + $0xe8] sm:$0xff] %vm442, %v1784
      %1817 = vst.msk [vmem:[%s246 + $0xf0] sm:$0xff] %vm442, %v1785
      %1818 = vst.msk [vmem:[%s246 + $0xf8] sm:$0xff] %vm442, %v1786
      %v1819 = vld [vmem:[#allocation2] sm:$0xe]
      %v1820 = vld [vmem:[#allocation2 + $0x4] sm:$0xf]
      %v1821 = vld [vmem:[#allocation2 + $0x8] sm:$0x1]
      %v1822 = vld [vmem:[#allocation2 + $0xc] sm:$0xe]
      %v1823 = vld [vmem:[#allocation2 + $0x10] sm:$0xf]
      %v1824 = vld [vmem:[#allocation2 + $0x14] sm:$0x1]
      %v1825 = vld [vmem:[#allocation2 + $0x18] sm:$0xe]
      %v1826 = vld [vmem:[#allocation2 + $0x1c] sm:$0xf]
      %v1827 = vld [vmem:[#allocation2 + $0x20] sm:$0x1]
      %v1828 = vld [vmem:[#allocation2 + $0x24] sm:$0xe]
      %v1829 = vld [vmem:[#allocation2 + $0x28] sm:$0xf]
      %v1830 = vld [vmem:[#allocation2 + $0x2c] sm:$0x1]
      %v1831 = vld [vmem:[#allocation2 + $0x30] sm:$0xe]
      %v1832 = vld [vmem:[#allocation2 + $0x34] sm:$0xf]
      %v1833 = vld [vmem:[#allocation2 + $0x38] sm:$0x1]
      %v1834 = vld [vmem:[#allocation2 + $0x3c] sm:$0xe]
      %v1835 = vld [vmem:[#allocation2 + $0x40] sm:$0xf]
      %v1836 = vld [vmem:[#allocation2 + $0x44] sm:$0x1]
      %v1837 = vld [vmem:[#allocation2 + $0x48] sm:$0xe]
      %v1838 = vld [vmem:[#allocation2 + $0x4c] sm:$0xf]
      %v1839 = vld [vmem:[#allocation2 + $0x50] sm:$0x1]
      %v1840 = vld [vmem:[#allocation2 + $0x54] sm:$0xe]
      %v1841 = vld [vmem:[#allocation2 + $0x58] sm:$0xf]
      %v1842 = vld [vmem:[#allocation2 + $0x5c] sm:$0x1]
      %v1843 = vld [vmem:[#allocation2 + $0x60] sm:$0xe]
      %v1844 = vld [vmem:[#allocation2 + $0x64] sm:$0xf]
      %v1845 = vld [vmem:[#allocation2 + $0x68] sm:$0x1]
      %v1846 = vld [vmem:[#allocation2 + $0x6c] sm:$0xe]
      %v1847 = vld [vmem:[#allocation2 + $0x70] sm:$0xf]
      %v1848 = vld [vmem:[#allocation2 + $0x74] sm:$0x1]
      %v1849 = vld [vmem:[#allocation2 + $0x78] sm:$0xe]
      %v1850 = vld [vmem:[#allocation2 + $0x7c] sm:$0xf]
      %v1851 = vld [vmem:[#allocation2 + $0x80] sm:$0x1]
      %v1852 = vld [vmem:[#allocation2 + $0x84] sm:$0xe]
      %v1853 = vld [vmem:[#allocation2 + $0x88] sm:$0xf]
      %v1854 = vld [vmem:[#allocation2 + $0x8c] sm:$0x1]
      %v1855 = vld [vmem:[#allocation2 + $0x90] sm:$0xe]
      %v1856 = vld [vmem:[#allocation2 + $0x94] sm:$0xf]
      %v1857 = vld [vmem:[#allocation2 + $0x98] sm:$0x1]
      %v1858 = vld [vmem:[#allocation2 + $0x9c] sm:$0xe]
      %v1859 = vld [vmem:[#allocation2 + $0xa0] sm:$0xf]
      %v1860 = vld [vmem:[#allocation2 + $0xa4] sm:$0x1]
      %v1861 = vld [vmem:[#allocation2 + $0xa8] sm:$0xe]
      %v1862 = vld [vmem:[#allocation2 + $0xac] sm:$0xf]
      %v1863 = vld [vmem:[#allocation2 + $0xb0] sm:$0x1]
      %v1864 = vld [vmem:[#allocation2 + $0xb4] sm:$0xe]
      %v1865 = vld [vmem:[#allocation2 + $0xb8] sm:$0xf]
      %v1866 = vld [vmem:[#allocation2 + $0xbc] sm:$0x1]
      %v1867 = vld [vmem:[#allocation2 + $0xc0] sm:$0xe]
      %v1868 = vld [vmem:[#allocation2 + $0xc4] sm:$0xf]
      %v1869 = vld [vmem:[#allocation2 + $0xc8] sm:$0x1]
      %v1870 = vld [vmem:[#allocation2 + $0xcc] sm:$0xe]
      %v1871 = vld [vmem:[#allocation2 + $0xd0] sm:$0xf]
      %v1872 = vld [vmem:[#allocation2 + $0xd4] sm:$0x1]
      %v1873 = vld [vmem:[#allocation2 + $0xd8] sm:$0xe]
      %v1874 = vld [vmem:[#allocation2 + $0xdc] sm:$0xf]
      %v1875 = vld [vmem:[#allocation2 + $0xe0] sm:$0x1]
      %v1876 = vld [vmem:[#allocation2 + $0xe4] sm:$0xe]
      %v1877 = vld [vmem:[#allocation2 + $0xe8] sm:$0xf]
      %v1878 = vld [vmem:[#allocation2 + $0xec] sm:$0x1]
      %vm1927 = vcmask 1042432
      %vm1928 = vcmask 1046532
      %vm1929 = vmor %vm1927, %vm1928
      %v1930 = vrot.slane %v1819, 5
      %v1931 = vrot.slane %v1930, 4
      %v1932 = vrot.slane %v1820, 5
      %v1933 = vsel %vm1929, %v1931, %v1932
      %v1934 = vrot.slane %v1932, 4
      %v1935 = vrot.slane %v1821, 5
      %v1936 = vsel %vm1929, %v1934, %v1935
      %v1937 = vrot.slane %v1822, 5
      %v1938 = vrot.slane %v1937, 4
      %v1939 = vrot.slane %v1823, 5
      %v1940 = vsel %vm1929, %v1938, %v1939
      %v1941 = vrot.slane %v1939, 4
      %v1942 = vrot.slane %v1824, 5
      %v1943 = vsel %vm1929, %v1941, %v1942
      %v1944 = vrot.slane %v1825, 5
      %v1945 = vrot.slane %v1944, 4
      %v1946 = vrot.slane %v1826, 5
      %v1947 = vsel %vm1929, %v1945, %v1946
      %v1948 = vrot.slane %v1946, 4
      %v1949 = vrot.slane %v1827, 5
      %v1950 = vsel %vm1929, %v1948, %v1949
      %v1951 = vrot.slane %v1828, 5
      %v1952 = vrot.slane %v1951, 4
      %v1953 = vrot.slane %v1829, 5
      %v1954 = vsel %vm1929, %v1952, %v1953
      %v1955 = vrot.slane %v1953, 4
      %v1956 = vrot.slane %v1830, 5
      %v1957 = vsel %vm1929, %v1955, %v1956
      %v1958 = vrot.slane %v1831, 5
      %v1959 = vrot.slane %v1958, 4
      %v1960 = vrot.slane %v1832, 5
      %v1961 = vsel %vm1929, %v1959, %v1960
      %v1962 = vrot.slane %v1960, 4
      %v1963 = vrot.slane %v1833, 5
      %v1964 = vsel %vm1929, %v1962, %v1963
      %v1965 = vrot.slane %v1834, 5
      %v1966 = vrot.slane %v1965, 4
      %v1967 = vrot.slane %v1835, 5
      %v1968 = vsel %vm1929, %v1966, %v1967
      %v1969 = vrot.slane %v1967, 4
      %v1970 = vrot.slane %v1836, 5
      %v1971 = vsel %vm1929, %v1969, %v1970
      %v1972 = vrot.slane %v1837, 5
      %v1973 = vrot.slane %v1972, 4
      %v1974 = vrot.slane %v1838, 5
      %v1975 = vsel %vm1929, %v1973, %v1974
      %v1976 = vrot.slane %v1974, 4
      %v1977 = vrot.slane %v1839, 5
      %v1978 = vsel %vm1929, %v1976, %v1977
      %v1979 = vrot.slane %v1840, 5
      %v1980 = vrot.slane %v1979, 4
      %v1981 = vrot.slane %v1841, 5
      %v1982 = vsel %vm1929, %v1980, %v1981
      %v1983 = vrot.slane %v1981, 4
      %v1984 = vrot.slane %v1842, 5
      %v1985 = vsel %vm1929, %v1983, %v1984
      %v1986 = vrot.slane %v1843, 5
      %v1987 = vrot.slane %v1986, 4
      %v1988 = vrot.slane %v1844, 5
      %v1989 = vsel %vm1929, %v1987, %v1988
      %v1990 = vrot.slane %v1988, 4
      %v1991 = vrot.slane %v1845, 5
      %v1992 = vsel %vm1929, %v1990, %v1991
      %v1993 = vrot.slane %v1846, 5
      %v1994 = vrot.slane %v1993, 4
      %v1995 = vrot.slane %v1847, 5
      %v1996 = vsel %vm1929, %v1994, %v1995
      %v1997 = vrot.slane %v1995, 4
      %v1998 = vrot.slane %v1848, 5
      %v1999 = vsel %vm1929, %v1997, %v1998
      %v2000 = vrot.slane %v1849, 5
      %v2001 = vrot.slane %v2000, 4
      %v2002 = vrot.slane %v1850, 5
      %v2003 = vsel %vm1929, %v2001, %v2002
      %v2004 = vrot.slane %v2002, 4
      %v2005 = vrot.slane %v1851, 5
      %v2006 = vsel %vm1929, %v2004, %v2005
      %v2007 = vrot.slane %v1852, 5
      %v2008 = vrot.slane %v2007, 4
      %v2009 = vrot.slane %v1853, 5
      %v2010 = vsel %vm1929, %v2008, %v2009
      %v2011 = vrot.slane %v2009, 4
      %v2012 = vrot.slane %v1854, 5
      %v2013 = vsel %vm1929, %v2011, %v2012
      %v2014 = vrot.slane %v1855, 5
      %v2015 = vrot.slane %v2014, 4
      %v2016 = vrot.slane %v1856, 5
      %v2017 = vsel %vm1929, %v2015, %v2016
      %v2018 = vrot.slane %v2016, 4
      %v2019 = vrot.slane %v1857, 5
      %v2020 = vsel %vm1929, %v2018, %v2019
      %v2021 = vrot.slane %v1858, 5
      %v2022 = vrot.slane %v2021, 4
      %v2023 = vrot.slane %v1859, 5
      %v2024 = vsel %vm1929, %v2022, %v2023
      %v2025 = vrot.slane %v2023, 4
      %v2026 = vrot.slane %v1860, 5
      %v2027 = vsel %vm1929, %v2025, %v2026
      %v2028 = vrot.slane %v1861, 5
      %v2029 = vrot.slane %v2028, 4
      %v2030 = vrot.slane %v1862, 5
      %v2031 = vsel %vm1929, %v2029, %v2030
      %v2032 = vrot.slane %v2030, 4
      %v2033 = vrot.slane %v1863, 5
      %v2034 = vsel %vm1929, %v2032, %v2033
      %v2035 = vrot.slane %v1864, 5
      %v2036 = vrot.slane %v2035, 4
      %v2037 = vrot.slane %v1865, 5
      %v2038 = vsel %vm1929, %v2036, %v2037
      %v2039 = vrot.slane %v2037, 4
      %v2040 = vrot.slane %v1866, 5
      %v2041 = vsel %vm1929, %v2039, %v2040
      %s2042 = scalar_lea.vmem %s4, 4
      %v2043 = vld [vmem:[%s2042] sm:$0xf]
      %v2050 = vrot.slane %v1867, 5
      %v2051 = vrot.slane %v2050, 4
      %v2052 = vrot.slane %v1868, 5
      %v2053 = vsel %vm1929, %v2051, %v2052
      %v2054 = vrot.slane %v2052, 4
      %v2055 = vrot.slane %v1869, 5
      %v2056 = vsel %vm1929, %v2054, %v2055
      %v2057 = vrot.slane %v1870, 5
      %v2058 = vrot.slane %v2057, 4
      %v2059 = vrot.slane %v1871, 5
      %v2060 = vsel %vm1929, %v2058, %v2059
      %v2061 = vrot.slane %v2059, 4
      %v2062 = vrot.slane %v1872, 5
      %v2063 = vsel %vm1929, %v2061, %v2062
      %s2064 = scalar_lea.vmem %s4, 16
      %v2065 = vld [vmem:[%s2064] sm:$0xf]
      %v2066 = vunpack.c.l.b16 %v1947
      %v2067 = vunpack.c.l.b16 %v1950
      %v2068 = vunpack.c.l.b16 %v1954
      %v2069 = vunpack.c.l.b16 %v1957
      %v2070 = vunpack.c.l.b16 %v1961
      %v2071 = vunpack.c.l.b16 %v1964
      %v2072 = vunpack.c.l.b16 %v1968
      %v2073 = vunpack.c.l.b16 %v1971
      %v2074 = vunpack.c.l.b16 %v1975
      %v2075 = vunpack.c.l.b16 %v1978
      %v2076 = vunpack.c.l.b16 %v1982
      %v2077 = vunpack.c.l.b16 %v1985
      %v2078 = vunpack.c.l.b16 %v1989
      %v2079 = vunpack.c.l.b16 %v1992
      %v2080 = vunpack.c.l.b16 %v1996
      %v2081 = vunpack.c.l.b16 %v1999
      %v2082 = vunpack.c.l.b16 %v2003
      %v2083 = vunpack.c.l.b16 %v2006
      %v2084 = vunpack.c.l.b16 %v2010
      %v2085 = vunpack.c.l.b16 %v2013
      %v2086 = vunpack.c.l.b16 %v2017
      %v2087 = vunpack.c.l.b16 %v2020
      %v2088 = vunpack.c.l.b16 %v2024
      %v2089 = vunpack.c.l.b16 %v2027
      %v2090 = vunpack.c.l.b16 %v2031
      %v2091 = vunpack.c.l.b16 %v2034
      %v2092 = vunpack.c.l.b16 %v2038
      %v2093 = vunpack.c.l.b16 %v2041
      %v2094 = vunpack.c.l.b16 %v2053
      %v2095 = vunpack.c.l.b16 %v2056
      %v2096 = vunpack.c.l.b16 %v2060
      %v2097 = vunpack.c.l.b16 %v2063
      %v2098 = vpack.c.b16 %v2067, %v2066
      %v2099 = vpack.c.b16 %v2069, %v2068
      %v2100 = vpack.c.b16 %v2071, %v2070
      %v2101 = vpack.c.b16 %v2073, %v2072
      %v2102 = vpack.c.b16 %v2075, %v2074
      %v2103 = vpack.c.b16 %v2077, %v2076
      %v2104 = vpack.c.b16 %v2079, %v2078
      %v2105 = vpack.c.b16 %v2081, %v2080
      %v2106 = vpack.c.b16 %v2083, %v2082
      %v2107 = vpack.c.b16 %v2085, %v2084
      %v2108 = vpack.c.b16 %v2087, %v2086
      %v2109 = vpack.c.b16 %v2089, %v2088
      %v2110 = vpack.c.b16 %v2091, %v2090
      %v2111 = vpack.c.b16 %v2093, %v2092
      %v2112 = vpack.c.b16 %v2095, %v2094
      %v2113 = vpack.c.b16 %v2097, %v2096
      %v2115 = vsel %vm1179, %v2098, 0
      %v2118 = vsel %vm1179, %v2099, 0
      %v2121 = vsel %vm1179, %v2100, 0
      %v2124 = vsel %vm1179, %v2101, 0
      %v2127 = vsel %vm1179, %v2102, 0
      %v2130 = vsel %vm1179, %v2103, 0
      %v2133 = vsel %vm1179, %v2104, 0
      %v2136 = vsel %vm1179, %v2105, 0
      %v2139 = vsel %vm1179, %v2106, 0
      %v2142 = vsel %vm1179, %v2107, 0
      %v2145 = vsel %vm1179, %v2108, 0
      %v2148 = vsel %vm1179, %v2109, 0
      %v2151 = vsel %vm1179, %v2110, 0
      %v2154 = vsel %vm1179, %v2111, 0
      %v2157 = vsel %vm1179, %v2112, 0
      %v2160 = vsel %vm1179, %v2113, 0
      %v2163 = vsel %vm1228, %v2065, 0
      %2165 = vmatprep.subr.bf16.mxu0 0
      %2166 = vmatpush1.bf16.msra.mxu0 %v2163
      %2167 = vmatprep.subr.bf16.mxu0 0
      %2168 = vmatpush1.bf16.msra.mxu0 0
      %2169 = vmatprep.subr.bf16.mxu0 0
      %2170 = vmatpush1.bf16.msra.mxu0 0
      %2171 = vmatprep.subr.bf16.mxu0 0
      %2172 = vmatpush1.bf16.msra.mxu0 0
      %2173 = vmatprep.subr.bf16.mxu0 0
      %2174 = vmatpush1.bf16.msra.mxu0 0
      %2175 = vmatprep.subr.bf16.mxu0 0
      %2176 = vmatpush1.bf16.msra.mxu0 0
      %2177 = vmatprep.subr.bf16.mxu0 0
      %2178 = vmatpush1.bf16.msra.mxu0 0
      %2179 = vmatprep.subr.bf16.mxu0 0
      %2180 = vmatpush1.bf16.msra.mxu0 0
      %2181 = vmatprep.subr.bf16.mxu0 0
      %2182 = vmatpush1.bf16.msra.mxu0 0
      %2183 = vmatprep.subr.bf16.mxu0 0
      %2184 = vmatpush1.bf16.msra.mxu0 0
      %2185 = vmatprep.subr.bf16.mxu0 0
      %2186 = vmatpush1.bf16.msra.mxu0 0
      %2187 = vmatprep.subr.bf16.mxu0 0
      %2188 = vmatpush1.bf16.msra.mxu0 0
      %2189 = vmatprep.subr.bf16.mxu0 0
      %2190 = vmatpush1.bf16.msra.mxu0 0
      %2191 = vmatprep.subr.bf16.mxu0 0
      %2192 = vmatpush1.bf16.msra.mxu0 0
      %2193 = vmatprep.subr.bf16.mxu0 0
      %2194 = vmatpush1.bf16.msra.mxu0 0
      %2195 = vmatprep.subr.bf16.mxu0 0
      %2196 = vmatpush1.bf16.msra.mxu0 0
      %2197 = vmatprep.mubr.bf16.mxu0 0
      %2198 = vmatmul.mubr.bf16.gmra.mrb[0].mxu0 %v2115
      %v2199 = vpop.f32.mrb[0].mxu0
      %v2200 = vadd.f32 0.0, %v2199
      %v2201 = vpop.f32.mrb[0].mxu0
      %v2202 = vpop.f32.mrb[0].mxu0
      %v2203 = vadd.f32 0.0, %v2202
      %v2204 = vpop.f32.mrb[0].mxu0
      %2205 = vmatprep.mubr.bf16.mxu0 0
      %2206 = vmatmul.mubr.bf16.gmra.mrb[0].mxu0 %v2118
      %v2207 = vpop.f32.mrb[0].mxu0
      %v2208 = vadd.f32 0.0, %v2207
      %v2209 = vpop.f32.mrb[0].mxu0
      %v2210 = vpop.f32.mrb[0].mxu0
      %v2211 = vadd.f32 0.0, %v2210
      %v2212 = vpop.f32.mrb[0].mxu0
      %2213 = vmatprep.mubr.bf16.mxu0 0
      %2214 = vmatmul.mubr.bf16.gmra.mrb[0].mxu0 %v2121
      %v2215 = vpop.f32.mrb[0].mxu0
      %v2216 = vadd.f32 0.0, %v2215
      %v2217 = vpop.f32.mrb[0].mxu0
      %v2218 = vpop.f32.mrb[0].mxu0
      %v2219 = vadd.f32 0.0, %v2218
      %v2220 = vpop.f32.mrb[0].mxu0
      %2221 = vmatprep.mubr.bf16.mxu0 0
      %2222 = vmatmul.mubr.bf16.gmra.mrb[0].mxu0 %v2124
      %v2223 = vpop.f32.mrb[0].mxu0
      %v2224 = vadd.f32 0.0, %v2223
      %v2225 = vpop.f32.mrb[0].mxu0
      %v2226 = vpop.f32.mrb[0].mxu0
      %v2227 = vadd.f32 0.0, %v2226
      %v2228 = vpop.f32.mrb[0].mxu0
      %2229 = vmatprep.mubr.bf16.mxu0 0
      %2230 = vmatmul.mubr.bf16.gmra.mrb[0].mxu0 %v2127
      %v2231 = vpop.f32.mrb[0].mxu0
      %v2232 = vadd.f32 0.0, %v2231
      %v2233 = vpop.f32.mrb[0].mxu0
      %v2234 = vpop.f32.mrb[0].mxu0
      %v2235 = vadd.f32 0.0, %v2234
      %v2236 = vpop.f32.mrb[0].mxu0
      %2237 = vmatprep.mubr.bf16.mxu0 0
      %2238 = vmatmul.mubr.bf16.gmra.mrb[0].mxu0 %v2130
      %v2239 = vpop.f32.mrb[0].mxu0
      %v2240 = vadd.f32 0.0, %v2239
      %v2241 = vpop.f32.mrb[0].mxu0
      %v2242 = vpop.f32.mrb[0].mxu0
      %v2243 = vadd.f32 0.0, %v2242
      %v2244 = vpop.f32.mrb[0].mxu0
      %2245 = vmatprep.mubr.bf16.mxu0 0
      %2246 = vmatmul.mubr.bf16.gmra.mrb[0].mxu0 %v2133
      %v2247 = vpop.f32.mrb[0].mxu0
      %v2248 = vadd.f32 0.0, %v2247
      %v2249 = vpop.f32.mrb[0].mxu0
      %v2250 = vpop.f32.mrb[0].mxu0
      %v2251 = vadd.f32 0.0, %v2250
      %v2252 = vpop.f32.mrb[0].mxu0
      %2253 = vmatprep.mubr.bf16.mxu0 0
      %2254 = vmatmul.mubr.bf16.gmra.mrb[0].mxu0 %v2136
      %v2255 = vpop.f32.mrb[0].mxu0
      %v2256 = vadd.f32 0.0, %v2255
      %v2257 = vpop.f32.mrb[0].mxu0
      %v2258 = vpop.f32.mrb[0].mxu0
      %v2259 = vadd.f32 0.0, %v2258
      %v2260 = vpop.f32.mrb[0].mxu0
      %2261 = vmatprep.mubr.bf16.mxu0 0
      %2262 = vmatmul.mubr.bf16.gmra.mrb[0].mxu0 %v2139
      %v2263 = vpop.f32.mrb[0].mxu0
      %v2264 = vadd.f32 0.0, %v2263
      %v2265 = vpop.f32.mrb[0].mxu0
      %v2266 = vpop.f32.mrb[0].mxu0
      %v2267 = vadd.f32 0.0, %v2266
      %v2268 = vpop.f32.mrb[0].mxu0
      %2269 = vmatprep.mubr.bf16.mxu0 0
      %2270 = vmatmul.mubr.bf16.gmra.mrb[0].mxu0 %v2142
      %v2271 = vpop.f32.mrb[0].mxu0
      %v2272 = vadd.f32 0.0, %v2271
      %v2273 = vpop.f32.mrb[0].mxu0
      %v2274 = vpop.f32.mrb[0].mxu0
      %v2275 = vadd.f32 0.0, %v2274
      %v2276 = vpop.f32.mrb[0].mxu0
      %2277 = vmatprep.mubr.bf16.mxu0 0
      %2278 = vmatmul.mubr.bf16.gmra.mrb[0].mxu0 %v2145
      %v2279 = vpop.f32.mrb[0].mxu0
      %v2280 = vadd.f32 0.0, %v2279
      %v2281 = vpop.f32.mrb[0].mxu0
      %v2282 = vpop.f32.mrb[0].mxu0
      %v2283 = vadd.f32 0.0, %v2282
      %v2284 = vpop.f32.mrb[0].mxu0
      %2285 = vmatprep.mubr.bf16.mxu0 0
      %2286 = vmatmul.mubr.bf16.gmra.mrb[0].mxu0 %v2148
      %v2287 = vpop.f32.mrb[0].mxu0
      %v2288 = vadd.f32 0.0, %v2287
      %v2289 = vpop.f32.mrb[0].mxu0
      %v2290 = vpop.f32.mrb[0].mxu0
      %v2291 = vadd.f32 0.0, %v2290
      %v2292 = vpop.f32.mrb[0].mxu0
      %2293 = vmatprep.mubr.bf16.mxu0 0
      %2294 = vmatmul.mubr.bf16.gmra.mrb[0].mxu0 %v2151
      %v2295 = vpop.f32.mrb[0].mxu0
      %v2296 = vadd.f32 0.0, %v2295
      %v2297 = vpop.f32.mrb[0].mxu0
      %v2298 = vpop.f32.mrb[0].mxu0
      %v2299 = vadd.f32 0.0, %v2298
      %v2300 = vpop.f32.mrb[0].mxu0
      %2301 = vmatprep.mubr.bf16.mxu0 0
      %2302 = vmatmul.mubr.bf16.gmra.mrb[0].mxu0 %v2154
      %v2303 = vpop.f32.mrb[0].mxu0
      %v2304 = vadd.f32 0.0, %v2303
      %v2305 = vpop.f32.mrb[0].mxu0
      %v2306 = vpop.f32.mrb[0].mxu0
      %v2307 = vadd.f32 0.0, %v2306
      %v2308 = vpop.f32.mrb[0].mxu0
      %2309 = vmatprep.mubr.bf16.mxu0 0
      %2310 = vmatmul.mubr.bf16.gmra.mrb[0].mxu0 %v2157
      %v2311 = vpop.f32.mrb[0].mxu0
      %v2312 = vadd.f32 0.0, %v2311
      %v2313 = vpop.f32.mrb[0].mxu0
      %v2314 = vpop.f32.mrb[0].mxu0
      %v2315 = vadd.f32 0.0, %v2314
      %v2316 = vpop.f32.mrb[0].mxu0
      %2317 = vmatprep.mubr.bf16.mxu0 0
      %2318 = vmatmul.mubr.bf16.gmra.mrb[0].mxu0 %v2160
      %v2319 = vpop.f32.mrb[0].mxu0
      %v2320 = vadd.f32 0.0, %v2319
      %v2321 = vpop.f32.mrb[0].mxu0
      %v2322 = vpop.f32.mrb[0].mxu0
      %v2323 = vadd.f32 0.0, %v2322
      %v2324 = vpop.f32.mrb[0].mxu0
      %2325 = vdwg.mxu0
      %v2326 = vunpack.c.l.b16 %v1933
      %v2327 = vunpack.c.l.b16 %v1936
      %v2328 = vunpack.c.l.b16 %v1940
      %v2329 = vunpack.c.l.b16 %v1943
      %v2330 = vpack.c.b16 %v2327, %v2326
      %v2331 = vpack.c.b16 %v2329, %v2328
      %v2333 = vsel %vm1179, %v2330, 0
      %v2336 = vsel %vm1179, %v2331, 0
      %v2339 = vsel %vm1228, %v2043, 0
      %2341 = vmatprep.subr.bf16.mxu0 0
      %2342 = vmatpush1.bf16.msra.mxu0 %v2339
      %2343 = vmatprep.subr.bf16.mxu0 0
      %2344 = vmatpush1.bf16.msra.mxu0 0
      %2345 = vmatprep.subr.bf16.mxu0 0
      %2346 = vmatpush1.bf16.msra.mxu0 0
      %2347 = vmatprep.subr.bf16.mxu0 0
      %2348 = vmatpush1.bf16.msra.mxu0 0
      %2349 = vmatprep.subr.bf16.mxu0 0
      %2350 = vmatpush1.bf16.msra.mxu0 0
      %2351 = vmatprep.subr.bf16.mxu0 0
      %2352 = vmatpush1.bf16.msra.mxu0 0
      %2353 = vmatprep.subr.bf16.mxu0 0
      %2354 = vmatpush1.bf16.msra.mxu0 0
      %2355 = vmatprep.subr.bf16.mxu0 0
      %2356 = vmatpush1.bf16.msra.mxu0 0
      %2357 = vmatprep.subr.bf16.mxu0 0
      %2358 = vmatpush1.bf16.msra.mxu0 0
      %2359 = vmatprep.subr.bf16.mxu0 0
      %2360 = vmatpush1.bf16.msra.mxu0 0
      %2361 = vmatprep.subr.bf16.mxu0 0
      %2362 = vmatpush1.bf16.msra.mxu0 0
      %2363 = vmatprep.subr.bf16.mxu0 0
      %2364 = vmatpush1.bf16.msra.mxu0 0
      %2365 = vmatprep.subr.bf16.mxu0 0
      %2366 = vmatpush1.bf16.msra.mxu0 0
      %2367 = vmatprep.subr.bf16.mxu0 0
      %2368 = vmatpush1.bf16.msra.mxu0 0
      %2369 = vmatprep.subr.bf16.mxu0 0
      %2370 = vmatpush1.bf16.msra.mxu0 0
      %2371 = vmatprep.subr.bf16.mxu0 0
      %2372 = vmatpush1.bf16.msra.mxu0 0
      %2373 = vmatprep.mubr.bf16.mxu0 0
      %2374 = vmatmul.mubr.bf16.gmra.mrb[0].mxu0 %v2333
      %v2375 = vpop.f32.mrb[0].mxu0
      %v2376 = vadd.f32 %v2200, %v2375
      %v2377 = vpop.f32.mrb[0].mxu0
      %v2378 = vpop.f32.mrb[0].mxu0
      %v2379 = vadd.f32 %v2203, %v2378
      %v2380 = vpop.f32.mrb[0].mxu0
      %2381 = vmatprep.mubr.bf16.mxu0 0
      %2382 = vmatmul.mubr.bf16.gmra.mrb[0].mxu0 %v2336
      %v2383 = vpop.f32.mrb[0].mxu0
      %v2384 = vadd.f32 %v2208, %v2383
      %v2385 = vpop.f32.mrb[0].mxu0
      %v2386 = vpop.f32.mrb[0].mxu0
      %v2387 = vadd.f32 %v2211, %v2386
      %v2388 = vpop.f32.mrb[0].mxu0
      %2389 = vmatprep.mubr.bf16.mxu0 0
      %2390 = vmatmul.mubr.bf16.gmra.mrb[0].mxu0 %v2115
      %v2391 = vpop.f32.mrb[0].mxu0
      %v2392 = vadd.f32 %v2216, %v2391
      %v2393 = vpop.f32.mrb[0].mxu0
      %v2394 = vpop.f32.mrb[0].mxu0
      %v2395 = vadd.f32 %v2219, %v2394
      %v2396 = vpop.f32.mrb[0].mxu0
      %2397 = vmatprep.mubr.bf16.mxu0 0
      %2398 = vmatmul.mubr.bf16.gmra.mrb[0].mxu0 %v2118
      %v2399 = vpop.f32.mrb[0].mxu0
      %v2400 = vadd.f32 %v2224, %v2399
      %v2401 = vpop.f32.mrb[0].mxu0
      %v2402 = vpop.f32.mrb[0].mxu0
      %v2403 = vadd.f32 %v2227, %v2402
      %v2404 = vpop.f32.mrb[0].mxu0
      %2405 = vmatprep.mubr.bf16.mxu0 0
      %2406 = vmatmul.mubr.bf16.gmra.mrb[0].mxu0 %v2121
      %v2407 = vpop.f32.mrb[0].mxu0
      %v2408 = vadd.f32 %v2232, %v2407
      %v2409 = vpop.f32.mrb[0].mxu0
      %v2410 = vpop.f32.mrb[0].mxu0
      %v2411 = vadd.f32 %v2235, %v2410
      %v2412 = vpop.f32.mrb[0].mxu0
      %2413 = vmatprep.mubr.bf16.mxu0 0
      %2414 = vmatmul.mubr.bf16.gmra.mrb[0].mxu0 %v2124
      %v2415 = vpop.f32.mrb[0].mxu0
      %v2416 = vadd.f32 %v2240, %v2415
      %v2417 = vpop.f32.mrb[0].mxu0
      %v2418 = vpop.f32.mrb[0].mxu0
      %v2419 = vadd.f32 %v2243, %v2418
      %v2420 = vpop.f32.mrb[0].mxu0
      %2421 = vmatprep.mubr.bf16.mxu0 0
      %2422 = vmatmul.mubr.bf16.gmra.mrb[0].mxu0 %v2127
      %v2423 = vpop.f32.mrb[0].mxu0
      %v2424 = vadd.f32 %v2248, %v2423
      %v2425 = vpop.f32.mrb[0].mxu0
      %v2426 = vpop.f32.mrb[0].mxu0
      %v2427 = vadd.f32 %v2251, %v2426
      %v2428 = vpop.f32.mrb[0].mxu0
      %2429 = vmatprep.mubr.bf16.mxu0 0
      %2430 = vmatmul.mubr.bf16.gmra.mrb[0].mxu0 %v2130
      %v2431 = vpop.f32.mrb[0].mxu0
      %v2432 = vadd.f32 %v2256, %v2431
      %v2433 = vpop.f32.mrb[0].mxu0
      %v2434 = vpop.f32.mrb[0].mxu0
      %v2435 = vadd.f32 %v2259, %v2434
      %v2436 = vpop.f32.mrb[0].mxu0
      %2437 = vmatprep.mubr.bf16.mxu0 0
      %2438 = vmatmul.mubr.bf16.gmra.mrb[0].mxu0 %v2133
      %v2439 = vpop.f32.mrb[0].mxu0
      %v2440 = vadd.f32 %v2264, %v2439
      %v2441 = vpop.f32.mrb[0].mxu0
      %v2442 = vpop.f32.mrb[0].mxu0
      %v2443 = vadd.f32 %v2267, %v2442
      %v2444 = vpop.f32.mrb[0].mxu0
      %2445 = vmatprep.mubr.bf16.mxu0 0
      %2446 = vmatmul.mubr.bf16.gmra.mrb[0].mxu0 %v2136
      %v2447 = vpop.f32.mrb[0].mxu0
      %v2448 = vadd.f32 %v2272, %v2447
      %v2449 = vpop.f32.mrb[0].mxu0
      %v2450 = vpop.f32.mrb[0].mxu0
      %v2451 = vadd.f32 %v2275, %v2450
      %v2452 = vpop.f32.mrb[0].mxu0
      %2453 = vmatprep.mubr.bf16.mxu0 0
      %2454 = vmatmul.mubr.bf16.gmra.mrb[0].mxu0 %v2139
      %v2455 = vpop.f32.mrb[0].mxu0
      %v2456 = vadd.f32 %v2280, %v2455
      %v2457 = vpop.f32.mrb[0].mxu0
      %v2458 = vpop.f32.mrb[0].mxu0
      %v2459 = vadd.f32 %v2283, %v2458
      %v2460 = vpop.f32.mrb[0].mxu0
      %2461 = vmatprep.mubr.bf16.mxu0 0
      %2462 = vmatmul.mubr.bf16.gmra.mrb[0].mxu0 %v2142
      %v2463 = vpop.f32.mrb[0].mxu0
      %v2464 = vadd.f32 %v2288, %v2463
      %v2465 = vpop.f32.mrb[0].mxu0
      %v2466 = vpop.f32.mrb[0].mxu0
      %v2467 = vadd.f32 %v2291, %v2466
      %v2468 = vpop.f32.mrb[0].mxu0
      %2469 = vmatprep.mubr.bf16.mxu0 0
      %2470 = vmatmul.mubr.bf16.gmra.mrb[0].mxu0 %v2145
      %v2471 = vpop.f32.mrb[0].mxu0
      %v2472 = vadd.f32 %v2296, %v2471
      %v2473 = vpop.f32.mrb[0].mxu0
      %v2474 = vpop.f32.mrb[0].mxu0
      %v2475 = vadd.f32 %v2299, %v2474
      %v2476 = vpop.f32.mrb[0].mxu0
      %2477 = vmatprep.mubr.bf16.mxu0 0
      %2478 = vmatmul.mubr.bf16.gmra.mrb[0].mxu0 %v2148
      %v2479 = vpop.f32.mrb[0].mxu0
      %v2480 = vadd.f32 %v2304, %v2479
      %v2481 = vpop.f32.mrb[0].mxu0
      %v2482 = vpop.f32.mrb[0].mxu0
      %v2483 = vadd.f32 %v2307, %v2482
      %v2484 = vpop.f32.mrb[0].mxu0
      %2485 = vmatprep.mubr.bf16.mxu0 0
      %2486 = vmatmul.mubr.bf16.gmra.mrb[0].mxu0 %v2151
      %v2487 = vpop.f32.mrb[0].mxu0
      %v2488 = vadd.f32 %v2312, %v2487
      %v2489 = vpop.f32.mrb[0].mxu0
      %v2490 = vpop.f32.mrb[0].mxu0
      %v2491 = vadd.f32 %v2315, %v2490
      %v2492 = vpop.f32.mrb[0].mxu0
      %2493 = vmatprep.mubr.bf16.mxu0 0
      %2494 = vmatmul.mubr.bf16.gmra.mrb[0].mxu0 %v2154
      %v2495 = vpop.f32.mrb[0].mxu0
      %v2496 = vadd.f32 %v2320, %v2495
      %v2497 = vpop.f32.mrb[0].mxu0
      %v2498 = vpop.f32.mrb[0].mxu0
      %v2499 = vadd.f32 %v2323, %v2498
      %v2500 = vpop.f32.mrb[0].mxu0
      %2501 = vdwg.mxu0
      %v2508 = vrot.slane %v1873, 5
      %v2509 = vrot.slane %v2508, 4
      %v2510 = vrot.slane %v1874, 5
      %v2511 = vsel %vm1929, %v2509, %v2510
      %v2512 = vrot.slane %v2510, 4
      %v2513 = vrot.slane %v1875, 5
      %v2514 = vsel %vm1929, %v2512, %v2513
      %v2515 = vrot.slane %v1876, 5
      %v2516 = vrot.slane %v2515, 4
      %v2517 = vrot.slane %v1877, 5
      %v2518 = vsel %vm1929, %v2516, %v2517
      %v2519 = vrot.slane %v2517, 4
      %v2520 = vrot.slane %v1878, 5
      %v2521 = vsel %vm1929, %v2519, %v2520
      %s2522 = scalar_lea.vmem %s4, 28
      %v2523 = vld [vmem:[%s2522] sm:$0xf]
      %v2524 = vunpack.c.l.b16 %v2511
      %v2525 = vunpack.c.l.b16 %v2514
      %v2526 = vunpack.c.l.b16 %v2518
      %v2527 = vunpack.c.l.b16 %v2521
      %v2528 = vpack.c.b16 %v2525, %v2524
      %v2529 = vpack.c.b16 %v2527, %v2526
      %v2531 = vsel %vm1179, %v2528, 0
      %v2534 = vsel %vm1179, %v2529, 0
      %v2537 = vsel %vm1228, %v2523, 0
      %2539 = vmatprep.subr.bf16.mxu0 0
      %2540 = vmatpush1.bf16.msra.mxu0 %v2537
      %2541 = vmatprep.subr.bf16.mxu0 0
      %2542 = vmatpush1.bf16.msra.mxu0 0
      %2543 = vmatprep.subr.bf16.mxu0 0
      %2544 = vmatpush1.bf16.msra.mxu0 0
      %2545 = vmatprep.subr.bf16.mxu0 0
      %2546 = vmatpush1.bf16.msra.mxu0 0
      %2547 = vmatprep.subr.bf16.mxu0 0
      %2548 = vmatpush1.bf16.msra.mxu0 0
      %2549 = vmatprep.subr.bf16.mxu0 0
      %2550 = vmatpush1.bf16.msra.mxu0 0
      %2551 = vmatprep.subr.bf16.mxu0 0
      %2552 = vmatpush1.bf16.msra.mxu0 0
      %2553 = vmatprep.subr.bf16.mxu0 0
      %2554 = vmatpush1.bf16.msra.mxu0 0
      %2555 = vmatprep.subr.bf16.mxu0 0
      %2556 = vmatpush1.bf16.msra.mxu0 0
      %2557 = vmatprep.subr.bf16.mxu0 0
      %2558 = vmatpush1.bf16.msra.mxu0 0
      %2559 = vmatprep.subr.bf16.mxu0 0
      %2560 = vmatpush1.bf16.msra.mxu0 0
      %2561 = vmatprep.subr.bf16.mxu0 0
      %2562 = vmatpush1.bf16.msra.mxu0 0
      %2563 = vmatprep.subr.bf16.mxu0 0
      %2564 = vmatpush1.bf16.msra.mxu0 0
      %2565 = vmatprep.subr.bf16.mxu0 0
      %2566 = vmatpush1.bf16.msra.mxu0 0
      %2567 = vmatprep.subr.bf16.mxu0 0
      %2568 = vmatpush1.bf16.msra.mxu0 0
      %2569 = vmatprep.subr.bf16.mxu0 0
      %2570 = vmatpush1.bf16.msra.mxu0 0
      %2571 = vmatprep.mubr.bf16.mxu0 0
      %2572 = vmatmul.mubr.bf16.gmra.mrb[0].mxu0 %v2121
      %v2573 = vpop.f32.mrb[0].mxu0
      %v2574 = vadd.f32 0.0, %v2573
      %v2575 = vpop.f32.mrb[0].mxu0
      %v2576 = vpop.f32.mrb[0].mxu0
      %v2577 = vadd.f32 0.0, %v2576
      %v2578 = vpop.f32.mrb[0].mxu0
      %2579 = vmatprep.mubr.bf16.mxu0 0
      %2580 = vmatmul.mubr.bf16.gmra.mrb[0].mxu0 %v2124
      %v2581 = vpop.f32.mrb[0].mxu0
      %v2582 = vadd.f32 0.0, %v2581
      %v2583 = vpop.f32.mrb[0].mxu0
      %v2584 = vpop.f32.mrb[0].mxu0
      %v2585 = vadd.f32 0.0, %v2584
      %v2586 = vpop.f32.mrb[0].mxu0
      %2587 = vmatprep.mubr.bf16.mxu0 0
      %2588 = vmatmul.mubr.bf16.gmra.mrb[0].mxu0 %v2127
      %v2589 = vpop.f32.mrb[0].mxu0
      %v2590 = vadd.f32 0.0, %v2589
      %v2591 = vpop.f32.mrb[0].mxu0
      %v2592 = vpop.f32.mrb[0].mxu0
      %v2593 = vadd.f32 0.0, %v2592
      %v2594 = vpop.f32.mrb[0].mxu0
      %2595 = vmatprep.mubr.bf16.mxu0 0
      %2596 = vmatmul.mubr.bf16.gmra.mrb[0].mxu0 %v2130
      %v2597 = vpop.f32.mrb[0].mxu0
      %v2598 = vadd.f32 0.0, %v2597
      %v2599 = vpop.f32.mrb[0].mxu0
      %v2600 = vpop.f32.mrb[0].mxu0
      %v2601 = vadd.f32 0.0, %v2600
      %v2602 = vpop.f32.mrb[0].mxu0
      %2603 = vmatprep.mubr.bf16.mxu0 0
      %2604 = vmatmul.mubr.bf16.gmra.mrb[0].mxu0 %v2133
      %v2605 = vpop.f32.mrb[0].mxu0
      %v2606 = vadd.f32 0.0, %v2605
      %v2607 = vpop.f32.mrb[0].mxu0
      %v2608 = vpop.f32.mrb[0].mxu0
      %v2609 = vadd.f32 0.0, %v2608
      %v2610 = vpop.f32.mrb[0].mxu0
      %2611 = vmatprep.mubr.bf16.mxu0 0
      %2612 = vmatmul.mubr.bf16.gmra.mrb[0].mxu0 %v2136
      %v2613 = vpop.f32.mrb[0].mxu0
      %v2614 = vadd.f32 0.0, %v2613
      %v2615 = vpop.f32.mrb[0].mxu0
      %v2616 = vpop.f32.mrb[0].mxu0
      %v2617 = vadd.f32 0.0, %v2616
      %v2618 = vpop.f32.mrb[0].mxu0
      %2619 = vmatprep.mubr.bf16.mxu0 0
      %2620 = vmatmul.mubr.bf16.gmra.mrb[0].mxu0 %v2139
      %v2621 = vpop.f32.mrb[0].mxu0
      %v2622 = vadd.f32 0.0, %v2621
      %v2623 = vpop.f32.mrb[0].mxu0
      %v2624 = vpop.f32.mrb[0].mxu0
      %v2625 = vadd.f32 0.0, %v2624
      %v2626 = vpop.f32.mrb[0].mxu0
      %2627 = vmatprep.mubr.bf16.mxu0 0
      %2628 = vmatmul.mubr.bf16.gmra.mrb[0].mxu0 %v2142
      %v2629 = vpop.f32.mrb[0].mxu0
      %v2630 = vadd.f32 0.0, %v2629
      %v2631 = vpop.f32.mrb[0].mxu0
      %v2632 = vpop.f32.mrb[0].mxu0
      %v2633 = vadd.f32 0.0, %v2632
      %v2634 = vpop.f32.mrb[0].mxu0
      %2635 = vmatprep.mubr.bf16.mxu0 0
      %2636 = vmatmul.mubr.bf16.gmra.mrb[0].mxu0 %v2145
      %v2637 = vpop.f32.mrb[0].mxu0
      %v2638 = vadd.f32 0.0, %v2637
      %v2639 = vpop.f32.mrb[0].mxu0
      %v2640 = vpop.f32.mrb[0].mxu0
      %v2641 = vadd.f32 0.0, %v2640
      %v2642 = vpop.f32.mrb[0].mxu0
      %2643 = vmatprep.mubr.bf16.mxu0 0
      %2644 = vmatmul.mubr.bf16.gmra.mrb[0].mxu0 %v2148
      %v2645 = vpop.f32.mrb[0].mxu0
      %v2646 = vadd.f32 0.0, %v2645
      %v2647 = vpop.f32.mrb[0].mxu0
      %v2648 = vpop.f32.mrb[0].mxu0
      %v2649 = vadd.f32 0.0, %v2648
      %v2650 = vpop.f32.mrb[0].mxu0
      %2651 = vmatprep.mubr.bf16.mxu0 0
      %2652 = vmatmul.mubr.bf16.gmra.mrb[0].mxu0 %v2151
      %v2653 = vpop.f32.mrb[0].mxu0
      %v2654 = vadd.f32 0.0, %v2653
      %v2655 = vpop.f32.mrb[0].mxu0
      %v2656 = vpop.f32.mrb[0].mxu0
      %v2657 = vadd.f32 0.0, %v2656
      %v2658 = vpop.f32.mrb[0].mxu0
      %2659 = vmatprep.mubr.bf16.mxu0 0
      %2660 = vmatmul.mubr.bf16.gmra.mrb[0].mxu0 %v2154
      %v2661 = vpop.f32.mrb[0].mxu0
      %v2662 = vadd.f32 0.0, %v2661
      %v2663 = vpop.f32.mrb[0].mxu0
      %v2664 = vpop.f32.mrb[0].mxu0
      %v2665 = vadd.f32 0.0, %v2664
      %v2666 = vpop.f32.mrb[0].mxu0
      %2667 = vmatprep.mubr.bf16.mxu0 0
      %2668 = vmatmul.mubr.bf16.gmra.mrb[0].mxu0 %v2157
      %v2669 = vpop.f32.mrb[0].mxu0
      %v2670 = vadd.f32 0.0, %v2669
      %v2671 = vpop.f32.mrb[0].mxu0
      %v2672 = vpop.f32.mrb[0].mxu0
      %v2673 = vadd.f32 0.0, %v2672
      %v2674 = vpop.f32.mrb[0].mxu0
      %2675 = vmatprep.mubr.bf16.mxu0 0
      %2676 = vmatmul.mubr.bf16.gmra.mrb[0].mxu0 %v2160
      %v2677 = vpop.f32.mrb[0].mxu0
      %v2678 = vadd.f32 0.0, %v2677
      %v2679 = vpop.f32.mrb[0].mxu0
      %v2680 = vpop.f32.mrb[0].mxu0
      %v2681 = vadd.f32 0.0, %v2680
      %v2682 = vpop.f32.mrb[0].mxu0
      %2683 = vmatprep.mubr.bf16.mxu0 0
      %2684 = vmatmul.mubr.bf16.gmra.mrb[0].mxu0 %v2531
      %v2685 = vpop.f32.mrb[0].mxu0
      %v2686 = vadd.f32 0.0, %v2685
      %v2687 = vpop.f32.mrb[0].mxu0
      %v2688 = vpop.f32.mrb[0].mxu0
      %v2689 = vadd.f32 0.0, %v2688
      %v2690 = vpop.f32.mrb[0].mxu0
      %2691 = vmatprep.mubr.bf16.mxu0 0
      %2692 = vmatmul.mubr.bf16.gmra.mrb[0].mxu0 %v2534
      %v2693 = vpop.f32.mrb[0].mxu0
      %v2694 = vadd.f32 0.0, %v2693
      %v2695 = vpop.f32.mrb[0].mxu0
      %v2696 = vpop.f32.mrb[0].mxu0
      %v2697 = vadd.f32 0.0, %v2696
      %v2698 = vpop.f32.mrb[0].mxu0
      %2699 = vdwg.mxu0
      %v2700 = vadd.f32 %v2376, %v2574
      %v2701 = vadd.f32 %v2379, %v2577
      %v2702 = vadd.f32 %v2384, %v2582
      %v2703 = vadd.f32 %v2387, %v2585
      %v2704 = vadd.f32 %v2392, %v2590
      %v2705 = vadd.f32 %v2395, %v2593
      %v2706 = vadd.f32 %v2400, %v2598
      %v2707 = vadd.f32 %v2403, %v2601
      %v2708 = vadd.f32 %v2408, %v2606
      %v2709 = vadd.f32 %v2411, %v2609
      %v2710 = vadd.f32 %v2416, %v2614
      %v2711 = vadd.f32 %v2419, %v2617
      %v2712 = vadd.f32 %v2424, %v2622
      %v2713 = vadd.f32 %v2427, %v2625
      %v2714 = vadd.f32 %v2432, %v2630
      %v2715 = vadd.f32 %v2435, %v2633
      %v2716 = vadd.f32 %v2440, %v2638
      %v2717 = vadd.f32 %v2443, %v2641
      %v2718 = vadd.f32 %v2448, %v2646
      %v2719 = vadd.f32 %v2451, %v2649
      %v2720 = vadd.f32 %v2456, %v2654
      %v2721 = vadd.f32 %v2459, %v2657
      %v2722 = vadd.f32 %v2464, %v2662
      %v2723 = vadd.f32 %v2467, %v2665
      %v2724 = vadd.f32 %v2472, %v2670
      %v2725 = vadd.f32 %v2475, %v2673
      %v2726 = vadd.f32 %v2480, %v2678
      %v2727 = vadd.f32 %v2483, %v2681
      %v2728 = vadd.f32 %v2488, %v2686
      %v2729 = vadd.f32 %v2491, %v2689
      %v2730 = vadd.f32 %v2496, %v2694
      %v2731 = vadd.f32 %v2499, %v2697
      %v2732 = vld [vmem:[%s246] sm:$0xff]
      %v2733 = vld [vmem:[%s246 + $0x8] sm:$0xff]
      %v2734 = vld [vmem:[%s246 + $0x10] sm:$0xff]
      %v2735 = vld [vmem:[%s246 + $0x18] sm:$0xff]
      %v2736 = vld [vmem:[%s246 + $0x20] sm:$0xff]
      %v2737 = vld [vmem:[%s246 + $0x28] sm:$0xff]
      %v2738 = vld [vmem:[%s246 + $0x30] sm:$0xff]
      %v2739 = vld [vmem:[%s246 + $0x38] sm:$0xff]
      %v2740 = vld [vmem:[%s246 + $0x40] sm:$0xff]
      %v2741 = vld [vmem:[%s246 + $0x48] sm:$0xff]
      %v2742 = vld [vmem:[%s246 + $0x50] sm:$0xff]
      %v2743 = vld [vmem:[%s246 + $0x58] sm:$0xff]
      %v2744 = vld [vmem:[%s246 + $0x60] sm:$0xff]
      %v2745 = vld [vmem:[%s246 + $0x68] sm:$0xff]
      %v2746 = vld [vmem:[%s246 + $0x70] sm:$0xff]
      %v2747 = vld [vmem:[%s246 + $0x78] sm:$0xff]
      %v2748 = vld [vmem:[%s246 + $0x80] sm:$0xff]
      %v2749 = vld [vmem:[%s246 + $0x88] sm:$0xff]
      %v2750 = vld [vmem:[%s246 + $0x90] sm:$0xff]
      %v2751 = vld [vmem:[%s246 + $0x98] sm:$0xff]
      %v2752 = vld [vmem:[%s246 + $0xa0] sm:$0xff]
      %v2753 = vld [vmem:[%s246 + $0xa8] sm:$0xff]
      %v2754 = vld [vmem:[%s246 + $0xb0] sm:$0xff]
      %v2755 = vld [vmem:[%s246 + $0xb8] sm:$0xff]
      %v2756 = vld [vmem:[%s246 + $0xc0] sm:$0xff]
      %v2757 = vld [vmem:[%s246 + $0xc8] sm:$0xff]
      %v2758 = vld [vmem:[%s246 + $0xd0] sm:$0xff]
      %v2759 = vld [vmem:[%s246 + $0xd8] sm:$0xff]
      %v2760 = vld [vmem:[%s246 + $0xe0] sm:$0xff]
      %v2761 = vld [vmem:[%s246 + $0xe8] sm:$0xff]
      %v2762 = vld [vmem:[%s246 + $0xf0] sm:$0xff]
      %v2763 = vld [vmem:[%s246 + $0xf8] sm:$0xff]
      %v2764 = vadd.f32 %v2732, %v2700
      %v2765 = vadd.f32 %v2733, %v2701
      %v2766 = vadd.f32 %v2734, %v2702
      %v2767 = vadd.f32 %v2735, %v2703
      %v2768 = vadd.f32 %v2736, %v2704
      %v2769 = vadd.f32 %v2737, %v2705
      %v2770 = vadd.f32 %v2738, %v2706
      %v2771 = vadd.f32 %v2739, %v2707
      %v2772 = vadd.f32 %v2740, %v2708
      %v2773 = vadd.f32 %v2741, %v2709
      %v2774 = vadd.f32 %v2742, %v2710
      %v2775 = vadd.f32 %v2743, %v2711
      %v2776 = vadd.f32 %v2744, %v2712
      %v2777 = vadd.f32 %v2745, %v2713
      %v2778 = vadd.f32 %v2746, %v2714
      %v2779 = vadd.f32 %v2747, %v2715
      %v2780 = vadd.f32 %v2748, %v2716
      %v2781 = vadd.f32 %v2749, %v2717
      %v2782 = vadd.f32 %v2750, %v2718
      %v2783 = vadd.f32 %v2751, %v2719
      %v2784 = vadd.f32 %v2752, %v2720
      %v2785 = vadd.f32 %v2753, %v2721
      %v2786 = vadd.f32 %v2754, %v2722
      %v2787 = vadd.f32 %v2755, %v2723
      %v2788 = vadd.f32 %v2756, %v2724
      %v2789 = vadd.f32 %v2757, %v2725
      %v2790 = vadd.f32 %v2758, %v2726
      %v2791 = vadd.f32 %v2759, %v2727
      %v2792 = vadd.f32 %v2760, %v2728
      %v2793 = vadd.f32 %v2761, %v2729
      %v2794 = vadd.f32 %v2762, %v2730
      %v2795 = vadd.f32 %v2763, %v2731
      %2796 = vst.msk [vmem:[%s246] sm:$0xff] %vm442, %v2764
      %2797 = vst.msk [vmem:[%s246 + $0x8] sm:$0xff] %vm442, %v2765
      %2798 = vst.msk [vmem:[%s246 + $0x10] sm:$0xff] %vm442, %v2766
      %2799 = vst.msk [vmem:[%s246 + $0x18] sm:$0xff] %vm442, %v2767
      %2800 = vst.msk [vmem:[%s246 + $0x20] sm:$0xff] %vm442, %v2768
      %2801 = vst.msk [vmem:[%s246 + $0x28] sm:$0xff] %vm442, %v2769
      %2802 = vst.msk [vmem:[%s246 + $0x30] sm:$0xff] %vm442, %v2770
      %2803 = vst.msk [vmem:[%s246 + $0x38] sm:$0xff] %vm442, %v2771
      %2804 = vst.msk [vmem:[%s246 + $0x40] sm:$0xff] %vm442, %v2772
      %2805 = vst.msk [vmem:[%s246 + $0x48] sm:$0xff] %vm442, %v2773
      %2806 = vst.msk [vmem:[%s246 + $0x50] sm:$0xff] %vm442, %v2774
      %2807 = vst.msk [vmem:[%s246 + $0x58] sm:$0xff] %vm442, %v2775
      %2808 = vst.msk [vmem:[%s246 + $0x60] sm:$0xff] %vm442, %v2776
      %2809 = vst.msk [vmem:[%s246 + $0x68] sm:$0xff] %vm442, %v2777
      %2810 = vst.msk [vmem:[%s246 + $0x70] sm:$0xff] %vm442, %v2778
      %2811 = vst.msk [vmem:[%s246 + $0x78] sm:$0xff] %vm442, %v2779
      %2812 = vst.msk [vmem:[%s246 + $0x80] sm:$0xff] %vm442, %v2780
      %2813 = vst.msk [vmem:[%s246 + $0x88] sm:$0xff] %vm442, %v2781
      %2814 = vst.msk [vmem:[%s246 + $0x90] sm:$0xff] %vm442, %v2782
      %2815 = vst.msk [vmem:[%s246 + $0x98] sm:$0xff] %vm442, %v2783
      %2816 = vst.msk [vmem:[%s246 + $0xa0] sm:$0xff] %vm442, %v2784
      %2817 = vst.msk [vmem:[%s246 + $0xa8] sm:$0xff] %vm442, %v2785
      %2818 = vst.msk [vmem:[%s246 + $0xb0] sm:$0xff] %vm442, %v2786
      %2819 = vst.msk [vmem:[%s246 + $0xb8] sm:$0xff] %vm442, %v2787
      %2820 = vst.msk [vmem:[%s246 + $0xc0] sm:$0xff] %vm442, %v2788
      %2821 = vst.msk [vmem:[%s246 + $0xc8] sm:$0xff] %vm442, %v2789
      %2822 = vst.msk [vmem:[%s246 + $0xd0] sm:$0xff] %vm442, %v2790
      %2823 = vst.msk [vmem:[%s246 + $0xd8] sm:$0xff] %vm442, %v2791
      %2824 = vst.msk [vmem:[%s246 + $0xe0] sm:$0xff] %vm442, %v2792
      %2825 = vst.msk [vmem:[%s246 + $0xe8] sm:$0xff] %vm442, %v2793
      %2826 = vst.msk [vmem:[%s246 + $0xf0] sm:$0xff] %vm442, %v2794
      %2827 = vst.msk [vmem:[%s246 + $0xf8] sm:$0xff] %vm442, %v2795
      %v2828 = vld [vmem:[#allocation2] sm:$0xc]
      %v2829 = vld [vmem:[#allocation2 + $0x4] sm:$0xf]
      %v2830 = vld [vmem:[#allocation2 + $0x8] sm:$0x3]
      %v2831 = vld [vmem:[#allocation2 + $0xc] sm:$0xc]
      %v2832 = vld [vmem:[#allocation2 + $0x10] sm:$0xf]
      %v2833 = vld [vmem:[#allocation2 + $0x14] sm:$0x3]
      %v2834 = vld [vmem:[#allocation2 + $0x18] sm:$0xc]
      %v2835 = vld [vmem:[#allocation2 + $0x1c] sm:$0xf]
      %v2836 = vld [vmem:[#allocation2 + $0x20] sm:$0x3]
      %v2837 = vld [vmem:[#allocation2 + $0x24] sm:$0xc]
      %v2838 = vld [vmem:[#allocation2 + $0x28] sm:$0xf]
      %v2839 = vld [vmem:[#allocation2 + $0x2c] sm:$0x3]
      %v2840 = vld [vmem:[#allocation2 + $0x30] sm:$0xc]
      %v2841 = vld [vmem:[#allocation2 + $0x34] sm:$0xf]
      %v2842 = vld [vmem:[#allocation2 + $0x38] sm:$0x3]
      %v2843 = vld [vmem:[#allocation2 + $0x3c] sm:$0xc]
      %v2844 = vld [vmem:[#allocation2 + $0x40] sm:$0xf]
      %v2845 = vld [vmem:[#allocation2 + $0x44] sm:$0x3]
      %v2846 = vld [vmem:[#allocation2 + $0x48] sm:$0xc]
      %v2847 = vld [vmem:[#allocation2 + $0x4c] sm:$0xf]
      %v2848 = vld [vmem:[#allocation2 + $0x50] sm:$0x3]
      %v2849 = vld [vmem:[#allocation2 + $0x54] sm:$0xc]
      %v2850 = vld [vmem:[#allocation2 + $0x58] sm:$0xf]
      %v2851 = vld [vmem:[#allocation2 + $0x5c] sm:$0x3]
      %v2852 = vld [vmem:[#allocation2 + $0x60] sm:$0xc]
      %v2853 = vld [vmem:[#allocation2 + $0x64] sm:$0xf]
      %v2854 = vld [vmem:[#allocation2 + $0x68] sm:$0x3]
      %v2855 = vld [vmem:[#allocation2 + $0x6c] sm:$0xc]
      %v2856 = vld [vmem:[#allocation2 + $0x70] sm:$0xf]
      %v2857 = vld [vmem:[#allocation2 + $0x74] sm:$0x3]
      %v2858 = vld [vmem:[#allocation2 + $0x78] sm:$0xc]
      %v2859 = vld [vmem:[#allocation2 + $0x7c] sm:$0xf]
      %v2860 = vld [vmem:[#allocation2 + $0x80] sm:$0x3]
      %v2861 = vld [vmem:[#allocation2 + $0x84] sm:$0xc]
      %v2862 = vld [vmem:[#allocation2 + $0x88] sm:$0xf]
      %v2863 = vld [vmem:[#allocation2 + $0x8c] sm:$0x3]
      %v2864 = vld [vmem:[#allocation2 + $0x90] sm:$0xc]
      %v2865 = vld [vmem:[#allocation2 + $0x94] sm:$0xf]
      %v2866 = vld [vmem:[#allocation2 + $0x98] sm:$0x3]
      %v2867 = vld [vmem:[#allocation2 + $0x9c] sm:$0xc]
      %v2868 = vld [vmem:[#allocation2 + $0xa0] sm:$0xf]
      %v2869 = vld [vmem:[#allocation2 + $0xa4] sm:$0x3]
      %v2870 = vld [vmem:[#allocation2 + $0xa8] sm:$0xc]
      %v2871 = vld [vmem:[#allocation2 + $0xac] sm:$0xf]
      %v2872 = vld [vmem:[#allocation2 + $0xb0] sm:$0x3]
      %v2873 = vld [vmem:[#allocation2 + $0xb4] sm:$0xc]
      %v2874 = vld [vmem:[#allocation2 + $0xb8] sm:$0xf]
      %v2875 = vld [vmem:[#allocation2 + $0xbc] sm:$0x3]
      %v2876 = vld [vmem:[#allocation2 + $0xc0] sm:$0xc]
      %v2877 = vld [vmem:[#allocation2 + $0xc4] sm:$0xf]
      %v2878 = vld [vmem:[#allocation2 + $0xc8] sm:$0x3]
      %v2879 = vld [vmem:[#allocation2 + $0xcc] sm:$0xc]
      %v2880 = vld [vmem:[#allocation2 + $0xd0] sm:$0xf]
      %v2881 = vld [vmem:[#allocation2 + $0xd4] sm:$0x3]
      %v2882 = vld [vmem:[#allocation2 + $0xd8] sm:$0xc]
      %v2883 = vld [vmem:[#allocation2 + $0xdc] sm:$0xf]
      %v2884 = vld [vmem:[#allocation2 + $0xe0] sm:$0x3]
      %v2885 = vld [vmem:[#allocation2 + $0xe4] sm:$0xc]
      %v2886 = vld [vmem:[#allocation2 + $0xe8] sm:$0xf]
      %v2887 = vld [vmem:[#allocation2 + $0xec] sm:$0x3]
      %vm2936 = vcmask 1041408
      %vm2937 = vcmask 1045508
      %vm2938 = vmor %vm2936, %vm2937
      %v2939 = vrot.slane %v2828, 6
      %v2940 = vrot.slane %v2939, 4
      %v2941 = vrot.slane %v2829, 6
      %v2942 = vsel %vm2938, %v2940, %v2941
      %v2943 = vrot.slane %v2941, 4
      %v2944 = vrot.slane %v2830, 6
      %v2945 = vsel %vm2938, %v2943, %v2944
      %v2946 = vrot.slane %v2831, 6
      %v2947 = vrot.slane %v2946, 4
      %v2948 = vrot.slane %v2832, 6
      %v2949 = vsel %vm2938, %v2947, %v2948
      %v2950 = vrot.slane %v2948, 4
      %v2951 = vrot.slane %v2833, 6
      %v2952 = vsel %vm2938, %v2950, %v2951
      %v2953 = vrot.slane %v2834, 6
      %v2954 = vrot.slane %v2953, 4
      %v2955 = vrot.slane %v2835, 6
      %v2956 = vsel %vm2938, %v2954, %v2955
      %v2957 = vrot.slane %v2955, 4
      %v2958 = vrot.slane %v2836, 6
      %v2959 = vsel %vm2938, %v2957, %v2958
      %v2960 = vrot.slane %v2837, 6
      %v2961 = vrot.slane %v2960, 4
      %v2962 = vrot.slane %v2838, 6
      %v2963 = vsel %vm2938, %v2961, %v2962
      %v2964 = vrot.slane %v2962, 4
      %v2965 = vrot.slane %v2839, 6
      %v2966 = vsel %vm2938, %v2964, %v2965
      %v2967 = vrot.slane %v2840, 6
      %v2968 = vrot.slane %v2967, 4
      %v2969 = vrot.slane %v2841, 6
      %v2970 = vsel %vm2938, %v2968, %v2969
      %v2971 = vrot.slane %v2969, 4
      %v2972 = vrot.slane %v2842, 6
      %v2973 = vsel %vm2938, %v2971, %v2972
      %v2974 = vrot.slane %v2843, 6
      %v2975 = vrot.slane %v2974, 4
      %v2976 = vrot.slane %v2844, 6
      %v2977 = vsel %vm2938, %v2975, %v2976
      %v2978 = vrot.slane %v2976, 4
      %v2979 = vrot.slane %v2845, 6
      %v2980 = vsel %vm2938, %v2978, %v2979
      %v2981 = vrot.slane %v2846, 6
      %v2982 = vrot.slane %v2981, 4
      %v2983 = vrot.slane %v2847, 6
      %v2984 = vsel %vm2938, %v2982, %v2983
      %v2985 = vrot.slane %v2983, 4
      %v2986 = vrot.slane %v2848, 6
      %v2987 = vsel %vm2938, %v2985, %v2986
      %v2988 = vrot.slane %v2849, 6
      %v2989 = vrot.slane %v2988, 4
      %v2990 = vrot.slane %v2850, 6
      %v2991 = vsel %vm2938, %v2989, %v2990
      %v2992 = vrot.slane %v2990, 4
      %v2993 = vrot.slane %v2851, 6
      %v2994 = vsel %vm2938, %v2992, %v2993
      %v2995 = vrot.slane %v2852, 6
      %v2996 = vrot.slane %v2995, 4
      %v2997 = vrot.slane %v2853, 6
      %v2998 = vsel %vm2938, %v2996, %v2997
      %v2999 = vrot.slane %v2997, 4
      %v3000 = vrot.slane %v2854, 6
      %v3001 = vsel %vm2938, %v2999, %v3000
      %v3002 = vrot.slane %v2855, 6
      %v3003 = vrot.slane %v3002, 4
      %v3004 = vrot.slane %v2856, 6
      %v3005 = vsel %vm2938, %v3003, %v3004
      %v3006 = vrot.slane %v3004, 4
      %v3007 = vrot.slane %v2857, 6
      %v3008 = vsel %vm2938, %v3006, %v3007
      %v3009 = vrot.slane %v2858, 6
      %v3010 = vrot.slane %v3009, 4
      %v3011 = vrot.slane %v2859, 6
      %v3012 = vsel %vm2938, %v3010, %v3011
      %v3013 = vrot.slane %v3011, 4
      %v3014 = vrot.slane %v2860, 6
      %v3015 = vsel %vm2938, %v3013, %v3014
      %v3016 = vrot.slane %v2861, 6
      %v3017 = vrot.slane %v3016, 4
      %v3018 = vrot.slane %v2862, 6
      %v3019 = vsel %vm2938, %v3017, %v3018
      %v3020 = vrot.slane %v3018, 4
      %v3021 = vrot.slane %v2863, 6
      %v3022 = vsel %vm2938, %v3020, %v3021
      %v3023 = vrot.slane %v2864, 6
      %v3024 = vrot.slane %v3023, 4
      %v3025 = vrot.slane %v2865, 6
      %v3026 = vsel %vm2938, %v3024, %v3025
      %v3027 = vrot.slane %v3025, 4
      %v3028 = vrot.slane %v2866, 6
      %v3029 = vsel %vm2938, %v3027, %v3028
      %v3030 = vrot.slane %v2867, 6
      %v3031 = vrot.slane %v3030, 4
      %v3032 = vrot.slane %v2868, 6
      %v3033 = vsel %vm2938, %v3031, %v3032
      %v3034 = vrot.slane %v3032, 4
      %v3035 = vrot.slane %v2869, 6
      %v3036 = vsel %vm2938, %v3034, %v3035
      %v3037 = vrot.slane %v2870, 6
      %v3038 = vrot.slane %v3037, 4
      %v3039 = vrot.slane %v2871, 6
      %v3040 = vsel %vm2938, %v3038, %v3039
      %v3041 = vrot.slane %v3039, 4
      %v3042 = vrot.slane %v2872, 6
      %v3043 = vsel %vm2938, %v3041, %v3042
      %v3044 = vrot.slane %v2873, 6
      %v3045 = vrot.slane %v3044, 4
      %v3046 = vrot.slane %v2874, 6
      %v3047 = vsel %vm2938, %v3045, %v3046
      %v3048 = vrot.slane %v3046, 4
      %v3049 = vrot.slane %v2875, 6
      %v3050 = vsel %vm2938, %v3048, %v3049
      %s3051 = scalar_lea.vmem %s4, 8
      %v3052 = vld [vmem:[%s3051] sm:$0xf]
      %v3059 = vrot.slane %v2876, 6
      %v3060 = vrot.slane %v3059, 4
      %v3061 = vrot.slane %v2877, 6
      %v3062 = vsel %vm2938, %v3060, %v3061
      %v3063 = vrot.slane %v3061, 4
      %v3064 = vrot.slane %v2878, 6
      %v3065 = vsel %vm2938, %v3063, %v3064
      %v3066 = vrot.slane %v2879, 6
      %v3067 = vrot.slane %v3066, 4
      %v3068 = vrot.slane %v2880, 6
      %v3069 = vsel %vm2938, %v3067, %v3068
      %v3070 = vrot.slane %v3068, 4
      %v3071 = vrot.slane %v2881, 6
      %v3072 = vsel %vm2938, %v3070, %v3071
      %s3073 = scalar_lea.vmem %s4, 20
      %v3074 = vld [vmem:[%s3073] sm:$0xf]
      %v3075 = vunpack.c.l.b16 %v2956
      %v3076 = vunpack.c.l.b16 %v2959
      %v3077 = vunpack.c.l.b16 %v2963
      %v3078 = vunpack.c.l.b16 %v2966
      %v3079 = vunpack.c.l.b16 %v2970
      %v3080 = vunpack.c.l.b16 %v2973
      %v3081 = vunpack.c.l.b16 %v2977
      %v3082 = vunpack.c.l.b16 %v2980
      %v3083 = vunpack.c.l.b16 %v2984
      %v3084 = vunpack.c.l.b16 %v2987
      %v3085 = vunpack.c.l.b16 %v2991
      %v3086 = vunpack.c.l.b16 %v2994
      %v3087 = vunpack.c.l.b16 %v2998
      %v3088 = vunpack.c.l.b16 %v3001
      %v3089 = vunpack.c.l.b16 %v3005
      %v3090 = vunpack.c.l.b16 %v3008
      %v3091 = vunpack.c.l.b16 %v3012
      %v3092 = vunpack.c.l.b16 %v3015
      %v3093 = vunpack.c.l.b16 %v3019
      %v3094 = vunpack.c.l.b16 %v3022
      %v3095 = vunpack.c.l.b16 %v3026
      %v3096 = vunpack.c.l.b16 %v3029
      %v3097 = vunpack.c.l.b16 %v3033
      %v3098 = vunpack.c.l.b16 %v3036
      %v3099 = vunpack.c.l.b16 %v3040
      %v3100 = vunpack.c.l.b16 %v3043
      %v3101 = vunpack.c.l.b16 %v3047
      %v3102 = vunpack.c.l.b16 %v3050
      %v3103 = vunpack.c.l.b16 %v3062
      %v3104 = vunpack.c.l.b16 %v3065
      %v3105 = vunpack.c.l.b16 %v3069
      %v3106 = vunpack.c.l.b16 %v3072
      %v3107 = vpack.c.b16 %v3076, %v3075
      %v3108 = vpack.c.b16 %v3078, %v3077
      %v3109 = vpack.c.b16 %v3080, %v3079
      %v3110 = vpack.c.b16 %v3082, %v3081
      %v3111 = vpack.c.b16 %v3084, %v3083
      %v3112 = vpack.c.b16 %v3086, %v3085
      %v3113 = vpack.c.b16 %v3088, %v3087
      %v3114 = vpack.c.b16 %v3090, %v3089
      %v3115 = vpack.c.b16 %v3092, %v3091
      %v3116 = vpack.c.b16 %v3094, %v3093
      %v3117 = vpack.c.b16 %v3096, %v3095
      %v3118 = vpack.c.b16 %v3098, %v3097
      %v3119 = vpack.c.b16 %v3100, %v3099
      %v3120 = vpack.c.b16 %v3102, %v3101
      %v3121 = vpack.c.b16 %v3104, %v3103
      %v3122 = vpack.c.b16 %v3106, %v3105
      %v3124 = vsel %vm1179, %v3107, 0
      %v3127 = vsel %vm1179, %v3108, 0
      %v3130 = vsel %vm1179, %v3109, 0
      %v3133 = vsel %vm1179, %v3110, 0
      %v3136 = vsel %vm1179, %v3111, 0
      %v3139 = vsel %vm1179, %v3112, 0
      %v3142 = vsel %vm1179, %v3113, 0
      %v3145 = vsel %vm1179, %v3114, 0
      %v3148 = vsel %vm1179, %v3115, 0
      %v3151 = vsel %vm1179, %v3116, 0
      %v3154 = vsel %vm1179, %v3117, 0
      %v3157 = vsel %vm1179, %v3118, 0
      %v3160 = vsel %vm1179, %v3119, 0
      %v3163 = vsel %vm1179, %v3120, 0
      %v3166 = vsel %vm1179, %v3121, 0
      %v3169 = vsel %vm1179, %v3122, 0
      %v3172 = vsel %vm1228, %v3074, 0
      %3174 = vmatprep.subr.bf16.mxu0 0
      %3175 = vmatpush1.bf16.msra.mxu0 %v3172
      %3176 = vmatprep.subr.bf16.mxu0 0
      %3177 = vmatpush1.bf16.msra.mxu0 0
      %3178 = vmatprep.subr.bf16.mxu0 0
      %3179 = vmatpush1.bf16.msra.mxu0 0
      %3180 = vmatprep.subr.bf16.mxu0 0
      %3181 = vmatpush1.bf16.msra.mxu0 0
      %3182 = vmatprep.subr.bf16.mxu0 0
      %3183 = vmatpush1.bf16.msra.mxu0 0
      %3184 = vmatprep.subr.bf16.mxu0 0
      %3185 = vmatpush1.bf16.msra.mxu0 0
      %3186 = vmatprep.subr.bf16.mxu0 0
      %3187 = vmatpush1.bf16.msra.mxu0 0
      %3188 = vmatprep.subr.bf16.mxu0 0
      %3189 = vmatpush1.bf16.msra.mxu0 0
      %3190 = vmatprep.subr.bf16.mxu0 0
      %3191 = vmatpush1.bf16.msra.mxu0 0
      %3192 = vmatprep.subr.bf16.mxu0 0
      %3193 = vmatpush1.bf16.msra.mxu0 0
      %3194 = vmatprep.subr.bf16.mxu0 0
      %3195 = vmatpush1.bf16.msra.mxu0 0
      %3196 = vmatprep.subr.bf16.mxu0 0
      %3197 = vmatpush1.bf16.msra.mxu0 0
      %3198 = vmatprep.subr.bf16.mxu0 0
      %3199 = vmatpush1.bf16.msra.mxu0 0
      %3200 = vmatprep.subr.bf16.mxu0 0
      %3201 = vmatpush1.bf16.msra.mxu0 0
      %3202 = vmatprep.subr.bf16.mxu0 0
      %3203 = vmatpush1.bf16.msra.mxu0 0
      %3204 = vmatprep.subr.bf16.mxu0 0
      %3205 = vmatpush1.bf16.msra.mxu0 0
      %3206 = vmatprep.mubr.bf16.mxu0 0
      %3207 = vmatmul.mubr.bf16.gmra.mrb[0].mxu0 %v3124
      %v3208 = vpop.f32.mrb[0].mxu0
      %v3209 = vadd.f32 0.0, %v3208
      %v3210 = vpop.f32.mrb[0].mxu0
      %v3211 = vpop.f32.mrb[0].mxu0
      %v3212 = vadd.f32 0.0, %v3211
      %v3213 = vpop.f32.mrb[0].mxu0
      %3214 = vmatprep.mubr.bf16.mxu0 0
      %3215 = vmatmul.mubr.bf16.gmra.mrb[0].mxu0 %v3127
      %v3216 = vpop.f32.mrb[0].mxu0
      %v3217 = vadd.f32 0.0, %v3216
      %v3218 = vpop.f32.mrb[0].mxu0
      %v3219 = vpop.f32.mrb[0].mxu0
      %v3220 = vadd.f32 0.0, %v3219
      %v3221 = vpop.f32.mrb[0].mxu0
      %3222 = vmatprep.mubr.bf16.mxu0 0
      %3223 = vmatmul.mubr.bf16.gmra.mrb[0].mxu0 %v3130
      %v3224 = vpop.f32.mrb[0].mxu0
      %v3225 = vadd.f32 0.0, %v3224
      %v3226 = vpop.f32.mrb[0].mxu0
      %v3227 = vpop.f32.mrb[0].mxu0
      %v3228 = vadd.f32 0.0, %v3227
      %v3229 = vpop.f32.mrb[0].mxu0
      %3230 = vmatprep.mubr.bf16.mxu0 0
      %3231 = vmatmul.mubr.bf16.gmra.mrb[0].mxu0 %v3133
      %v3232 = vpop.f32.mrb[0].mxu0
      %v3233 = vadd.f32 0.0, %v3232
      %v3234 = vpop.f32.mrb[0].mxu0
      %v3235 = vpop.f32.mrb[0].mxu0
      %v3236 = vadd.f32 0.0, %v3235
      %v3237 = vpop.f32.mrb[0].mxu0
      %3238 = vmatprep.mubr.bf16.mxu0 0
      %3239 = vmatmul.mubr.bf16.gmra.mrb[0].mxu0 %v3136
      %v3240 = vpop.f32.mrb[0].mxu0
      %v3241 = vadd.f32 0.0, %v3240
      %v3242 = vpop.f32.mrb[0].mxu0
      %v3243 = vpop.f32.mrb[0].mxu0
      %v3244 = vadd.f32 0.0, %v3243
      %v3245 = vpop.f32.mrb[0].mxu0
      %3246 = vmatprep.mubr.bf16.mxu0 0
      %3247 = vmatmul.mubr.bf16.gmra.mrb[0].mxu0 %v3139
      %v3248 = vpop.f32.mrb[0].mxu0
      %v3249 = vadd.f32 0.0, %v3248
      %v3250 = vpop.f32.mrb[0].mxu0
      %v3251 = vpop.f32.mrb[0].mxu0
      %v3252 = vadd.f32 0.0, %v3251
      %v3253 = vpop.f32.mrb[0].mxu0
      %3254 = vmatprep.mubr.bf16.mxu0 0
      %3255 = vmatmul.mubr.bf16.gmra.mrb[0].mxu0 %v3142
      %v3256 = vpop.f32.mrb[0].mxu0
      %v3257 = vadd.f32 0.0, %v3256
      %v3258 = vpop.f32.mrb[0].mxu0
      %v3259 = vpop.f32.mrb[0].mxu0
      %v3260 = vadd.f32 0.0, %v3259
      %v3261 = vpop.f32.mrb[0].mxu0
      %3262 = vmatprep.mubr.bf16.mxu0 0
      %3263 = vmatmul.mubr.bf16.gmra.mrb[0].mxu0 %v3145
      %v3264 = vpop.f32.mrb[0].mxu0
      %v3265 = vadd.f32 0.0, %v3264
      %v3266 = vpop.f32.mrb[0].mxu0
      %v3267 = vpop.f32.mrb[0].mxu0
      %v3268 = vadd.f32 0.0, %v3267
      %v3269 = vpop.f32.mrb[0].mxu0
      %3270 = vmatprep.mubr.bf16.mxu0 0
      %3271 = vmatmul.mubr.bf16.gmra.mrb[0].mxu0 %v3148
      %v3272 = vpop.f32.mrb[0].mxu0
      %v3273 = vadd.f32 0.0, %v3272
      %v3274 = vpop.f32.mrb[0].mxu0
      %v3275 = vpop.f32.mrb[0].mxu0
      %v3276 = vadd.f32 0.0, %v3275
      %v3277 = vpop.f32.mrb[0].mxu0
      %3278 = vmatprep.mubr.bf16.mxu0 0
      %3279 = vmatmul.mubr.bf16.gmra.mrb[0].mxu0 %v3151
      %v3280 = vpop.f32.mrb[0].mxu0
      %v3281 = vadd.f32 0.0, %v3280
      %v3282 = vpop.f32.mrb[0].mxu0
      %v3283 = vpop.f32.mrb[0].mxu0
      %v3284 = vadd.f32 0.0, %v3283
      %v3285 = vpop.f32.mrb[0].mxu0
      %3286 = vmatprep.mubr.bf16.mxu0 0
      %3287 = vmatmul.mubr.bf16.gmra.mrb[0].mxu0 %v3154
      %v3288 = vpop.f32.mrb[0].mxu0
      %v3289 = vadd.f32 0.0, %v3288
      %v3290 = vpop.f32.mrb[0].mxu0
      %v3291 = vpop.f32.mrb[0].mxu0
      %v3292 = vadd.f32 0.0, %v3291
      %v3293 = vpop.f32.mrb[0].mxu0
      %3294 = vmatprep.mubr.bf16.mxu0 0
      %3295 = vmatmul.mubr.bf16.gmra.mrb[0].mxu0 %v3157
      %v3296 = vpop.f32.mrb[0].mxu0
      %v3297 = vadd.f32 0.0, %v3296
      %v3298 = vpop.f32.mrb[0].mxu0
      %v3299 = vpop.f32.mrb[0].mxu0
      %v3300 = vadd.f32 0.0, %v3299
      %v3301 = vpop.f32.mrb[0].mxu0
      %3302 = vmatprep.mubr.bf16.mxu0 0
      %3303 = vmatmul.mubr.bf16.gmra.mrb[0].mxu0 %v3160
      %v3304 = vpop.f32.mrb[0].mxu0
      %v3305 = vadd.f32 0.0, %v3304
      %v3306 = vpop.f32.mrb[0].mxu0
      %v3307 = vpop.f32.mrb[0].mxu0
      %v3308 = vadd.f32 0.0, %v3307
      %v3309 = vpop.f32.mrb[0].mxu0
      %3310 = vmatprep.mubr.bf16.mxu0 0
      %3311 = vmatmul.mubr.bf16.gmra.mrb[0].mxu0 %v3163
      %v3312 = vpop.f32.mrb[0].mxu0
      %v3313 = vadd.f32 0.0, %v3312
      %v3314 = vpop.f32.mrb[0].mxu0
      %v3315 = vpop.f32.mrb[0].mxu0
      %v3316 = vadd.f32 0.0, %v3315
      %v3317 = vpop.f32.mrb[0].mxu0
      %3318 = vmatprep.mubr.bf16.mxu0 0
      %3319 = vmatmul.mubr.bf16.gmra.mrb[0].mxu0 %v3166
      %v3320 = vpop.f32.mrb[0].mxu0
      %v3321 = vadd.f32 0.0, %v3320
      %v3322 = vpop.f32.mrb[0].mxu0
      %v3323 = vpop.f32.mrb[0].mxu0
      %v3324 = vadd.f32 0.0, %v3323
      %v3325 = vpop.f32.mrb[0].mxu0
      %3326 = vmatprep.mubr.bf16.mxu0 0
      %3327 = vmatmul.mubr.bf16.gmra.mrb[0].mxu0 %v3169
      %v3328 = vpop.f32.mrb[0].mxu0
      %v3329 = vadd.f32 0.0, %v3328
      %v3330 = vpop.f32.mrb[0].mxu0
      %v3331 = vpop.f32.mrb[0].mxu0
      %v3332 = vadd.f32 0.0, %v3331
      %v3333 = vpop.f32.mrb[0].mxu0
      %3334 = vdwg.mxu0
      %v3335 = vunpack.c.l.b16 %v2942
      %v3336 = vunpack.c.l.b16 %v2945
      %v3337 = vunpack.c.l.b16 %v2949
      %v3338 = vunpack.c.l.b16 %v2952
      %v3339 = vpack.c.b16 %v3336, %v3335
      %v3340 = vpack.c.b16 %v3338, %v3337
      %v3342 = vsel %vm1179, %v3339, 0
      %v3345 = vsel %vm1179, %v3340, 0
      %v3348 = vsel %vm1228, %v3052, 0
      %3350 = vmatprep.subr.bf16.mxu0 0
      %3351 = vmatpush1.bf16.msra.mxu0 %v3348
      %3352 = vmatprep.subr.bf16.mxu0 0
      %3353 = vmatpush1.bf16.msra.mxu0 0
      %3354 = vmatprep.subr.bf16.mxu0 0
      %3355 = vmatpush1.bf16.msra.mxu0 0
      %3356 = vmatprep.subr.bf16.mxu0 0
      %3357 = vmatpush1.bf16.msra.mxu0 0
      %3358 = vmatprep.subr.bf16.mxu0 0
      %3359 = vmatpush1.bf16.msra.mxu0 0
      %3360 = vmatprep.subr.bf16.mxu0 0
      %3361 = vmatpush1.bf16.msra.mxu0 0
      %3362 = vmatprep.subr.bf16.mxu0 0
      %3363 = vmatpush1.bf16.msra.mxu0 0
      %3364 = vmatprep.subr.bf16.mxu0 0
      %3365 = vmatpush1.bf16.msra.mxu0 0
      %3366 = vmatprep.subr.bf16.mxu0 0
      %3367 = vmatpush1.bf16.msra.mxu0 0
      %3368 = vmatprep.subr.bf16.mxu0 0
      %3369 = vmatpush1.bf16.msra.mxu0 0
      %3370 = vmatprep.subr.bf16.mxu0 0
      %3371 = vmatpush1.bf16.msra.mxu0 0
      %3372 = vmatprep.subr.bf16.mxu0 0
      %3373 = vmatpush1.bf16.msra.mxu0 0
      %3374 = vmatprep.subr.bf16.mxu0 0
      %3375 = vmatpush1.bf16.msra.mxu0 0
      %3376 = vmatprep.subr.bf16.mxu0 0
      %3377 = vmatpush1.bf16.msra.mxu0 0
      %3378 = vmatprep.subr.bf16.mxu0 0
      %3379 = vmatpush1.bf16.msra.mxu0 0
      %3380 = vmatprep.subr.bf16.mxu0 0
      %3381 = vmatpush1.bf16.msra.mxu0 0
      %3382 = vmatprep.mubr.bf16.mxu0 0
      %3383 = vmatmul.mubr.bf16.gmra.mrb[0].mxu0 %v3342
      %v3384 = vpop.f32.mrb[0].mxu0
      %v3385 = vadd.f32 %v3209, %v3384
      %v3386 = vpop.f32.mrb[0].mxu0
      %v3387 = vpop.f32.mrb[0].mxu0
      %v3388 = vadd.f32 %v3212, %v3387
      %v3389 = vpop.f32.mrb[0].mxu0
      %3390 = vmatprep.mubr.bf16.mxu0 0
      %3391 = vmatmul.mubr.bf16.gmra.mrb[0].mxu0 %v3345
      %v3392 = vpop.f32.mrb[0].mxu0
      %v3393 = vadd.f32 %v3217, %v3392
      %v3394 = vpop.f32.mrb[0].mxu0
      %v3395 = vpop.f32.mrb[0].mxu0
      %v3396 = vadd.f32 %v3220, %v3395
      %v3397 = vpop.f32.mrb[0].mxu0
      %3398 = vmatprep.mubr.bf16.mxu0 0
      %3399 = vmatmul.mubr.bf16.gmra.mrb[0].mxu0 %v3124
      %v3400 = vpop.f32.mrb[0].mxu0
      %v3401 = vadd.f32 %v3225, %v3400
      %v3402 = vpop.f32.mrb[0].mxu0
      %v3403 = vpop.f32.mrb[0].mxu0
      %v3404 = vadd.f32 %v3228, %v3403
      %v3405 = vpop.f32.mrb[0].mxu0
      %3406 = vmatprep.mubr.bf16.mxu0 0
      %3407 = vmatmul.mubr.bf16.gmra.mrb[0].mxu0 %v3127
      %v3408 = vpop.f32.mrb[0].mxu0
      %v3409 = vadd.f32 %v3233, %v3408
      %v3410 = vpop.f32.mrb[0].mxu0
      %v3411 = vpop.f32.mrb[0].mxu0
      %v3412 = vadd.f32 %v3236, %v3411
      %v3413 = vpop.f32.mrb[0].mxu0
      %3414 = vmatprep.mubr.bf16.mxu0 0
      %3415 = vmatmul.mubr.bf16.gmra.mrb[0].mxu0 %v3130
      %v3416 = vpop.f32.mrb[0].mxu0
      %v3417 = vadd.f32 %v3241, %v3416
      %v3418 = vpop.f32.mrb[0].mxu0
      %v3419 = vpop.f32.mrb[0].mxu0
      %v3420 = vadd.f32 %v3244, %v3419
      %v3421 = vpop.f32.mrb[0].mxu0
      %3422 = vmatprep.mubr.bf16.mxu0 0
      %3423 = vmatmul.mubr.bf16.gmra.mrb[0].mxu0 %v3133
      %v3424 = vpop.f32.mrb[0].mxu0
      %v3425 = vadd.f32 %v3249, %v3424
      %v3426 = vpop.f32.mrb[0].mxu0
      %v3427 = vpop.f32.mrb[0].mxu0
      %v3428 = vadd.f32 %v3252, %v3427
      %v3429 = vpop.f32.mrb[0].mxu0
      %3430 = vmatprep.mubr.bf16.mxu0 0
      %3431 = vmatmul.mubr.bf16.gmra.mrb[0].mxu0 %v3136
      %v3432 = vpop.f32.mrb[0].mxu0
      %v3433 = vadd.f32 %v3257, %v3432
      %v3434 = vpop.f32.mrb[0].mxu0
      %v3435 = vpop.f32.mrb[0].mxu0
      %v3436 = vadd.f32 %v3260, %v3435
      %v3437 = vpop.f32.mrb[0].mxu0
      %3438 = vmatprep.mubr.bf16.mxu0 0
      %3439 = vmatmul.mubr.bf16.gmra.mrb[0].mxu0 %v3139
      %v3440 = vpop.f32.mrb[0].mxu0
      %v3441 = vadd.f32 %v3265, %v3440
      %v3442 = vpop.f32.mrb[0].mxu0
      %v3443 = vpop.f32.mrb[0].mxu0
      %v3444 = vadd.f32 %v3268, %v3443
      %v3445 = vpop.f32.mrb[0].mxu0
      %3446 = vmatprep.mubr.bf16.mxu0 0
      %3447 = vmatmul.mubr.bf16.gmra.mrb[0].mxu0 %v3142
      %v3448 = vpop.f32.mrb[0].mxu0
      %v3449 = vadd.f32 %v3273, %v3448
      %v3450 = vpop.f32.mrb[0].mxu0
      %v3451 = vpop.f32.mrb[0].mxu0
      %v3452 = vadd.f32 %v3276, %v3451
      %v3453 = vpop.f32.mrb[0].mxu0
      %3454 = vmatprep.mubr.bf16.mxu0 0
      %3455 = vmatmul.mubr.bf16.gmra.mrb[0].mxu0 %v3145
      %v3456 = vpop.f32.mrb[0].mxu0
      %v3457 = vadd.f32 %v3281, %v3456
      %v3458 = vpop.f32.mrb[0].mxu0
      %v3459 = vpop.f32.mrb[0].mxu0
      %v3460 = vadd.f32 %v3284, %v3459
      %v3461 = vpop.f32.mrb[0].mxu0
      %3462 = vmatprep.mubr.bf16.mxu0 0
      %3463 = vmatmul.mubr.bf16.gmra.mrb[0].mxu0 %v3148
      %v3464 = vpop.f32.mrb[0].mxu0
      %v3465 = vadd.f32 %v3289, %v3464
      %v3466 = vpop.f32.mrb[0].mxu0
      %v3467 = vpop.f32.mrb[0].mxu0
      %v3468 = vadd.f32 %v3292, %v3467
      %v3469 = vpop.f32.mrb[0].mxu0
      %3470 = vmatprep.mubr.bf16.mxu0 0
      %3471 = vmatmul.mubr.bf16.gmra.mrb[0].mxu0 %v3151
      %v3472 = vpop.f32.mrb[0].mxu0
      %v3473 = vadd.f32 %v3297, %v3472
      %v3474 = vpop.f32.mrb[0].mxu0
      %v3475 = vpop.f32.mrb[0].mxu0
      %v3476 = vadd.f32 %v3300, %v3475
      %v3477 = vpop.f32.mrb[0].mxu0
      %3478 = vmatprep.mubr.bf16.mxu0 0
      %3479 = vmatmul.mubr.bf16.gmra.mrb[0].mxu0 %v3154
      %v3480 = vpop.f32.mrb[0].mxu0
      %v3481 = vadd.f32 %v3305, %v3480
      %v3482 = vpop.f32.mrb[0].mxu0
      %v3483 = vpop.f32.mrb[0].mxu0
      %v3484 = vadd.f32 %v3308, %v3483
      %v3485 = vpop.f32.mrb[0].mxu0
      %3486 = vmatprep.mubr.bf16.mxu0 0
      %3487 = vmatmul.mubr.bf16.gmra.mrb[0].mxu0 %v3157
      %v3488 = vpop.f32.mrb[0].mxu0
      %v3489 = vadd.f32 %v3313, %v3488
      %v3490 = vpop.f32.mrb[0].mxu0
      %v3491 = vpop.f32.mrb[0].mxu0
      %v3492 = vadd.f32 %v3316, %v3491
      %v3493 = vpop.f32.mrb[0].mxu0
      %3494 = vmatprep.mubr.bf16.mxu0 0
      %3495 = vmatmul.mubr.bf16.gmra.mrb[0].mxu0 %v3160
      %v3496 = vpop.f32.mrb[0].mxu0
      %v3497 = vadd.f32 %v3321, %v3496
      %v3498 = vpop.f32.mrb[0].mxu0
      %v3499 = vpop.f32.mrb[0].mxu0
      %v3500 = vadd.f32 %v3324, %v3499
      %v3501 = vpop.f32.mrb[0].mxu0
      %3502 = vmatprep.mubr.bf16.mxu0 0
      %3503 = vmatmul.mubr.bf16.gmra.mrb[0].mxu0 %v3163
      %v3504 = vpop.f32.mrb[0].mxu0
      %v3505 = vadd.f32 %v3329, %v3504
      %v3506 = vpop.f32.mrb[0].mxu0
      %v3507 = vpop.f32.mrb[0].mxu0
      %v3508 = vadd.f32 %v3332, %v3507
      %v3509 = vpop.f32.mrb[0].mxu0
      %3510 = vdwg.mxu0
      %v3517 = vrot.slane %v2882, 6
      %v3518 = vrot.slane %v3517, 4
      %v3519 = vrot.slane %v2883, 6
      %v3520 = vsel %vm2938, %v3518, %v3519
      %v3521 = vrot.slane %v3519, 4
      %v3522 = vrot.slane %v2884, 6
      %v3523 = vsel %vm2938, %v3521, %v3522
      %v3524 = vrot.slane %v2885, 6
      %v3525 = vrot.slane %v3524, 4
      %v3526 = vrot.slane %v2886, 6
      %v3527 = vsel %vm2938, %v3525, %v3526
      %v3528 = vrot.slane %v3526, 4
      %v3529 = vrot.slane %v2887, 6
      %v3530 = vsel %vm2938, %v3528, %v3529
      %s3531 = scalar_lea.vmem %s4, 32
      %v3532 = vld [vmem:[%s3531] sm:$0xf]
      %v3533 = vunpack.c.l.b16 %v3520
      %v3534 = vunpack.c.l.b16 %v3523
      %v3535 = vunpack.c.l.b16 %v3527
      %v3536 = vunpack.c.l.b16 %v3530
      %v3537 = vpack.c.b16 %v3534, %v3533
      %v3538 = vpack.c.b16 %v3536, %v3535
      %v3540 = vsel %vm1179, %v3537, 0
      %v3543 = vsel %vm1179, %v3538, 0
      %v3546 = vsel %vm1228, %v3532, 0
      %3548 = vmatprep.subr.bf16.mxu0 0
      %3549 = vmatpush1.bf16.msra.mxu0 %v3546
      %3550 = vmatprep.subr.bf16.mxu0 0
      %3551 = vmatpush1.bf16.msra.mxu0 0
      %3552 = vmatprep.subr.bf16.mxu0 0
      %3553 = vmatpush1.bf16.msra.mxu0 0
      %3554 = vmatprep.subr.bf16.mxu0 0
      %3555 = vmatpush1.bf16.msra.mxu0 0
      %3556 = vmatprep.subr.bf16.mxu0 0
      %3557 = vmatpush1.bf16.msra.mxu0 0
      %3558 = vmatprep.subr.bf16.mxu0 0
      %3559 = vmatpush1.bf16.msra.mxu0 0
      %3560 = vmatprep.subr.bf16.mxu0 0
      %3561 = vmatpush1.bf16.msra.mxu0 0
      %3562 = vmatprep.subr.bf16.mxu0 0
      %3563 = vmatpush1.bf16.msra.mxu0 0
      %3564 = vmatprep.subr.bf16.mxu0 0
      %3565 = vmatpush1.bf16.msra.mxu0 0
      %3566 = vmatprep.subr.bf16.mxu0 0
      %3567 = vmatpush1.bf16.msra.mxu0 0
      %3568 = vmatprep.subr.bf16.mxu0 0
      %3569 = vmatpush1.bf16.msra.mxu0 0
      %3570 = vmatprep.subr.bf16.mxu0 0
      %3571 = vmatpush1.bf16.msra.mxu0 0
      %3572 = vmatprep.subr.bf16.mxu0 0
      %3573 = vmatpush1.bf16.msra.mxu0 0
      %3574 = vmatprep.subr.bf16.mxu0 0
      %3575 = vmatpush1.bf16.msra.mxu0 0
      %3576 = vmatprep.subr.bf16.mxu0 0
      %3577 = vmatpush1.bf16.msra.mxu0 0
      %3578 = vmatprep.subr.bf16.mxu0 0
      %3579 = vmatpush1.bf16.msra.mxu0 0
      %3580 = vmatprep.mubr.bf16.mxu0 0
      %3581 = vmatmul.mubr.bf16.gmra.mrb[0].mxu0 %v3130
      %v3582 = vpop.f32.mrb[0].mxu0
      %v3583 = vadd.f32 0.0, %v3582
      %v3584 = vpop.f32.mrb[0].mxu0
      %v3585 = vpop.f32.mrb[0].mxu0
      %v3586 = vadd.f32 0.0, %v3585
      %v3587 = vpop.f32.mrb[0].mxu0
      %3588 = vmatprep.mubr.bf16.mxu0 0
      %3589 = vmatmul.mubr.bf16.gmra.mrb[0].mxu0 %v3133
      %v3590 = vpop.f32.mrb[0].mxu0
      %v3591 = vadd.f32 0.0, %v3590
      %v3592 = vpop.f32.mrb[0].mxu0
      %v3593 = vpop.f32.mrb[0].mxu0
      %v3594 = vadd.f32 0.0, %v3593
      %v3595 = vpop.f32.mrb[0].mxu0
      %3596 = vmatprep.mubr.bf16.mxu0 0
      %3597 = vmatmul.mubr.bf16.gmra.mrb[0].mxu0 %v3136
      %v3598 = vpop.f32.mrb[0].mxu0
      %v3599 = vadd.f32 0.0, %v3598
      %v3600 = vpop.f32.mrb[0].mxu0
      %v3601 = vpop.f32.mrb[0].mxu0
      %v3602 = vadd.f32 0.0, %v3601
      %v3603 = vpop.f32.mrb[0].mxu0
      %3604 = vmatprep.mubr.bf16.mxu0 0
      %3605 = vmatmul.mubr.bf16.gmra.mrb[0].mxu0 %v3139
      %v3606 = vpop.f32.mrb[0].mxu0
      %v3607 = vadd.f32 0.0, %v3606
      %v3608 = vpop.f32.mrb[0].mxu0
      %v3609 = vpop.f32.mrb[0].mxu0
      %v3610 = vadd.f32 0.0, %v3609
      %v3611 = vpop.f32.mrb[0].mxu0
      %3612 = vmatprep.mubr.bf16.mxu0 0
      %3613 = vmatmul.mubr.bf16.gmra.mrb[0].mxu0 %v3142
      %v3614 = vpop.f32.mrb[0].mxu0
      %v3615 = vadd.f32 0.0, %v3614
      %v3616 = vpop.f32.mrb[0].mxu0
      %v3617 = vpop.f32.mrb[0].mxu0
      %v3618 = vadd.f32 0.0, %v3617
      %v3619 = vpop.f32.mrb[0].mxu0
      %3620 = vmatprep.mubr.bf16.mxu0 0
      %3621 = vmatmul.mubr.bf16.gmra.mrb[0].mxu0 %v3145
      %v3622 = vpop.f32.mrb[0].mxu0
      %v3623 = vadd.f32 0.0, %v3622
      %v3624 = vpop.f32.mrb[0].mxu0
      %v3625 = vpop.f32.mrb[0].mxu0
      %v3626 = vadd.f32 0.0, %v3625
      %v3627 = vpop.f32.mrb[0].mxu0
      %3628 = vmatprep.mubr.bf16.mxu0 0
      %3629 = vmatmul.mubr.bf16.gmra.mrb[0].mxu0 %v3148
      %v3630 = vpop.f32.mrb[0].mxu0
      %v3631 = vadd.f32 0.0, %v3630
      %v3632 = vpop.f32.mrb[0].mxu0
      %v3633 = vpop.f32.mrb[0].mxu0
      %v3634 = vadd.f32 0.0, %v3633
      %v3635 = vpop.f32.mrb[0].mxu0
      %3636 = vmatprep.mubr.bf16.mxu0 0
      %3637 = vmatmul.mubr.bf16.gmra.mrb[0].mxu0 %v3151
      %v3638 = vpop.f32.mrb[0].mxu0
      %v3639 = vadd.f32 0.0, %v3638
      %v3640 = vpop.f32.mrb[0].mxu0
      %v3641 = vpop.f32.mrb[0].mxu0
      %v3642 = vadd.f32 0.0, %v3641
      %v3643 = vpop.f32.mrb[0].mxu0
      %3644 = vmatprep.mubr.bf16.mxu0 0
      %3645 = vmatmul.mubr.bf16.gmra.mrb[0].mxu0 %v3154
      %v3646 = vpop.f32.mrb[0].mxu0
      %v3647 = vadd.f32 0.0, %v3646
      %v3648 = vpop.f32.mrb[0].mxu0
      %v3649 = vpop.f32.mrb[0].mxu0
      %v3650 = vadd.f32 0.0, %v3649
      %v3651 = vpop.f32.mrb[0].mxu0
      %3652 = vmatprep.mubr.bf16.mxu0 0
      %3653 = vmatmul.mubr.bf16.gmra.mrb[0].mxu0 %v3157
      %v3654 = vpop.f32.mrb[0].mxu0
      %v3655 = vadd.f32 0.0, %v3654
      %v3656 = vpop.f32.mrb[0].mxu0
      %v3657 = vpop.f32.mrb[0].mxu0
      %v3658 = vadd.f32 0.0, %v3657
      %v3659 = vpop.f32.mrb[0].mxu0
      %3660 = vmatprep.mubr.bf16.mxu0 0
      %3661 = vmatmul.mubr.bf16.gmra.mrb[0].mxu0 %v3160
      %v3662 = vpop.f32.mrb[0].mxu0
      %v3663 = vadd.f32 0.0, %v3662
      %v3664 = vpop.f32.mrb[0].mxu0
      %v3665 = vpop.f32.mrb[0].mxu0
      %v3666 = vadd.f32 0.0, %v3665
      %v3667 = vpop.f32.mrb[0].mxu0
      %3668 = vmatprep.mubr.bf16.mxu0 0
      %3669 = vmatmul.mubr.bf16.gmra.mrb[0].mxu0 %v3163
      %v3670 = vpop.f32.mrb[0].mxu0
      %v3671 = vadd.f32 0.0, %v3670
      %v3672 = vpop.f32.mrb[0].mxu0
      %v3673 = vpop.f32.mrb[0].mxu0
      %v3674 = vadd.f32 0.0, %v3673
      %v3675 = vpop.f32.mrb[0].mxu0
      %3676 = vmatprep.mubr.bf16.mxu0 0
      %3677 = vmatmul.mubr.bf16.gmra.mrb[0].mxu0 %v3166
      %v3678 = vpop.f32.mrb[0].mxu0
      %v3679 = vadd.f32 0.0, %v3678
      %v3680 = vpop.f32.mrb[0].mxu0
      %v3681 = vpop.f32.mrb[0].mxu0
      %v3682 = vadd.f32 0.0, %v3681
      %v3683 = vpop.f32.mrb[0].mxu0
      %3684 = vmatprep.mubr.bf16.mxu0 0
      %3685 = vmatmul.mubr.bf16.gmra.mrb[0].mxu0 %v3169
      %v3686 = vpop.f32.mrb[0].mxu0
      %v3687 = vadd.f32 0.0, %v3686
      %v3688 = vpop.f32.mrb[0].mxu0
      %v3689 = vpop.f32.mrb[0].mxu0
      %v3690 = vadd.f32 0.0, %v3689
      %v3691 = vpop.f32.mrb[0].mxu0
      %3692 = vmatprep.mubr.bf16.mxu0 0
      %3693 = vmatmul.mubr.bf16.gmra.mrb[0].mxu0 %v3540
      %v3694 = vpop.f32.mrb[0].mxu0
      %v3695 = vadd.f32 0.0, %v3694
      %v3696 = vpop.f32.mrb[0].mxu0
      %v3697 = vpop.f32.mrb[0].mxu0
      %v3698 = vadd.f32 0.0, %v3697
      %v3699 = vpop.f32.mrb[0].mxu0
      %3700 = vmatprep.mubr.bf16.mxu0 0
      %3701 = vmatmul.mubr.bf16.gmra.mrb[0].mxu0 %v3543
      %v3702 = vpop.f32.mrb[0].mxu0
      %v3703 = vadd.f32 0.0, %v3702
      %v3704 = vpop.f32.mrb[0].mxu0
      %v3705 = vpop.f32.mrb[0].mxu0
      %v3706 = vadd.f32 0.0, %v3705
      %v3707 = vpop.f32.mrb[0].mxu0
      %3708 = vdwg.mxu0
      %v3709 = vadd.f32 %v3385, %v3583
      %v3710 = vadd.f32 %v3388, %v3586
      %v3711 = vadd.f32 %v3393, %v3591
      %v3712 = vadd.f32 %v3396, %v3594
      %v3713 = vadd.f32 %v3401, %v3599
      %v3714 = vadd.f32 %v3404, %v3602
      %v3715 = vadd.f32 %v3409, %v3607
      %v3716 = vadd.f32 %v3412, %v3610
      %v3717 = vadd.f32 %v3417, %v3615
      %v3718 = vadd.f32 %v3420, %v3618
      %v3719 = vadd.f32 %v3425, %v3623
      %v3720 = vadd.f32 %v3428, %v3626
      %v3721 = vadd.f32 %v3433, %v3631
      %v3722 = vadd.f32 %v3436, %v3634
      %v3723 = vadd.f32 %v3441, %v3639
      %v3724 = vadd.f32 %v3444, %v3642
      %v3725 = vadd.f32 %v3449, %v3647
      %v3726 = vadd.f32 %v3452, %v3650
      %v3727 = vadd.f32 %v3457, %v3655
      %v3728 = vadd.f32 %v3460, %v3658
      %v3729 = vadd.f32 %v3465, %v3663
      %v3730 = vadd.f32 %v3468, %v3666
      %v3731 = vadd.f32 %v3473, %v3671
      %v3732 = vadd.f32 %v3476, %v3674
      %v3733 = vadd.f32 %v3481, %v3679
      %v3734 = vadd.f32 %v3484, %v3682
      %v3735 = vadd.f32 %v3489, %v3687
      %v3736 = vadd.f32 %v3492, %v3690
      %v3737 = vadd.f32 %v3497, %v3695
      %v3738 = vadd.f32 %v3500, %v3698
      %v3739 = vadd.f32 %v3505, %v3703
      %v3740 = vadd.f32 %v3508, %v3706
      %v3741 = vld [vmem:[%s246] sm:$0xff]
      %v3742 = vld [vmem:[%s246 + $0x8] sm:$0xff]
      %v3743 = vld [vmem:[%s246 + $0x10] sm:$0xff]
      %v3744 = vld [vmem:[%s246 + $0x18] sm:$0xff]
      %v3745 = vld [vmem:[%s246 + $0x20] sm:$0xff]
      %v3746 = vld [vmem:[%s246 + $0x28] sm:$0xff]
      %v3747 = vld [vmem:[%s246 + $0x30] sm:$0xff]
      %v3748 = vld [vmem:[%s246 + $0x38] sm:$0xff]
      %v3749 = vld [vmem:[%s246 + $0x40] sm:$0xff]
      %v3750 = vld [vmem:[%s246 + $0x48] sm:$0xff]
      %v3751 = vld [vmem:[%s246 + $0x50] sm:$0xff]
      %v3752 = vld [vmem:[%s246 + $0x58] sm:$0xff]
      %v3753 = vld [vmem:[%s246 + $0x60] sm:$0xff]
      %v3754 = vld [vmem:[%s246 + $0x68] sm:$0xff]
      %v3755 = vld [vmem:[%s246 + $0x70] sm:$0xff]
      %v3756 = vld [vmem:[%s246 + $0x78] sm:$0xff]
      %v3757 = vld [vmem:[%s246 + $0x80] sm:$0xff]
      %v3758 = vld [vmem:[%s246 + $0x88] sm:$0xff]
      %v3759 = vld [vmem:[%s246 + $0x90] sm:$0xff]
      %v3760 = vld [vmem:[%s246 + $0x98] sm:$0xff]
      %v3761 = vld [vmem:[%s246 + $0xa0] sm:$0xff]
      %v3762 = vld [vmem:[%s246 + $0xa8] sm:$0xff]
      %v3763 = vld [vmem:[%s246 + $0xb0] sm:$0xff]
      %v3764 = vld [vmem:[%s246 + $0xb8] sm:$0xff]
      %v3765 = vld [vmem:[%s246 + $0xc0] sm:$0xff]
      %v3766 = vld [vmem:[%s246 + $0xc8] sm:$0xff]
      %v3767 = vld [vmem:[%s246 + $0xd0] sm:$0xff]
      %v3768 = vld [vmem:[%s246 + $0xd8] sm:$0xff]
      %v3769 = vld [vmem:[%s246 + $0xe0] sm:$0xff]
      %v3770 = vld [vmem:[%s246 + $0xe8] sm:$0xff]
      %v3771 = vld [vmem:[%s246 + $0xf0] sm:$0xff]
      %v3772 = vld [vmem:[%s246 + $0xf8] sm:$0xff]
      %v3773 = vadd.f32 %v3741, %v3709
      %v3774 = vadd.f32 %v3742, %v3710
      %v3775 = vadd.f32 %v3743, %v3711
      %v3776 = vadd.f32 %v3744, %v3712
      %v3777 = vadd.f32 %v3745, %v3713
      %v3778 = vadd.f32 %v3746, %v3714
      %v3779 = vadd.f32 %v3747, %v3715
      %v3780 = vadd.f32 %v3748, %v3716
      %v3781 = vadd.f32 %v3749, %v3717
      %v3782 = vadd.f32 %v3750, %v3718
      %v3783 = vadd.f32 %v3751, %v3719
      %v3784 = vadd.f32 %v3752, %v3720
      %v3785 = vadd.f32 %v3753, %v3721
      %v3786 = vadd.f32 %v3754, %v3722
      %v3787 = vadd.f32 %v3755, %v3723
      %v3788 = vadd.f32 %v3756, %v3724
      %v3789 = vadd.f32 %v3757, %v3725
      %v3790 = vadd.f32 %v3758, %v3726
      %v3791 = vadd.f32 %v3759, %v3727
      %v3792 = vadd.f32 %v3760, %v3728
      %v3793 = vadd.f32 %v3761, %v3729
      %v3794 = vadd.f32 %v3762, %v3730
      %v3795 = vadd.f32 %v3763, %v3731
      %v3796 = vadd.f32 %v3764, %v3732
      %v3797 = vadd.f32 %v3765, %v3733
      %v3798 = vadd.f32 %v3766, %v3734
      %v3799 = vadd.f32 %v3767, %v3735
      %v3800 = vadd.f32 %v3768, %v3736
      %v3801 = vadd.f32 %v3769, %v3737
      %v3802 = vadd.f32 %v3770, %v3738
      %v3803 = vadd.f32 %v3771, %v3739
      %v3804 = vadd.f32 %v3772, %v3740
      %3805 = vst.msk [vmem:[%s246] sm:$0xff] %vm442, %v3773
      %3806 = vst.msk [vmem:[%s246 + $0x8] sm:$0xff] %vm442, %v3774
      %3807 = vst.msk [vmem:[%s246 + $0x10] sm:$0xff] %vm442, %v3775
      %3808 = vst.msk [vmem:[%s246 + $0x18] sm:$0xff] %vm442, %v3776
      %3809 = vst.msk [vmem:[%s246 + $0x20] sm:$0xff] %vm442, %v3777
      %3810 = vst.msk [vmem:[%s246 + $0x28] sm:$0xff] %vm442, %v3778
      %3811 = vst.msk [vmem:[%s246 + $0x30] sm:$0xff] %vm442, %v3779
      %3812 = vst.msk [vmem:[%s246 + $0x38] sm:$0xff] %vm442, %v3780
      %3813 = vst.msk [vmem:[%s246 + $0x40] sm:$0xff] %vm442, %v3781
      %3814 = vst.msk [vmem:[%s246 + $0x48] sm:$0xff] %vm442, %v3782
      %3815 = vst.msk [vmem:[%s246 + $0x50] sm:$0xff] %vm442, %v3783
      %3816 = vst.msk [vmem:[%s246 + $0x58] sm:$0xff] %vm442, %v3784
      %3817 = vst.msk [vmem:[%s246 + $0x60] sm:$0xff] %vm442, %v3785
      %3818 = vst.msk [vmem:[%s246 + $0x68] sm:$0xff] %vm442, %v3786
      %3819 = vst.msk [vmem:[%s246 + $0x70] sm:$0xff] %vm442, %v3787
      %3820 = vst.msk [vmem:[%s246 + $0x78] sm:$0xff] %vm442, %v3788
      %3821 = vst.msk [vmem:[%s246 + $0x80] sm:$0xff] %vm442, %v3789
      %3822 = vst.msk [vmem:[%s246 + $0x88] sm:$0xff] %vm442, %v3790
      %3823 = vst.msk [vmem:[%s246 + $0x90] sm:$0xff] %vm442, %v3791
      %3824 = vst.msk [vmem:[%s246 + $0x98] sm:$0xff] %vm442, %v3792
      %3825 = vst.msk [vmem:[%s246 + $0xa0] sm:$0xff] %vm442, %v3793
      %3826 = vst.msk [vmem:[%s246 + $0xa8] sm:$0xff] %vm442, %v3794
      %3827 = vst.msk [vmem:[%s246 + $0xb0] sm:$0xff] %vm442, %v3795
      %3828 = vst.msk [vmem:[%s246 + $0xb8] sm:$0xff] %vm442, %v3796
      %3829 = vst.msk [vmem:[%s246 + $0xc0] sm:$0xff] %vm442, %v3797
      %3830 = vst.msk [vmem:[%s246 + $0xc8] sm:$0xff] %vm442, %v3798
      %3831 = vst.msk [vmem:[%s246 + $0xd0] sm:$0xff] %vm442, %v3799
      %3832 = vst.msk [vmem:[%s246 + $0xd8] sm:$0xff] %vm442, %v3800
      %3833 = vst.msk [vmem:[%s246 + $0xe0] sm:$0xff] %vm442, %v3801
      %3834 = vst.msk [vmem:[%s246 + $0xe8] sm:$0xff] %vm442, %v3802
      %3835 = vst.msk [vmem:[%s246 + $0xf0] sm:$0xff] %vm442, %v3803
      %3836 = vst.msk [vmem:[%s246 + $0xf8] sm:$0xff] %vm442, %v3804
      %s3837 = smul.u32 32, %s21
      %p3838 = scmp.lt.s32.totalorder %s20, 1
      %s3839 = scalar_select %p3838, %s20, 1
      %p3840 = scmp.lt.s32.totalorder %s3837, 31
      %s3841 = scalar_select %p3840, %s3837, 31
      %s3842 = smul.addr %s3839, 32
      %s3843 = sadd.s32 %s3841, %s3842
      %s3844 = smul.addr %s3843, 8
      %s3845 = scalar_lea.vmem %s5, %s3844
      // Predicated region
      $region45: #{tpu_custom_call.1} parent=39 // pred_check
        %p3846 = pneg %p158
      $region46: #{tpu_custom_call.1} parent=39 // pred_check_branch
        %3848 = sbr.rel (%p3846) target = $region48
      $region47: #{tpu_custom_call.1} parent=39 // pred_region
        %s3849 = smul.u32 32, %s21
      $region48: #{tpu_custom_call.1} parent=39 // pred_fallthru
        _
    $region40: #{tpu_custom_call.1} parent=5 // pred_fallthru
      _
    %p3850 = scmp.le.s32.totalorder 2, %s11
    // Predicated region
    $region49: #{tpu_custom_call.1} parent=5 // pred_check
      %p3851 = pneg %p3850
    $region50: #{tpu_custom_call.1} parent=5 // pred_check_branch
      %3853 = sbr.rel (%p3851) target = $region52
    $region51: #{tpu_custom_call.1} parent=5 // pred_region
      %s3854 = ssub.s32 %s11, 2
      // Predicated region
      $region53: #{tpu_custom_call.1} parent=51 // pred_check
        %p3855 = pneg %p164
      $region54: #{tpu_custom_call.1} parent=51 // pred_check_branch
        %3857 = sbr.rel (%p3855) target = $region56
      $region55: #{tpu_custom_call.1} parent=51 // pred_region
        %s3858 = smul.u32 32, %s23
        %p3859 = scmp.lt.s32.totalorder %s22, 1
        %s3860 = scalar_select %p3859, %s22, 1
        %p3861 = scmp.lt.s32.totalorder %s3858, 31
        %s3862 = scalar_select %p3861, %s3858, 31
        %s3863 = smul.addr %s3860, 32
        %s3864 = sadd.s32 %s3862, %s3863
        %s3865 = smul.addr %s3864, 8
        %s3866 = scalar_lea.vmem %s5, %s3865
      $region56: #{tpu_custom_call.1} parent=51 // pred_fallthru
        _
    $region52: #{tpu_custom_call.1} parent=5 // pred_fallthru
      _
  $region6: #{tpu_custom_call.1} parent=0 // loop_footer
    %s15 = sadd.s32 1, %s11
  $region7: #{tpu_custom_call.1} parent=0 // loop_footer_branch
    %10 = sbr.rel target = $region3
  $region8: #{tpu_custom_call.1} parent=0 // loop_exit
    _

</llo_original>
